<compile_context>
chip_gen: v7x
topology: tpu7x:2x2x1
jax: 0.10.0
libtpu: 0.0.40
codegen_flags: <defaults>
</compile_context>

<pallas_src>
import functools
import math

import jax
import jax.numpy as jnp
from jax.experimental import pallas as pl
from jax.experimental.pallas import tpu as pltpu


# ---------------------------------------------------------------------------
# Fused kernel: all heads, all batch elements, output projection — one grid step
# ---------------------------------------------------------------------------
def _fused_mha_kernel(xq_ref, xk_ref, xv_ref,
                      wq_ref, wk_ref, wv_ref,
                      bq_ref, bk_ref, bv_ref,
                      wo_ref, bo_ref,
                      out_ref,
                      *, n_heads, dim_qk, dim_v, batch, seq):
    xq = xq_ref[...]                      # (B*S, Din)
    xk = xk_ref[...]
    xv = xv_ref[...]

    inv_sqrt_dq = 1.0 / math.sqrt(dim_qk)
    acc = jnp.zeros(out_ref.shape, jnp.float32)          # (B*S, Din) output accumulator

    for h in range(n_heads):              # static, unrolled (H is small)
        # Per-head projections; wq_ref[h] is a leading-axis index -> free, lane-dense view.
        q = jnp.dot(xq, wq_ref[h], preferred_element_type=jnp.float32) + bq_ref[h]
        k = jnp.dot(xk, wk_ref[h], preferred_element_type=jnp.float32) + bk_ref[h]
        v = jnp.dot(xv, wv_ref[h], preferred_element_type=jnp.float32) + bv_ref[h]

        # Split the sublane axis back into (B, S) — multiple-of-8 split, free view.
        q3 = q.reshape(batch, seq, dim_qk)
        k3 = k.reshape(batch, seq, dim_qk)
        v3 = v.reshape(batch, seq, dim_v)

        # q @ k^T per batch, transpose folded into the contraction (no XLU relayout).
        logits = jnp.einsum('bqd,bkd->bqk', q3, k3,
                            preferred_element_type=jnp.float32) * inv_sqrt_dq

        # Numerically-stable softmax over keys with DEFERRED normalization.
        m = jnp.max(logits, axis=-1, keepdims=True)
        p = jnp.exp(logits - m)
        denom = jnp.sum(p, axis=-1, keepdims=True)

        o = jnp.einsum('bqk,bkd->bqd', p, v3,
                       preferred_element_type=jnp.float32)       # (B, S, Dv), unnormalized
        o = o * pl.reciprocal(denom, approx=True)                # EUP vrcp, O(S*Dv) scale

        # Per-head output-projection accumulate (replaces concat + single big matmul).
        acc = acc + jnp.dot(o.reshape(batch * seq, dim_v), wo_ref[h],
                            preferred_element_type=jnp.float32)

    out_ref[...] = (acc + bo_ref[...]).astype(out_ref.dtype)     # (B*S, Din)


# ---------------------------------------------------------------------------
# Wrapper: single pallas_call, single grid step (whole batch at once)
# ---------------------------------------------------------------------------
def multi_head_forward(params, xq, xk, xv, *, n_heads, dim_qk, dim_v):
    B, S, Din = xq.shape
    M = B * S

    kernel = functools.partial(
        _fused_mha_kernel, n_heads=n_heads, dim_qk=dim_qk, dim_v=dim_v,
        batch=B, seq=S)

    def full(*shape):
        return pl.BlockSpec(shape, lambda i: (0,) * len(shape))

    out = pl.pallas_call(
        kernel,
        out_shape=jax.ShapeDtypeStruct((M, Din), xq.dtype),
        grid_spec=pltpu.PrefetchScalarGridSpec(
            num_scalar_prefetch=0,
            grid=(1,),                     # collapsed batch grid: zero extra pipeline steps
            in_specs=[
                full(M, Din), full(M, Din), full(M, Din),             # xq, xk, xv (flattened)
                full(n_heads, Din, dim_qk),                            # Wq  (H, Din, Dqk)
                full(n_heads, Din, dim_qk),                            # Wk
                full(n_heads, Din, dim_v),                             # Wv  (H, Din, Dv)
                full(n_heads, 1, dim_qk),                              # bq  (H, 1, Dqk)
                full(n_heads, 1, dim_qk),                              # bk
                full(n_heads, 1, dim_v),                               # bv
                full(n_heads, dim_v, Din),                             # W_out (H, Dv, Din)
                full(1, Din),                                          # b_out
            ],
            out_specs=full(M, Din),
        ),
        compiler_params=pltpu.CompilerParams(
            dimension_semantics=("arbitrary",)),
    )(xq.reshape(M, Din), xk.reshape(M, Din), xv.reshape(M, Din),
      params["wq"], params["wk"], params["wv"],
      params["bq"], params["bk"], params["bv"],
      params["w_out"], params["b_out"].reshape(1, Din))

    return out.reshape(B, S, Din)


# ---------------------------------------------------------------------------
# Pure-JAX reference (mirrors the PyTorch forward exactly) for validation.
# ---------------------------------------------------------------------------
def reference_forward(params, xq, xk, xv, *, n_heads, dim_qk, dim_v):
    outs = []
    for h in range(n_heads):
        q = xq @ params["wq"][h] + params["bq"][h, 0]
        k = xk @ params["wk"][h] + params["bk"][h, 0]
        v = xv @ params["wv"][h] + params["bv"][h, 0]
        logits = (q @ jnp.swapaxes(k, -2, -1)) / math.sqrt(q.shape[-1])
        scores = jax.nn.softmax(logits, axis=-1)
        outs.append(scores @ v)
    concat = jnp.concatenate(outs, axis=-1)                       # torch.cat head order
    w_out_cat = params["w_out"].reshape(n_heads * dim_v, -1)      # (H*Dv, Din), head-major rows
    return concat @ w_out_cat + params["b_out"]


def init_params(key, n_heads, dim_in, dim_qk, dim_v):
    """Deterministic init mimicking nn.Linear's uniform(-1/sqrt(fan_in), 1/sqrt(fan_in)).
    Q/K/V weights are stored per head on the leading axis — (H, Din, Dqk) / (H, Din, Dv) —
    and the output projection as (H, Dv, Din) (i.e. the PyTorch (Din, H*Dv) Linear weight,
    transposed and split per head), so the kernel indexes heads on the leading axis for free."""
    ks = jax.random.split(key, 8)
    lim_in = 1.0 / math.sqrt(dim_in)
    lim_cat = 1.0 / math.sqrt(dim_v * n_heads)
    u = lambda k, shape, lim: jax.random.uniform(k, shape, jnp.float32, -lim, lim)
    return {
        "wq": u(ks[0], (n_heads, dim_in, dim_qk), lim_in),
        "wk": u(ks[1], (n_heads, dim_in, dim_qk), lim_in),
        "wv": u(ks[2], (n_heads, dim_in, dim_v), lim_in),
        "bq": u(ks[3], (n_heads, 1, dim_qk), lim_in),
        "bk": u(ks[4], (n_heads, 1, dim_qk), lim_in),
        "bv": u(ks[5], (n_heads, 1, dim_v), lim_in),
        "w_out": u(ks[6], (n_heads, dim_v, dim_in), lim_cat),
        "b_out": u(ks[7], (dim_in,), lim_cat),
    }


if __name__ == "__main__":
    n_heads, dim_in, dim_qk, dim_v = 4, 32, 16, 16
    B, S = 2, 8

    key = jax.random.PRNGKey(0)
    kp, kq, kk, kv = jax.random.split(key, 4)
    params = init_params(kp, n_heads, dim_in, dim_qk, dim_v)

    emb_q = jax.random.normal(kq, (B, S, dim_in), jnp.float32)
    emb_k = jax.random.normal(kk, (B, S, dim_in), jnp.float32)
    emb_v = jax.random.normal(kv, (B, S, dim_in), jnp.float32)

    out = multi_head_forward(params, emb_q, emb_k, emb_v,
                             n_heads=n_heads, dim_qk=dim_qk, dim_v=dim_v)
    out = jax.block_until_ready(out)

    ref = reference_forward(params, emb_q, emb_k, emb_v,
                            n_heads=n_heads, dim_qk=dim_qk, dim_v=dim_v)
    assert out.shape == (B, S, dim_in)
    # approx reciprocal (EUP vrcp) loosens agreement slightly vs exact softmax.
    assert jnp.allclose(out, ref, atol=2e-3, rtol=2e-3), \
        f"max abs err {jnp.max(jnp.abs(out - ref))}"

    print("KERNEL_OK")
</pallas_src>

<mosaic_0001>
module attributes {stable_mosaic.version = 11 : i64} {
  func.func @_fused_mha_kernel(%arg0: i32, %arg1: memref<16x32xf32, #tpu.memory_space<vmem>>, %arg2: memref<16x32xf32, #tpu.memory_space<vmem>>, %arg3: memref<16x32xf32, #tpu.memory_space<vmem>>, %arg4: memref<4x32x16xf32, #tpu.memory_space<vmem>>, %arg5: memref<4x32x16xf32, #tpu.memory_space<vmem>>, %arg6: memref<4x32x16xf32, #tpu.memory_space<vmem>>, %arg7: memref<4x1x16xf32, #tpu.memory_space<vmem>>, %arg8: memref<4x1x16xf32, #tpu.memory_space<vmem>>, %arg9: memref<4x1x16xf32, #tpu.memory_space<vmem>>, %arg10: memref<4x16x32xf32, #tpu.memory_space<vmem>>, %arg11: memref<1x32xf32, #tpu.memory_space<vmem>>, %arg12: memref<16x32xf32, #tpu.memory_space<vmem>>) attributes {dimension_semantics = [#tpu.dimension_semantics<arbitrary>], iteration_bounds = array<i64: 1>, scalar_prefetch = 0 : i64, scratch_operands = 0 : i64, tpu.core_type = #tpu.core_type<tc>, window_params = [{pipeline_mode = #tpu.pipeline_mode<synchronous>, transform_indices = @transform_0, window_bounds = array<i64: 16, 32>}, {pipeline_mode = #tpu.pipeline_mode<synchronous>, transform_indices = @transform_1, window_bounds = array<i64: 16, 32>}, {pipeline_mode = #tpu.pipeline_mode<synchronous>, transform_indices = @transform_2, window_bounds = array<i64: 16, 32>}, {pipeline_mode = #tpu.pipeline_mode<synchronous>, transform_indices = @transform_3, window_bounds = array<i64: 4, 32, 16>}, {pipeline_mode = #tpu.pipeline_mode<synchronous>, transform_indices = @transform_4, window_bounds = array<i64: 4, 32, 16>}, {pipeline_mode = #tpu.pipeline_mode<synchronous>, transform_indices = @transform_5, window_bounds = array<i64: 4, 32, 16>}, {pipeline_mode = #tpu.pipeline_mode<synchronous>, transform_indices = @transform_6, window_bounds = array<i64: 4, 1, 16>}, {pipeline_mode = #tpu.pipeline_mode<synchronous>, transform_indices = @transform_7, window_bounds = array<i64: 4, 1, 16>}, {pipeline_mode = #tpu.pipeline_mode<synchronous>, transform_indices = @transform_8, window_bounds = array<i64: 4, 1, 16>}, {pipeline_mode = #tpu.pipeline_mode<synchronous>, transform_indices = @transform_9, window_bounds = array<i64: 4, 16, 32>}, {pipeline_mode = #tpu.pipeline_mode<synchronous>, transform_indices = @transform_10, window_bounds = array<i64: 1, 32>}, {pipeline_mode = #tpu.pipeline_mode<synchronous>, transform_indices = @transform_11, window_bounds = array<i64: 16, 32>}]} {
    %c0 = arith.constant 0 : index
    %c0_0 = arith.constant 0 : index
    %0 = vector.load %arg1[%c0, %c0_0] : memref<16x32xf32, #tpu.memory_space<vmem>>, vector<16x32xf32>
    %c0_1 = arith.constant 0 : index
    %c0_2 = arith.constant 0 : index
    %1 = vector.load %arg2[%c0_1, %c0_2] : memref<16x32xf32, #tpu.memory_space<vmem>>, vector<16x32xf32>
    %c0_3 = arith.constant 0 : index
    %c0_4 = arith.constant 0 : index
    %2 = vector.load %arg3[%c0_3, %c0_4] : memref<16x32xf32, #tpu.memory_space<vmem>>, vector<16x32xf32>
    %cst = arith.constant 0.000000e+00 : f32
    %3 = vector.broadcast %cst : f32 to vector<16x32xf32>
    %c0_5 = arith.constant 0 : index
    %c0_6 = arith.constant 0 : index
    %c0_7 = arith.constant 0 : index
    %4 = vector.load %arg4[%c0_5, %c0_6, %c0_7] : memref<4x32x16xf32, #tpu.memory_space<vmem>>, vector<1x32x16xf32>
    %5 = vector.shape_cast %4 : vector<1x32x16xf32> to vector<32x16xf32>
    %cst_8 = arith.constant dense<0.000000e+00> : vector<16x16xf32>
    %6 = tpu.matmul %0, %5, %cst_8 {dimension_numbers = #tpu.dot_dimension_numbers<[1], [0], [0], [1], [0, 0, 1, 1], [], []>} : vector<16x32xf32>, vector<32x16xf32>, vector<16x16xf32> -> vector<16x16xf32>
    %c0_9 = arith.constant 0 : index
    %c0_10 = arith.constant 0 : index
    %c0_11 = arith.constant 0 : index
    %7 = vector.load %arg7[%c0_9, %c0_10, %c0_11] : memref<4x1x16xf32, #tpu.memory_space<vmem>>, vector<1x1x16xf32>
    %8 = vector.shape_cast %7 : vector<1x1x16xf32> to vector<1x16xf32>
    %9 = vector.broadcast %8 : vector<1x16xf32> to vector<16x16xf32>
    %10 = arith.addf %6, %9 : vector<16x16xf32>
    %c0_12 = arith.constant 0 : index
    %c0_13 = arith.constant 0 : index
    %c0_14 = arith.constant 0 : index
    %11 = vector.load %arg5[%c0_12, %c0_13, %c0_14] : memref<4x32x16xf32, #tpu.memory_space<vmem>>, vector<1x32x16xf32>
    %12 = vector.shape_cast %11 : vector<1x32x16xf32> to vector<32x16xf32>
    %cst_15 = arith.constant dense<0.000000e+00> : vector<16x16xf32>
    %13 = tpu.matmul %1, %12, %cst_15 {dimension_numbers = #tpu.dot_dimension_numbers<[1], [0], [0], [1], [0, 0, 1, 1], [], []>} : vector<16x32xf32>, vector<32x16xf32>, vector<16x16xf32> -> vector<16x16xf32>
    %c0_16 = arith.constant 0 : index
    %c0_17 = arith.constant 0 : index
    %c0_18 = arith.constant 0 : index
    %14 = vector.load %arg8[%c0_16, %c0_17, %c0_18] : memref<4x1x16xf32, #tpu.memory_space<vmem>>, vector<1x1x16xf32>
    %15 = vector.shape_cast %14 : vector<1x1x16xf32> to vector<1x16xf32>
    %16 = vector.broadcast %15 : vector<1x16xf32> to vector<16x16xf32>
    %17 = arith.addf %13, %16 : vector<16x16xf32>
    %c0_19 = arith.constant 0 : index
    %c0_20 = arith.constant 0 : index
    %c0_21 = arith.constant 0 : index
    %18 = vector.load %arg6[%c0_19, %c0_20, %c0_21] : memref<4x32x16xf32, #tpu.memory_space<vmem>>, vector<1x32x16xf32>
    %19 = vector.shape_cast %18 : vector<1x32x16xf32> to vector<32x16xf32>
    %cst_22 = arith.constant dense<0.000000e+00> : vector<16x16xf32>
    %20 = tpu.matmul %2, %19, %cst_22 {dimension_numbers = #tpu.dot_dimension_numbers<[1], [0], [0], [1], [0, 0, 1, 1], [], []>} : vector<16x32xf32>, vector<32x16xf32>, vector<16x16xf32> -> vector<16x16xf32>
    %c0_23 = arith.constant 0 : index
    %c0_24 = arith.constant 0 : index
    %c0_25 = arith.constant 0 : index
    %21 = vector.load %arg9[%c0_23, %c0_24, %c0_25] : memref<4x1x16xf32, #tpu.memory_space<vmem>>, vector<1x1x16xf32>
    %22 = vector.shape_cast %21 : vector<1x1x16xf32> to vector<1x16xf32>
    %23 = vector.broadcast %22 : vector<1x16xf32> to vector<16x16xf32>
    %24 = arith.addf %20, %23 : vector<16x16xf32>
    %25 = vector.shape_cast %10 : vector<16x16xf32> to vector<2x8x16xf32>
    %26 = vector.shape_cast %17 : vector<16x16xf32> to vector<2x8x16xf32>
    %27 = vector.shape_cast %24 : vector<16x16xf32> to vector<2x8x16xf32>
    "tpu.trace_start"() <{level = 10 : i32, message = "bqd,bkd->bqk"}> : () -> ()
    %cst_26 = arith.constant dense<0.000000e+00> : vector<2x8x8xf32>
    %28 = tpu.matmul %25, %26, %cst_26 {dimension_numbers = #tpu.dot_dimension_numbers<[2], [2], [1], [1], [0, 0, 0, 1, 1, 1], [0], [0]>} : vector<2x8x16xf32>, vector<2x8x16xf32>, vector<2x8x8xf32> -> vector<2x8x8xf32>
    "tpu.trace_stop"() : () -> ()
    %cst_27 = arith.constant 2.500000e-01 : f32
    %29 = vector.broadcast %cst_27 : f32 to vector<2x8x8xf32>
    %30 = arith.mulf %28, %29 : vector<2x8x8xf32>
    %cst_28 = arith.constant dense<0xFF800000> : vector<2x8xf32>
    %31 = vector.multi_reduction <maximumf>, %30, %cst_28 [2] : vector<2x8x8xf32> to vector<2x8xf32>
    %32 = vector.shape_cast %31 : vector<2x8xf32> to vector<2x8x1xf32>
    %33 = vector.broadcast %32 : vector<2x8x1xf32> to vector<2x8x8xf32>
    %34 = arith.subf %30, %33 : vector<2x8x8xf32>
    %35 = math.exp %34 : vector<2x8x8xf32>
    %cst_29 = arith.constant dense<0.000000e+00> : vector<2x8xf32>
    %36 = vector.multi_reduction <add>, %35, %cst_29 [2] : vector<2x8x8xf32> to vector<2x8xf32>
    %37 = vector.shape_cast %36 : vector<2x8xf32> to vector<2x8x1xf32>
    "tpu.trace_start"() <{level = 10 : i32, message = "bqk,bkd->bqd"}> : () -> ()
    %cst_30 = arith.constant dense<0.000000e+00> : vector<2x8x16xf32>
    %38 = tpu.matmul %35, %27, %cst_30 {dimension_numbers = #tpu.dot_dimension_numbers<[2], [1], [1], [2], [0, 0, 0, 1, 1, 2], [0], [0]>} : vector<2x8x8xf32>, vector<2x8x16xf32>, vector<2x8x16xf32> -> vector<2x8x16xf32>
    "tpu.trace_stop"() : () -> ()
    %39 = tpu.reciprocal %37 {approx = true} : vector<2x8x1xf32> -> vector<2x8x1xf32>
    %40 = vector.broadcast %39 : vector<2x8x1xf32> to vector<2x8x16xf32>
    %41 = arith.mulf %38, %40 : vector<2x8x16xf32>
    %42 = vector.shape_cast %41 : vector<2x8x16xf32> to vector<16x16xf32>
    %c0_31 = arith.constant 0 : index
    %c0_32 = arith.constant 0 : index
    %c0_33 = arith.constant 0 : index
    %43 = vector.load %arg10[%c0_31, %c0_32, %c0_33] : memref<4x16x32xf32, #tpu.memory_space<vmem>>, vector<1x16x32xf32>
    %44 = vector.shape_cast %43 : vector<1x16x32xf32> to vector<16x32xf32>
    %cst_34 = arith.constant dense<0.000000e+00> : vector<16x32xf32>
    %45 = tpu.matmul %42, %44, %cst_34 {dimension_numbers = #tpu.dot_dimension_numbers<[1], [0], [0], [1], [0, 0, 1, 1], [], []>} : vector<16x16xf32>, vector<16x32xf32>, vector<16x32xf32> -> vector<16x32xf32>
    %46 = arith.addf %3, %45 : vector<16x32xf32>
    %c1 = arith.constant 1 : index
    %c0_35 = arith.constant 0 : index
    %c0_36 = arith.constant 0 : index
    %47 = vector.load %arg4[%c1, %c0_35, %c0_36] : memref<4x32x16xf32, #tpu.memory_space<vmem>>, vector<1x32x16xf32>
    %48 = vector.shape_cast %47 : vector<1x32x16xf32> to vector<32x16xf32>
    %cst_37 = arith.constant dense<0.000000e+00> : vector<16x16xf32>
    %49 = tpu.matmul %0, %48, %cst_37 {dimension_numbers = #tpu.dot_dimension_numbers<[1], [0], [0], [1], [0, 0, 1, 1], [], []>} : vector<16x32xf32>, vector<32x16xf32>, vector<16x16xf32> -> vector<16x16xf32>
    %c1_38 = arith.constant 1 : index
    %c0_39 = arith.constant 0 : index
    %c0_40 = arith.constant 0 : index
    %50 = vector.load %arg7[%c1_38, %c0_39, %c0_40] : memref<4x1x16xf32, #tpu.memory_space<vmem>>, vector<1x1x16xf32>
    %51 = vector.shape_cast %50 : vector<1x1x16xf32> to vector<1x16xf32>
    %52 = vector.broadcast %51 : vector<1x16xf32> to vector<16x16xf32>
    %53 = arith.addf %49, %52 : vector<16x16xf32>
    %c1_41 = arith.constant 1 : index
    %c0_42 = arith.constant 0 : index
    %c0_43 = arith.constant 0 : index
    %54 = vector.load %arg5[%c1_41, %c0_42, %c0_43] : memref<4x32x16xf32, #tpu.memory_space<vmem>>, vector<1x32x16xf32>
    %55 = vector.shape_cast %54 : vector<1x32x16xf32> to vector<32x16xf32>
    %cst_44 = arith.constant dense<0.000000e+00> : vector<16x16xf32>
    %56 = tpu.matmul %1, %55, %cst_44 {dimension_numbers = #tpu.dot_dimension_numbers<[1], [0], [0], [1], [0, 0, 1, 1], [], []>} : vector<16x32xf32>, vector<32x16xf32>, vector<16x16xf32> -> vector<16x16xf32>
    %c1_45 = arith.constant 1 : index
    %c0_46 = arith.constant 0 : index
    %c0_47 = arith.constant 0 : index
    %57 = vector.load %arg8[%c1_45, %c0_46, %c0_47] : memref<4x1x16xf32, #tpu.memory_space<vmem>>, vector<1x1x16xf32>
    %58 = vector.shape_cast %57 : vector<1x1x16xf32> to vector<1x16xf32>
    %59 = vector.broadcast %58 : vector<1x16xf32> to vector<16x16xf32>
    %60 = arith.addf %56, %59 : vector<16x16xf32>
    %c1_48 = arith.constant 1 : index
    %c0_49 = arith.constant 0 : index
    %c0_50 = arith.constant 0 : index
    %61 = vector.load %arg6[%c1_48, %c0_49, %c0_50] : memref<4x32x16xf32, #tpu.memory_space<vmem>>, vector<1x32x16xf32>
    %62 = vector.shape_cast %61 : vector<1x32x16xf32> to vector<32x16xf32>
    %cst_51 = arith.constant dense<0.000000e+00> : vector<16x16xf32>
    %63 = tpu.matmul %2, %62, %cst_51 {dimension_numbers = #tpu.dot_dimension_numbers<[1], [0], [0], [1], [0, 0, 1, 1], [], []>} : vector<16x32xf32>, vector<32x16xf32>, vector<16x16xf32> -> vector<16x16xf32>
    %c1_52 = arith.constant 1 : index
    %c0_53 = arith.constant 0 : index
    %c0_54 = arith.constant 0 : index
    %64 = vector.load %arg9[%c1_52, %c0_53, %c0_54] : memref<4x1x16xf32, #tpu.memory_space<vmem>>, vector<1x1x16xf32>
    %65 = vector.shape_cast %64 : vector<1x1x16xf32> to vector<1x16xf32>
    %66 = vector.broadcast %65 : vector<1x16xf32> to vector<16x16xf32>
    %67 = arith.addf %63, %66 : vector<16x16xf32>
    %68 = vector.shape_cast %53 : vector<16x16xf32> to vector<2x8x16xf32>
    %69 = vector.shape_cast %60 : vector<16x16xf32> to vector<2x8x16xf32>
    %70 = vector.shape_cast %67 : vector<16x16xf32> to vector<2x8x16xf32>
    "tpu.trace_start"() <{level = 10 : i32, message = "bqd,bkd->bqk"}> : () -> ()
    %cst_55 = arith.constant dense<0.000000e+00> : vector<2x8x8xf32>
    %71 = tpu.matmul %68, %69, %cst_55 {dimension_numbers = #tpu.dot_dimension_numbers<[2], [2], [1], [1], [0, 0, 0, 1, 1, 1], [0], [0]>} : vector<2x8x16xf32>, vector<2x8x16xf32>, vector<2x8x8xf32> -> vector<2x8x8xf32>
    "tpu.trace_stop"() : () -> ()
    %cst_56 = arith.constant 2.500000e-01 : f32
    %72 = vector.broadcast %cst_56 : f32 to vector<2x8x8xf32>
    %73 = arith.mulf %71, %72 : vector<2x8x8xf32>
    %cst_57 = arith.constant dense<0xFF800000> : vector<2x8xf32>
    %74 = vector.multi_reduction <maximumf>, %73, %cst_57 [2] : vector<2x8x8xf32> to vector<2x8xf32>
    %75 = vector.shape_cast %74 : vector<2x8xf32> to vector<2x8x1xf32>
    %76 = vector.broadcast %75 : vector<2x8x1xf32> to vector<2x8x8xf32>
    %77 = arith.subf %73, %76 : vector<2x8x8xf32>
    %78 = math.exp %77 : vector<2x8x8xf32>
    %cst_58 = arith.constant dense<0.000000e+00> : vector<2x8xf32>
    %79 = vector.multi_reduction <add>, %78, %cst_58 [2] : vector<2x8x8xf32> to vector<2x8xf32>
    %80 = vector.shape_cast %79 : vector<2x8xf32> to vector<2x8x1xf32>
    "tpu.trace_start"() <{level = 10 : i32, message = "bqk,bkd->bqd"}> : () -> ()
    %cst_59 = arith.constant dense<0.000000e+00> : vector<2x8x16xf32>
    %81 = tpu.matmul %78, %70, %cst_59 {dimension_numbers = #tpu.dot_dimension_numbers<[2], [1], [1], [2], [0, 0, 0, 1, 1, 2], [0], [0]>} : vector<2x8x8xf32>, vector<2x8x16xf32>, vector<2x8x16xf32> -> vector<2x8x16xf32>
    "tpu.trace_stop"() : () -> ()
    %82 = tpu.reciprocal %80 {approx = true} : vector<2x8x1xf32> -> vector<2x8x1xf32>
    %83 = vector.broadcast %82 : vector<2x8x1xf32> to vector<2x8x16xf32>
    %84 = arith.mulf %81, %83 : vector<2x8x16xf32>
    %85 = vector.shape_cast %84 : vector<2x8x16xf32> to vector<16x16xf32>
    %c1_60 = arith.constant 1 : index
    %c0_61 = arith.constant 0 : index
    %c0_62 = arith.constant 0 : index
    %86 = vector.load %arg10[%c1_60, %c0_61, %c0_62] : memref<4x16x32xf32, #tpu.memory_space<vmem>>, vector<1x16x32xf32>
    %87 = vector.shape_cast %86 : vector<1x16x32xf32> to vector<16x32xf32>
    %cst_63 = arith.constant dense<0.000000e+00> : vector<16x32xf32>
    %88 = tpu.matmul %85, %87, %cst_63 {dimension_numbers = #tpu.dot_dimension_numbers<[1], [0], [0], [1], [0, 0, 1, 1], [], []>} : vector<16x16xf32>, vector<16x32xf32>, vector<16x32xf32> -> vector<16x32xf32>
    %89 = arith.addf %46, %88 : vector<16x32xf32>
    %c2 = arith.constant 2 : index
    %c0_64 = arith.constant 0 : index
    %c0_65 = arith.constant 0 : index
    %90 = vector.load %arg4[%c2, %c0_64, %c0_65] : memref<4x32x16xf32, #tpu.memory_space<vmem>>, vector<1x32x16xf32>
    %91 = vector.shape_cast %90 : vector<1x32x16xf32> to vector<32x16xf32>
    %cst_66 = arith.constant dense<0.000000e+00> : vector<16x16xf32>
    %92 = tpu.matmul %0, %91, %cst_66 {dimension_numbers = #tpu.dot_dimension_numbers<[1], [0], [0], [1], [0, 0, 1, 1], [], []>} : vector<16x32xf32>, vector<32x16xf32>, vector<16x16xf32> -> vector<16x16xf32>
    %c2_67 = arith.constant 2 : index
    %c0_68 = arith.constant 0 : index
    %c0_69 = arith.constant 0 : index
    %93 = vector.load %arg7[%c2_67, %c0_68, %c0_69] : memref<4x1x16xf32, #tpu.memory_space<vmem>>, vector<1x1x16xf32>
    %94 = vector.shape_cast %93 : vector<1x1x16xf32> to vector<1x16xf32>
    %95 = vector.broadcast %94 : vector<1x16xf32> to vector<16x16xf32>
    %96 = arith.addf %92, %95 : vector<16x16xf32>
    %c2_70 = arith.constant 2 : index
    %c0_71 = arith.constant 0 : index
    %c0_72 = arith.constant 0 : index
    %97 = vector.load %arg5[%c2_70, %c0_71, %c0_72] : memref<4x32x16xf32, #tpu.memory_space<vmem>>, vector<1x32x16xf32>
    %98 = vector.shape_cast %97 : vector<1x32x16xf32> to vector<32x16xf32>
    %cst_73 = arith.constant dense<0.000000e+00> : vector<16x16xf32>
    %99 = tpu.matmul %1, %98, %cst_73 {dimension_numbers = #tpu.dot_dimension_numbers<[1], [0], [0], [1], [0, 0, 1, 1], [], []>} : vector<16x32xf32>, vector<32x16xf32>, vector<16x16xf32> -> vector<16x16xf32>
    %c2_74 = arith.constant 2 : index
    %c0_75 = arith.constant 0 : index
    %c0_76 = arith.constant 0 : index
    %100 = vector.load %arg8[%c2_74, %c0_75, %c0_76] : memref<4x1x16xf32, #tpu.memory_space<vmem>>, vector<1x1x16xf32>
    %101 = vector.shape_cast %100 : vector<1x1x16xf32> to vector<1x16xf32>
    %102 = vector.broadcast %101 : vector<1x16xf32> to vector<16x16xf32>
    %103 = arith.addf %99, %102 : vector<16x16xf32>
    %c2_77 = arith.constant 2 : index
    %c0_78 = arith.constant 0 : index
    %c0_79 = arith.constant 0 : index
    %104 = vector.load %arg6[%c2_77, %c0_78, %c0_79] : memref<4x32x16xf32, #tpu.memory_space<vmem>>, vector<1x32x16xf32>
    %105 = vector.shape_cast %104 : vector<1x32x16xf32> to vector<32x16xf32>
    %cst_80 = arith.constant dense<0.000000e+00> : vector<16x16xf32>
    %106 = tpu.matmul %2, %105, %cst_80 {dimension_numbers = #tpu.dot_dimension_numbers<[1], [0], [0], [1], [0, 0, 1, 1], [], []>} : vector<16x32xf32>, vector<32x16xf32>, vector<16x16xf32> -> vector<16x16xf32>
    %c2_81 = arith.constant 2 : index
    %c0_82 = arith.constant 0 : index
    %c0_83 = arith.constant 0 : index
    %107 = vector.load %arg9[%c2_81, %c0_82, %c0_83] : memref<4x1x16xf32, #tpu.memory_space<vmem>>, vector<1x1x16xf32>
    %108 = vector.shape_cast %107 : vector<1x1x16xf32> to vector<1x16xf32>
    %109 = vector.broadcast %108 : vector<1x16xf32> to vector<16x16xf32>
    %110 = arith.addf %106, %109 : vector<16x16xf32>
    %111 = vector.shape_cast %96 : vector<16x16xf32> to vector<2x8x16xf32>
    %112 = vector.shape_cast %103 : vector<16x16xf32> to vector<2x8x16xf32>
    %113 = vector.shape_cast %110 : vector<16x16xf32> to vector<2x8x16xf32>
    "tpu.trace_start"() <{level = 10 : i32, message = "bqd,bkd->bqk"}> : () -> ()
    %cst_84 = arith.constant dense<0.000000e+00> : vector<2x8x8xf32>
    %114 = tpu.matmul %111, %112, %cst_84 {dimension_numbers = #tpu.dot_dimension_numbers<[2], [2], [1], [1], [0, 0, 0, 1, 1, 1], [0], [0]>} : vector<2x8x16xf32>, vector<2x8x16xf32>, vector<2x8x8xf32> -> vector<2x8x8xf32>
    "tpu.trace_stop"() : () -> ()
    %cst_85 = arith.constant 2.500000e-01 : f32
    %115 = vector.broadcast %cst_85 : f32 to vector<2x8x8xf32>
    %116 = arith.mulf %114, %115 : vector<2x8x8xf32>
    %cst_86 = arith.constant dense<0xFF800000> : vector<2x8xf32>
    %117 = vector.multi_reduction <maximumf>, %116, %cst_86 [2] : vector<2x8x8xf32> to vector<2x8xf32>
    %118 = vector.shape_cast %117 : vector<2x8xf32> to vector<2x8x1xf32>
    %119 = vector.broadcast %118 : vector<2x8x1xf32> to vector<2x8x8xf32>
    %120 = arith.subf %116, %119 : vector<2x8x8xf32>
    %121 = math.exp %120 : vector<2x8x8xf32>
    %cst_87 = arith.constant dense<0.000000e+00> : vector<2x8xf32>
    %122 = vector.multi_reduction <add>, %121, %cst_87 [2] : vector<2x8x8xf32> to vector<2x8xf32>
    %123 = vector.shape_cast %122 : vector<2x8xf32> to vector<2x8x1xf32>
    "tpu.trace_start"() <{level = 10 : i32, message = "bqk,bkd->bqd"}> : () -> ()
    %cst_88 = arith.constant dense<0.000000e+00> : vector<2x8x16xf32>
    %124 = tpu.matmul %121, %113, %cst_88 {dimension_numbers = #tpu.dot_dimension_numbers<[2], [1], [1], [2], [0, 0, 0, 1, 1, 2], [0], [0]>} : vector<2x8x8xf32>, vector<2x8x16xf32>, vector<2x8x16xf32> -> vector<2x8x16xf32>
    "tpu.trace_stop"() : () -> ()
    %125 = tpu.reciprocal %123 {approx = true} : vector<2x8x1xf32> -> vector<2x8x1xf32>
    %126 = vector.broadcast %125 : vector<2x8x1xf32> to vector<2x8x16xf32>
    %127 = arith.mulf %124, %126 : vector<2x8x16xf32>
    %128 = vector.shape_cast %127 : vector<2x8x16xf32> to vector<16x16xf32>
    %c2_89 = arith.constant 2 : index
    %c0_90 = arith.constant 0 : index
    %c0_91 = arith.constant 0 : index
    %129 = vector.load %arg10[%c2_89, %c0_90, %c0_91] : memref<4x16x32xf32, #tpu.memory_space<vmem>>, vector<1x16x32xf32>
    %130 = vector.shape_cast %129 : vector<1x16x32xf32> to vector<16x32xf32>
    %cst_92 = arith.constant dense<0.000000e+00> : vector<16x32xf32>
    %131 = tpu.matmul %128, %130, %cst_92 {dimension_numbers = #tpu.dot_dimension_numbers<[1], [0], [0], [1], [0, 0, 1, 1], [], []>} : vector<16x16xf32>, vector<16x32xf32>, vector<16x32xf32> -> vector<16x32xf32>
    %132 = arith.addf %89, %131 : vector<16x32xf32>
    %c3 = arith.constant 3 : index
    %c0_93 = arith.constant 0 : index
    %c0_94 = arith.constant 0 : index
    %133 = vector.load %arg4[%c3, %c0_93, %c0_94] : memref<4x32x16xf32, #tpu.memory_space<vmem>>, vector<1x32x16xf32>
    %134 = vector.shape_cast %133 : vector<1x32x16xf32> to vector<32x16xf32>
    %cst_95 = arith.constant dense<0.000000e+00> : vector<16x16xf32>
    %135 = tpu.matmul %0, %134, %cst_95 {dimension_numbers = #tpu.dot_dimension_numbers<[1], [0], [0], [1], [0, 0, 1, 1], [], []>} : vector<16x32xf32>, vector<32x16xf32>, vector<16x16xf32> -> vector<16x16xf32>
    %c3_96 = arith.constant 3 : index
    %c0_97 = arith.constant 0 : index
    %c0_98 = arith.constant 0 : index
    %136 = vector.load %arg7[%c3_96, %c0_97, %c0_98] : memref<4x1x16xf32, #tpu.memory_space<vmem>>, vector<1x1x16xf32>
    %137 = vector.shape_cast %136 : vector<1x1x16xf32> to vector<1x16xf32>
    %138 = vector.broadcast %137 : vector<1x16xf32> to vector<16x16xf32>
    %139 = arith.addf %135, %138 : vector<16x16xf32>
    %c3_99 = arith.constant 3 : index
    %c0_100 = arith.constant 0 : index
    %c0_101 = arith.constant 0 : index
    %140 = vector.load %arg5[%c3_99, %c0_100, %c0_101] : memref<4x32x16xf32, #tpu.memory_space<vmem>>, vector<1x32x16xf32>
    %141 = vector.shape_cast %140 : vector<1x32x16xf32> to vector<32x16xf32>
    %cst_102 = arith.constant dense<0.000000e+00> : vector<16x16xf32>
    %142 = tpu.matmul %1, %141, %cst_102 {dimension_numbers = #tpu.dot_dimension_numbers<[1], [0], [0], [1], [0, 0, 1, 1], [], []>} : vector<16x32xf32>, vector<32x16xf32>, vector<16x16xf32> -> vector<16x16xf32>
    %c3_103 = arith.constant 3 : index
    %c0_104 = arith.constant 0 : index
    %c0_105 = arith.constant 0 : index
    %143 = vector.load %arg8[%c3_103, %c0_104, %c0_105] : memref<4x1x16xf32, #tpu.memory_space<vmem>>, vector<1x1x16xf32>
    %144 = vector.shape_cast %143 : vector<1x1x16xf32> to vector<1x16xf32>
    %145 = vector.broadcast %144 : vector<1x16xf32> to vector<16x16xf32>
    %146 = arith.addf %142, %145 : vector<16x16xf32>
    %c3_106 = arith.constant 3 : index
    %c0_107 = arith.constant 0 : index
    %c0_108 = arith.constant 0 : index
    %147 = vector.load %arg6[%c3_106, %c0_107, %c0_108] : memref<4x32x16xf32, #tpu.memory_space<vmem>>, vector<1x32x16xf32>
    %148 = vector.shape_cast %147 : vector<1x32x16xf32> to vector<32x16xf32>
    %cst_109 = arith.constant dense<0.000000e+00> : vector<16x16xf32>
    %149 = tpu.matmul %2, %148, %cst_109 {dimension_numbers = #tpu.dot_dimension_numbers<[1], [0], [0], [1], [0, 0, 1, 1], [], []>} : vector<16x32xf32>, vector<32x16xf32>, vector<16x16xf32> -> vector<16x16xf32>
    %c3_110 = arith.constant 3 : index
    %c0_111 = arith.constant 0 : index
    %c0_112 = arith.constant 0 : index
    %150 = vector.load %arg9[%c3_110, %c0_111, %c0_112] : memref<4x1x16xf32, #tpu.memory_space<vmem>>, vector<1x1x16xf32>
    %151 = vector.shape_cast %150 : vector<1x1x16xf32> to vector<1x16xf32>
    %152 = vector.broadcast %151 : vector<1x16xf32> to vector<16x16xf32>
    %153 = arith.addf %149, %152 : vector<16x16xf32>
    %154 = vector.shape_cast %139 : vector<16x16xf32> to vector<2x8x16xf32>
    %155 = vector.shape_cast %146 : vector<16x16xf32> to vector<2x8x16xf32>
    %156 = vector.shape_cast %153 : vector<16x16xf32> to vector<2x8x16xf32>
    "tpu.trace_start"() <{level = 10 : i32, message = "bqd,bkd->bqk"}> : () -> ()
    %cst_113 = arith.constant dense<0.000000e+00> : vector<2x8x8xf32>
    %157 = tpu.matmul %154, %155, %cst_113 {dimension_numbers = #tpu.dot_dimension_numbers<[2], [2], [1], [1], [0, 0, 0, 1, 1, 1], [0], [0]>} : vector<2x8x16xf32>, vector<2x8x16xf32>, vector<2x8x8xf32> -> vector<2x8x8xf32>
    "tpu.trace_stop"() : () -> ()
    %cst_114 = arith.constant 2.500000e-01 : f32
    %158 = vector.broadcast %cst_114 : f32 to vector<2x8x8xf32>
    %159 = arith.mulf %157, %158 : vector<2x8x8xf32>
    %cst_115 = arith.constant dense<0xFF800000> : vector<2x8xf32>
    %160 = vector.multi_reduction <maximumf>, %159, %cst_115 [2] : vector<2x8x8xf32> to vector<2x8xf32>
    %161 = vector.shape_cast %160 : vector<2x8xf32> to vector<2x8x1xf32>
    %162 = vector.broadcast %161 : vector<2x8x1xf32> to vector<2x8x8xf32>
    %163 = arith.subf %159, %162 : vector<2x8x8xf32>
    %164 = math.exp %163 : vector<2x8x8xf32>
    %cst_116 = arith.constant dense<0.000000e+00> : vector<2x8xf32>
    %165 = vector.multi_reduction <add>, %164, %cst_116 [2] : vector<2x8x8xf32> to vector<2x8xf32>
    %166 = vector.shape_cast %165 : vector<2x8xf32> to vector<2x8x1xf32>
    "tpu.trace_start"() <{level = 10 : i32, message = "bqk,bkd->bqd"}> : () -> ()
    %cst_117 = arith.constant dense<0.000000e+00> : vector<2x8x16xf32>
    %167 = tpu.matmul %164, %156, %cst_117 {dimension_numbers = #tpu.dot_dimension_numbers<[2], [1], [1], [2], [0, 0, 0, 1, 1, 2], [0], [0]>} : vector<2x8x8xf32>, vector<2x8x16xf32>, vector<2x8x16xf32> -> vector<2x8x16xf32>
    "tpu.trace_stop"() : () -> ()
    %168 = tpu.reciprocal %166 {approx = true} : vector<2x8x1xf32> -> vector<2x8x1xf32>
    %169 = vector.broadcast %168 : vector<2x8x1xf32> to vector<2x8x16xf32>
    %170 = arith.mulf %167, %169 : vector<2x8x16xf32>
    %171 = vector.shape_cast %170 : vector<2x8x16xf32> to vector<16x16xf32>
    %c3_118 = arith.constant 3 : index
    %c0_119 = arith.constant 0 : index
    %c0_120 = arith.constant 0 : index
    %172 = vector.load %arg10[%c3_118, %c0_119, %c0_120] : memref<4x16x32xf32, #tpu.memory_space<vmem>>, vector<1x16x32xf32>
    %173 = vector.shape_cast %172 : vector<1x16x32xf32> to vector<16x32xf32>
    %cst_121 = arith.constant dense<0.000000e+00> : vector<16x32xf32>
    %174 = tpu.matmul %171, %173, %cst_121 {dimension_numbers = #tpu.dot_dimension_numbers<[1], [0], [0], [1], [0, 0, 1, 1], [], []>} : vector<16x16xf32>, vector<16x32xf32>, vector<16x32xf32> -> vector<16x32xf32>
    %175 = arith.addf %132, %174 : vector<16x32xf32>
    %c0_122 = arith.constant 0 : index
    %c0_123 = arith.constant 0 : index
    %176 = vector.load %arg11[%c0_122, %c0_123] : memref<1x32xf32, #tpu.memory_space<vmem>>, vector<1x32xf32>
    %177 = vector.broadcast %176 : vector<1x32xf32> to vector<16x32xf32>
    %178 = arith.addf %175, %177 : vector<16x32xf32>
    %c0_124 = arith.constant 0 : index
    %c0_125 = arith.constant 0 : index
    %179 = vector.load %arg12[%c0_124, %c0_125] : memref<16x32xf32, #tpu.memory_space<vmem>>, vector<16x32xf32>
    tpu.vector_store %arg12[%c0_124, %c0_125], %178 {strides = array<i32>} : memref<16x32xf32, #tpu.memory_space<vmem>>, vector<16x32xf32>,
    return
  }
  func.func @transform_0(%arg0: i32) -> (i32, i32) {
    %c0_i32 = arith.constant 0 : i32
    %c0_i32_0 = arith.constant 0 : i32
    %c0_i32_1 = arith.constant 0 : i32
    return %c0_i32, %c0_i32_0 : i32, i32
  }
  func.func @transform_1(%arg0: i32) -> (i32, i32) {
    %c0_i32 = arith.constant 0 : i32
    %c0_i32_0 = arith.constant 0 : i32
    %c0_i32_1 = arith.constant 0 : i32
    return %c0_i32, %c0_i32_0 : i32, i32
  }
  func.func @transform_2(%arg0: i32) -> (i32, i32) {
    %c0_i32 = arith.constant 0 : i32
    %c0_i32_0 = arith.constant 0 : i32
    %c0_i32_1 = arith.constant 0 : i32
    return %c0_i32, %c0_i32_0 : i32, i32
  }
  func.func @transform_3(%arg0: i32) -> (i32, i32, i32) {
    %c0_i32 = arith.constant 0 : i32
    %c0_i32_0 = arith.constant 0 : i32
    %c0_i32_1 = arith.constant 0 : i32
    %c0_i32_2 = arith.constant 0 : i32
    return %c0_i32, %c0_i32_0, %c0_i32_1 : i32, i32, i32
  }
  func.func @transform_4(%arg0: i32) -> (i32, i32, i32) {
    %c0_i32 = arith.constant 0 : i32
    %c0_i32_0 = arith.constant 0 : i32
    %c0_i32_1 = arith.constant 0 : i32
    %c0_i32_2 = arith.constant 0 : i32
    return %c0_i32, %c0_i32_0, %c0_i32_1 : i32, i32, i32
  }
  func.func @transform_5(%arg0: i32) -> (i32, i32, i32) {
    %c0_i32 = arith.constant 0 : i32
    %c0_i32_0 = arith.constant 0 : i32
    %c0_i32_1 = arith.constant 0 : i32
    %c0_i32_2 = arith.constant 0 : i32
    return %c0_i32, %c0_i32_0, %c0_i32_1 : i32, i32, i32
  }
  func.func @transform_6(%arg0: i32) -> (i32, i32, i32) {
    %c0_i32 = arith.constant 0 : i32
    %c0_i32_0 = arith.constant 0 : i32
    %c0_i32_1 = arith.constant 0 : i32
    %c0_i32_2 = arith.constant 0 : i32
    return %c0_i32, %c0_i32_0, %c0_i32_1 : i32, i32, i32
  }
  func.func @transform_7(%arg0: i32) -> (i32, i32, i32) {
    %c0_i32 = arith.constant 0 : i32
    %c0_i32_0 = arith.constant 0 : i32
    %c0_i32_1 = arith.constant 0 : i32
    %c0_i32_2 = arith.constant 0 : i32
    return %c0_i32, %c0_i32_0, %c0_i32_1 : i32, i32, i32
  }
  func.func @transform_8(%arg0: i32) -> (i32, i32, i32) {
    %c0_i32 = arith.constant 0 : i32
    %c0_i32_0 = arith.constant 0 : i32
    %c0_i32_1 = arith.constant 0 : i32
    %c0_i32_2 = arith.constant 0 : i32
    return %c0_i32, %c0_i32_0, %c0_i32_1 : i32, i32, i32
  }
  func.func @transform_9(%arg0: i32) -> (i32, i32, i32) {
    %c0_i32 = arith.constant 0 : i32
    %c0_i32_0 = arith.constant 0 : i32
    %c0_i32_1 = arith.constant 0 : i32
    %c0_i32_2 = arith.constant 0 : i32
    return %c0_i32, %c0_i32_0, %c0_i32_1 : i32, i32, i32
  }
  func.func @transform_10(%arg0: i32) -> (i32, i32) {
    %c0_i32 = arith.constant 0 : i32
    %c0_i32_0 = arith.constant 0 : i32
    %c0_i32_1 = arith.constant 0 : i32
    return %c0_i32, %c0_i32_0 : i32, i32
  }
  func.func @transform_11(%arg0: i32) -> (i32, i32) {
    %c0_i32 = arith.constant 0 : i32
    %c0_i32_0 = arith.constant 0 : i32
    %c0_i32_1 = arith.constant 0 : i32
    return %c0_i32, %c0_i32_0 : i32, i32
  }
}

</mosaic_0001>

<llo_original>
// kernel: tpu_custom_call.1
$region0: #{tpu_custom_call.1}
  #allocation0 [shape = 'u32[]', space=smem, size = 0x4, offset = 0x4, fixed_abs, tag = 'smem constant byte address 0x4 - core index']
  #allocation1 [shape = 'u32[144,128]{1,0:T(1,128)}', space=vmem, size = 0x12000, scoped, tag = 'internal scratch']
  %s0 = inlined_call_operand.vmem [shape: f32[16,32], index: 0, kind: input, shape index: {}]
  %s1 = inlined_call_operand.vmem [shape: f32[16,32], index: 1, kind: input, shape index: {}]
  %s2 = inlined_call_operand.vmem [shape: f32[16,32], index: 2, kind: input, shape index: {}]
  %s3 = inlined_call_operand.vmem [shape: f32[4,32,16], index: 3, kind: input, shape index: {}]
  %s4 = inlined_call_operand.vmem [shape: f32[4,32,16], index: 4, kind: input, shape index: {}]
  %s5 = inlined_call_operand.vmem [shape: f32[4,32,16], index: 5, kind: input, shape index: {}]
  %s6 = inlined_call_operand.vmem [shape: f32[4,1,16], index: 6, kind: input, shape index: {}]
  %s7 = inlined_call_operand.vmem [shape: f32[4,1,16], index: 7, kind: input, shape index: {}]
  %s8 = inlined_call_operand.vmem [shape: f32[4,1,16], index: 8, kind: input, shape index: {}]
  %s9 = inlined_call_operand.vmem [shape: f32[4,16,32], index: 9, kind: input, shape index: {}]
  %s10 = inlined_call_operand.vmem [shape: f32[1,32], index: 10, kind: input, shape index: {}]
  %s11 = inlined_call_operand.hbm [shape: f32[16,32], index: 11, kind: output, shape index: {}]
  %s12 = sld [smem:[#allocation0]]
  $region54: #{tpu_custom_call.1} parent=0
    _
  %s14 = ssub.s32 1, %s12
  %s15 = scalar_select 0, %s14, %s12
  $region1: #{tpu_custom_call.1} parent=0
    #allocation2 [shape = 'u8[8192]{0}', space=vmem, size = 0x2000, scoped, tag = 'output window, operand 0, single buffered']
    #allocation3 [shape = 's32[1]{0}', space=sflag, size = 0x4, scoped, tag = 'scoped memory for tpu_custom_call.1']
    %16 = vsyncpa [#allocation3], 0
    // Predicated region
    $region2: #{tpu_custom_call.1} parent=1 // pred_check
      _
    $region3: #{tpu_custom_call.1} parent=1 // pred_check_branch
      %18 = sbr.rel (0) target = $region5
    $region4: #{tpu_custom_call.1} parent=1 // pred_region
      _
    $region5: #{tpu_custom_call.1} parent=1 // pred_fallthru
      _
    // Predicated region
    $region6: #{tpu_custom_call.1} parent=1 // pred_check
      _
    $region7: #{tpu_custom_call.1} parent=1 // pred_check_branch
      %20 = sbr.rel (0) target = $region9
    $region8: #{tpu_custom_call.1} parent=1 // pred_region
      _
    $region9: #{tpu_custom_call.1} parent=1 // pred_fallthru
      _
    // Predicated region
    $region10: #{tpu_custom_call.1} parent=1 // pred_check
      _
    $region11: #{tpu_custom_call.1} parent=1 // pred_check_branch
      %22 = sbr.rel (0) target = $region13
    $region12: #{tpu_custom_call.1} parent=1 // pred_region
      _
    $region13: #{tpu_custom_call.1} parent=1 // pred_fallthru
      _
    // Predicated region
    $region14: #{tpu_custom_call.1} parent=1 // pred_check
      _
    $region15: #{tpu_custom_call.1} parent=1 // pred_check_branch
      %24 = sbr.rel (0) target = $region17
    $region16: #{tpu_custom_call.1} parent=1 // pred_region
      _
    $region17: #{tpu_custom_call.1} parent=1 // pred_fallthru
      _
    // Predicated region
    $region18: #{tpu_custom_call.1} parent=1 // pred_check
      _
    $region19: #{tpu_custom_call.1} parent=1 // pred_check_branch
      %26 = sbr.rel (0) target = $region21
    $region20: #{tpu_custom_call.1} parent=1 // pred_region
      _
    $region21: #{tpu_custom_call.1} parent=1 // pred_fallthru
      _
    // Predicated region
    $region22: #{tpu_custom_call.1} parent=1 // pred_check
      _
    $region23: #{tpu_custom_call.1} parent=1 // pred_check_branch
      %28 = sbr.rel (0) target = $region25
    $region24: #{tpu_custom_call.1} parent=1 // pred_region
      _
    $region25: #{tpu_custom_call.1} parent=1 // pred_fallthru
      _
    // Predicated region
    $region26: #{tpu_custom_call.1} parent=1 // pred_check
      _
    $region27: #{tpu_custom_call.1} parent=1 // pred_check_branch
      %30 = sbr.rel (0) target = $region29
    $region28: #{tpu_custom_call.1} parent=1 // pred_region
      _
    $region29: #{tpu_custom_call.1} parent=1 // pred_fallthru
      _
    // Predicated region
    $region30: #{tpu_custom_call.1} parent=1 // pred_check
      _
    $region31: #{tpu_custom_call.1} parent=1 // pred_check_branch
      %32 = sbr.rel (0) target = $region33
    $region32: #{tpu_custom_call.1} parent=1 // pred_region
      _
    $region33: #{tpu_custom_call.1} parent=1 // pred_fallthru
      _
    // Predicated region
    $region34: #{tpu_custom_call.1} parent=1 // pred_check
      _
    $region35: #{tpu_custom_call.1} parent=1 // pred_check_branch
      %34 = sbr.rel (0) target = $region37
    $region36: #{tpu_custom_call.1} parent=1 // pred_region
      _
    $region37: #{tpu_custom_call.1} parent=1 // pred_fallthru
      _
    // Predicated region
    $region38: #{tpu_custom_call.1} parent=1 // pred_check
      _
    $region39: #{tpu_custom_call.1} parent=1 // pred_check_branch
      %36 = sbr.rel (0) target = $region41
    $region40: #{tpu_custom_call.1} parent=1 // pred_region
      _
    $region41: #{tpu_custom_call.1} parent=1 // pred_fallthru
      _
    // Predicated region
    $region42: #{tpu_custom_call.1} parent=1 // pred_check
      _
    $region43: #{tpu_custom_call.1} parent=1 // pred_check_branch
      %38 = sbr.rel (0) target = $region45
    $region44: #{tpu_custom_call.1} parent=1 // pred_region
      _
    $region45: #{tpu_custom_call.1} parent=1 // pred_fallthru
      _
    %v39 = vld [vmem:[%s0] sm:$0xff]
    %v40 = vld [vmem:[%s0 + $0x8] sm:$0xff]
    %v41 = vld [vmem:[%s1] sm:$0xff]
    %v42 = vld [vmem:[%s1 + $0x8] sm:$0xff]
    %v43 = vld [vmem:[%s2] sm:$0xff]
    %v44 = vld [vmem:[%s2 + $0x8] sm:$0xff]
    %v45 = vld [vmem:[%s3] sm:$0xff]
    %v46 = vld [vmem:[%s3 + $0x8] sm:$0xff]
    %v47 = vld [vmem:[%s3 + $0x10] sm:$0xff]
    %v48 = vld [vmem:[%s3 + $0x18] sm:$0xff]
    %v49 = vld [vmem:[%s6] sm:$0x1]
    %v51 = vlaneseq
    %v52 = vshrl.u32 %v51, 7
    %v53 = vsub.s32 0, %v52
    %v54 = vrot.slane %v49, %v53
    %vm56 = vcmask 261120
    %v58 = vsel %vm56, %v39, 0
    %v61 = vsel %vm56, %v40, 0
    %63 = vmatprep.subr.mxu0 0.0
    %64 = vmatpush1.msra.mxu0 %v45
    %65 = vmatprep.subr.mxu0 0.0
    %66 = vmatpush1.msra.mxu0 %v46
    %67 = vmatprep.subr.mxu0 0.0
    %68 = vmatpush1.msra.mxu0 %v47
    %69 = vmatprep.subr.mxu0 0.0
    %70 = vmatpush1.msra.mxu0 %v48
    %71 = vmatprep.subr.mxu0 0.0
    %72 = vmatpush1.msra.mxu0 0.0
    %73 = vmatprep.subr.mxu0 0.0
    %74 = vmatpush1.msra.mxu0 0.0
    %75 = vmatprep.subr.mxu0 0.0
    %76 = vmatpush1.msra.mxu0 0.0
    %77 = vmatprep.subr.mxu0 0.0
    %78 = vmatpush1.msra.mxu0 0.0
    %79 = vmatprep.subr.mxu0 0.0
    %80 = vmatpush1.msra.mxu0 0.0
    %81 = vmatprep.subr.mxu0 0.0
    %82 = vmatpush1.msra.mxu0 0.0
    %83 = vmatprep.subr.mxu0 0.0
    %84 = vmatpush1.msra.mxu0 0.0
    %85 = vmatprep.subr.mxu0 0.0
    %86 = vmatpush1.msra.mxu0 0.0
    %87 = vmatprep.subr.mxu0 0.0
    %88 = vmatpush1.msra.mxu0 0.0
    %89 = vmatprep.subr.mxu0 0.0
    %90 = vmatpush1.msra.mxu0 0.0
    %91 = vmatprep.subr.mxu0 0.0
    %92 = vmatpush1.msra.mxu0 0.0
    %93 = vmatprep.subr.mxu0 0.0
    %94 = vmatpush1.msra.mxu0 0.0
    %95 = vmatprep.subr.mxu0 0.0
    %96 = vmatpush1.msra.mxu0 0.0
    %97 = vmatprep.subr.mxu0 0.0
    %98 = vmatpush1.msra.mxu0 0.0
    %99 = vmatprep.subr.mxu0 0.0
    %100 = vmatpush1.msra.mxu0 0.0
    %101 = vmatprep.subr.mxu0 0.0
    %102 = vmatpush1.msra.mxu0 0.0
    %103 = vmatprep.subr.mxu0 0.0
    %104 = vmatpush1.msra.mxu0 0.0
    %105 = vmatprep.subr.mxu0 0.0
    %106 = vmatpush1.msra.mxu0 0.0
    %107 = vmatprep.subr.mxu0 0.0
    %108 = vmatpush1.msra.mxu0 0.0
    %109 = vmatprep.subr.mxu0 0.0
    %110 = vmatpush1.msra.mxu0 0.0
    %111 = vmatprep.subr.mxu0 0.0
    %112 = vmatpush1.msra.mxu0 0.0
    %113 = vmatprep.subr.mxu0 0.0
    %114 = vmatpush1.msra.mxu0 0.0
    %115 = vmatprep.subr.mxu0 0.0
    %116 = vmatpush1.msra.mxu0 0.0
    %117 = vmatprep.subr.mxu0 0.0
    %118 = vmatpush1.msra.mxu0 0.0
    %119 = vmatprep.subr.mxu0 0.0
    %120 = vmatpush1.msra.mxu0 0.0
    %121 = vmatprep.subr.mxu0 0.0
    %122 = vmatpush1.msra.mxu0 0.0
    %123 = vmatprep.subr.mxu0 0.0
    %124 = vmatpush1.msra.mxu0 0.0
    %125 = vmatprep.subr.mxu0 0.0
    %126 = vmatpush1.msra.mxu0 0.0
    %127 = vmatprep.mubr.f32.mxu0 0.0
    %128 = vmatmul.mubr.f32.gmra.mrb[0].mxu0 %v58
    %v129 = vpop.f32.mrb[0].mxu0
    %v130 = vadd.f32 %v54, %v129
    %v131 = vpop.f32.mrb[0].mxu0
    %132 = vmatprep.mubr.f32.mxu0 0.0
    %133 = vmatmul.mubr.f32.gmra.mrb[0].mxu0 %v61
    %v134 = vpop.f32.mrb[0].mxu0
    %v135 = vadd.f32 %v54, %v134
    %v136 = vpop.f32.mrb[0].mxu0
    %137 = vdwg.mxu0
    %v138 = vld [vmem:[%s4] sm:$0xff]
    %v139 = vld [vmem:[%s4 + $0x8] sm:$0xff]
    %v140 = vld [vmem:[%s4 + $0x10] sm:$0xff]
    %v141 = vld [vmem:[%s4 + $0x18] sm:$0xff]
    %v142 = vld [vmem:[%s7] sm:$0x1]
    %v144 = vlaneseq
    %v145 = vshrl.u32 %v144, 7
    %v146 = vsub.s32 0, %v145
    %v147 = vrot.slane %v142, %v146
    %v150 = vsel %vm56, %v41, 0
    %v153 = vsel %vm56, %v42, 0
    %155 = vmatprep.subr.mxu0 0.0
    %156 = vmatpush1.msra.mxu0 %v138
    %157 = vmatprep.subr.mxu0 0.0
    %158 = vmatpush1.msra.mxu0 %v139
    %159 = vmatprep.subr.mxu0 0.0
    %160 = vmatpush1.msra.mxu0 %v140
    %161 = vmatprep.subr.mxu0 0.0
    %162 = vmatpush1.msra.mxu0 %v141
    %163 = vmatprep.subr.mxu0 0.0
    %164 = vmatpush1.msra.mxu0 0.0
    %165 = vmatprep.subr.mxu0 0.0
    %166 = vmatpush1.msra.mxu0 0.0
    %167 = vmatprep.subr.mxu0 0.0
    %168 = vmatpush1.msra.mxu0 0.0
    %169 = vmatprep.subr.mxu0 0.0
    %170 = vmatpush1.msra.mxu0 0.0
    %171 = vmatprep.subr.mxu0 0.0
    %172 = vmatpush1.msra.mxu0 0.0
    %173 = vmatprep.subr.mxu0 0.0
    %174 = vmatpush1.msra.mxu0 0.0
    %175 = vmatprep.subr.mxu0 0.0
    %176 = vmatpush1.msra.mxu0 0.0
    %177 = vmatprep.subr.mxu0 0.0
    %178 = vmatpush1.msra.mxu0 0.0
    %179 = vmatprep.subr.mxu0 0.0
    %180 = vmatpush1.msra.mxu0 0.0
    %181 = vmatprep.subr.mxu0 0.0
    %182 = vmatpush1.msra.mxu0 0.0
    %183 = vmatprep.subr.mxu0 0.0
    %184 = vmatpush1.msra.mxu0 0.0
    %185 = vmatprep.subr.mxu0 0.0
    %186 = vmatpush1.msra.mxu0 0.0
    %187 = vmatprep.subr.mxu0 0.0
    %188 = vmatpush1.msra.mxu0 0.0
    %189 = vmatprep.subr.mxu0 0.0
    %190 = vmatpush1.msra.mxu0 0.0
    %191 = vmatprep.subr.mxu0 0.0
    %192 = vmatpush1.msra.mxu0 0.0
    %193 = vmatprep.subr.mxu0 0.0
    %194 = vmatpush1.msra.mxu0 0.0
    %195 = vmatprep.subr.mxu0 0.0
    %196 = vmatpush1.msra.mxu0 0.0
    %197 = vmatprep.subr.mxu0 0.0
    %198 = vmatpush1.msra.mxu0 0.0
    %199 = vmatprep.subr.mxu0 0.0
    %200 = vmatpush1.msra.mxu0 0.0
    %201 = vmatprep.subr.mxu0 0.0
    %202 = vmatpush1.msra.mxu0 0.0
    %203 = vmatprep.subr.mxu0 0.0
    %204 = vmatpush1.msra.mxu0 0.0
    %205 = vmatprep.subr.mxu0 0.0
    %206 = vmatpush1.msra.mxu0 0.0
    %207 = vmatprep.subr.mxu0 0.0
    %208 = vmatpush1.msra.mxu0 0.0
    %209 = vmatprep.subr.mxu0 0.0
    %210 = vmatpush1.msra.mxu0 0.0
    %211 = vmatprep.subr.mxu0 0.0
    %212 = vmatpush1.msra.mxu0 0.0
    %213 = vmatprep.subr.mxu0 0.0
    %214 = vmatpush1.msra.mxu0 0.0
    %215 = vmatprep.subr.mxu0 0.0
    %216 = vmatpush1.msra.mxu0 0.0
    %217 = vmatprep.subr.mxu0 0.0
    %218 = vmatpush1.msra.mxu0 0.0
    %219 = vmatprep.mubr.f32.mxu0 0.0
    %220 = vmatmul.mubr.f32.gmra.mrb[0].mxu0 %v150
    %v221 = vpop.f32.mrb[0].mxu0
    %v222 = vadd.f32 %v147, %v221
    %v223 = vpop.f32.mrb[0].mxu0
    %224 = vmatprep.mubr.f32.mxu0 0.0
    %225 = vmatmul.mubr.f32.gmra.mrb[0].mxu0 %v153
    %v226 = vpop.f32.mrb[0].mxu0
    %v227 = vadd.f32 %v147, %v226
    %v228 = vpop.f32.mrb[0].mxu0
    %229 = vdwg.mxu0
    %v230 = vld [vmem:[%s5] sm:$0xff]
    %v231 = vld [vmem:[%s5 + $0x8] sm:$0xff]
    %v232 = vld [vmem:[%s5 + $0x10] sm:$0xff]
    %v233 = vld [vmem:[%s5 + $0x18] sm:$0xff]
    %v234 = vld [vmem:[%s8] sm:$0x1]
    %v236 = vlaneseq
    %v237 = vshrl.u32 %v236, 7
    %v238 = vsub.s32 0, %v237
    %v239 = vrot.slane %v234, %v238
    %v242 = vsel %vm56, %v43, 0
    %v245 = vsel %vm56, %v44, 0
    %247 = vmatprep.subr.mxu0 0.0
    %248 = vmatpush1.msra.mxu0 %v230
    %249 = vmatprep.subr.mxu0 0.0
    %250 = vmatpush1.msra.mxu0 %v231
    %251 = vmatprep.subr.mxu0 0.0
    %252 = vmatpush1.msra.mxu0 %v232
    %253 = vmatprep.subr.mxu0 0.0
    %254 = vmatpush1.msra.mxu0 %v233
    %255 = vmatprep.subr.mxu0 0.0
    %256 = vmatpush1.msra.mxu0 0.0
    %257 = vmatprep.subr.mxu0 0.0
    %258 = vmatpush1.msra.mxu0 0.0
    %259 = vmatprep.subr.mxu0 0.0
    %260 = vmatpush1.msra.mxu0 0.0
    %261 = vmatprep.subr.mxu0 0.0
    %262 = vmatpush1.msra.mxu0 0.0
    %263 = vmatprep.subr.mxu0 0.0
    %264 = vmatpush1.msra.mxu0 0.0
    %265 = vmatprep.subr.mxu0 0.0
    %266 = vmatpush1.msra.mxu0 0.0
    %267 = vmatprep.subr.mxu0 0.0
    %268 = vmatpush1.msra.mxu0 0.0
    %269 = vmatprep.subr.mxu0 0.0
    %270 = vmatpush1.msra.mxu0 0.0
    %271 = vmatprep.subr.mxu0 0.0
    %272 = vmatpush1.msra.mxu0 0.0
    %273 = vmatprep.subr.mxu0 0.0
    %274 = vmatpush1.msra.mxu0 0.0
    %275 = vmatprep.subr.mxu0 0.0
    %276 = vmatpush1.msra.mxu0 0.0
    %277 = vmatprep.subr.mxu0 0.0
    %278 = vmatpush1.msra.mxu0 0.0
    %279 = vmatprep.subr.mxu0 0.0
    %280 = vmatpush1.msra.mxu0 0.0
    %281 = vmatprep.subr.mxu0 0.0
    %282 = vmatpush1.msra.mxu0 0.0
    %283 = vmatprep.subr.mxu0 0.0
    %284 = vmatpush1.msra.mxu0 0.0
    %285 = vmatprep.subr.mxu0 0.0
    %286 = vmatpush1.msra.mxu0 0.0
    %287 = vmatprep.subr.mxu0 0.0
    %288 = vmatpush1.msra.mxu0 0.0
    %289 = vmatprep.subr.mxu0 0.0
    %290 = vmatpush1.msra.mxu0 0.0
    %291 = vmatprep.subr.mxu0 0.0
    %292 = vmatpush1.msra.mxu0 0.0
    %293 = vmatprep.subr.mxu0 0.0
    %294 = vmatpush1.msra.mxu0 0.0
    %295 = vmatprep.subr.mxu0 0.0
    %296 = vmatpush1.msra.mxu0 0.0
    %297 = vmatprep.subr.mxu0 0.0
    %298 = vmatpush1.msra.mxu0 0.0
    %299 = vmatprep.subr.mxu0 0.0
    %300 = vmatpush1.msra.mxu0 0.0
    %301 = vmatprep.subr.mxu0 0.0
    %302 = vmatpush1.msra.mxu0 0.0
    %303 = vmatprep.subr.mxu0 0.0
    %304 = vmatpush1.msra.mxu0 0.0
    %305 = vmatprep.subr.mxu0 0.0
    %306 = vmatpush1.msra.mxu0 0.0
    %307 = vmatprep.subr.mxu0 0.0
    %308 = vmatpush1.msra.mxu0 0.0
    %309 = vmatprep.subr.mxu0 0.0
    %310 = vmatpush1.msra.mxu0 0.0
    %311 = vmatprep.mubr.f32.mxu0 0.0
    %312 = vmatmul.mubr.f32.gmra.mrb[0].mxu0 %v242
    %v313 = vpop.f32.mrb[0].mxu0
    %v314 = vadd.f32 %v239, %v313
    %v315 = vpop.f32.mrb[0].mxu0
    %316 = vmatprep.mubr.f32.mxu0 0.0
    %317 = vmatmul.mubr.f32.gmra.mrb[0].mxu0 %v245
    %v318 = vpop.f32.mrb[0].mxu0
    %v319 = vadd.f32 %v239, %v318
    %v320 = vpop.f32.mrb[0].mxu0
    %321 = vdwg.mxu0
    %vm322 = vcmask 130048
    %v324 = vsel %vm322, %v130, 0
    %v327 = vsel %vm322, %v222, 0
    %329 = vmatprep.subr.mxu0 0.0
    %330 = vmatpush1.xpose.msra.mxu0 %v327
    %331 = vmatprep.subr.mxu0 0.0
    %332 = vmatpush1.xpose.msra.mxu0 0.0
    %333 = vmatprep.subr.mxu0 0.0
    %334 = vmatpush1.xpose.msra.mxu0 0.0
    %335 = vmatprep.subr.mxu0 0.0
    %336 = vmatpush1.xpose.msra.mxu0 0.0
    %337 = vmatprep.subr.mxu0 0.0
    %338 = vmatpush1.xpose.msra.mxu0 0.0
    %339 = vmatprep.subr.mxu0 0.0
    %340 = vmatpush1.xpose.msra.mxu0 0.0
    %341 = vmatprep.subr.mxu0 0.0
    %342 = vmatpush1.xpose.msra.mxu0 0.0
    %343 = vmatprep.subr.mxu0 0.0
    %344 = vmatpush1.xpose.msra.mxu0 0.0
    %345 = vmatprep.subr.mxu0 0.0
    %346 = vmatpush1.xpose.msra.mxu0 0.0
    %347 = vmatprep.subr.mxu0 0.0
    %348 = vmatpush1.xpose.msra.mxu0 0.0
    %349 = vmatprep.subr.mxu0 0.0
    %350 = vmatpush1.xpose.msra.mxu0 0.0
    %351 = vmatprep.subr.mxu0 0.0
    %352 = vmatpush1.xpose.msra.mxu0 0.0
    %353 = vmatprep.subr.mxu0 0.0
    %354 = vmatpush1.xpose.msra.mxu0 0.0
    %355 = vmatprep.subr.mxu0 0.0
    %356 = vmatpush1.xpose.msra.mxu0 0.0
    %357 = vmatprep.subr.mxu0 0.0
    %358 = vmatpush1.xpose.msra.mxu0 0.0
    %359 = vmatprep.subr.mxu0 0.0
    %360 = vmatpush1.xpose.msra.mxu0 0.0
    %361 = vmatprep.subr.mxu0 0.0
    %362 = vmatpush1.xpose.msra.mxu0 0.0
    %363 = vmatprep.subr.mxu0 0.0
    %364 = vmatpush1.xpose.msra.mxu0 0.0
    %365 = vmatprep.subr.mxu0 0.0
    %366 = vmatpush1.xpose.msra.mxu0 0.0
    %367 = vmatprep.subr.mxu0 0.0
    %368 = vmatpush1.xpose.msra.mxu0 0.0
    %369 = vmatprep.subr.mxu0 0.0
    %370 = vmatpush1.xpose.msra.mxu0 0.0
    %371 = vmatprep.subr.mxu0 0.0
    %372 = vmatpush1.xpose.msra.mxu0 0.0
    %373 = vmatprep.subr.mxu0 0.0
    %374 = vmatpush1.xpose.msra.mxu0 0.0
    %375 = vmatprep.subr.mxu0 0.0
    %376 = vmatpush1.xpose.msra.mxu0 0.0
    %377 = vmatprep.subr.mxu0 0.0
    %378 = vmatpush1.xpose.msra.mxu0 0.0
    %379 = vmatprep.subr.mxu0 0.0
    %380 = vmatpush1.xpose.msra.mxu0 0.0
    %381 = vmatprep.subr.mxu0 0.0
    %382 = vmatpush1.xpose.msra.mxu0 0.0
    %383 = vmatprep.subr.mxu0 0.0
    %384 = vmatpush1.xpose.msra.mxu0 0.0
    %385 = vmatprep.subr.mxu0 0.0
    %386 = vmatpush1.xpose.msra.mxu0 0.0
    %387 = vmatprep.subr.mxu0 0.0
    %388 = vmatpush1.xpose.msra.mxu0 0.0
    %389 = vmatprep.subr.mxu0 0.0
    %390 = vmatpush1.xpose.msra.mxu0 0.0
    %391 = vmatprep.subr.mxu0 0.0
    %392 = vmatpush1.xpose.msra.mxu0 0.0
    %393 = vmatprep.mubr.f32.mxu0 0.0
    %394 = vmatmul.mubr.f32.gmra.mrb[0].mxu0 %v324
    %v395 = vpop.f32.mrb[0].mxu0
    %v396 = vadd.f32 0.0, %v395
    %v397 = vpop.f32.mrb[0].mxu0
    %398 = vdwg.mxu0
    %v400 = vsel %vm322, %v135, 0
    %v403 = vsel %vm322, %v227, 0
    %405 = vmatprep.subr.mxu0 0.0
    %406 = vmatpush1.xpose.msra.mxu0 %v403
    %407 = vmatprep.subr.mxu0 0.0
    %408 = vmatpush1.xpose.msra.mxu0 0.0
    %409 = vmatprep.subr.mxu0 0.0
    %410 = vmatpush1.xpose.msra.mxu0 0.0
    %411 = vmatprep.subr.mxu0 0.0
    %412 = vmatpush1.xpose.msra.mxu0 0.0
    %413 = vmatprep.subr.mxu0 0.0
    %414 = vmatpush1.xpose.msra.mxu0 0.0
    %415 = vmatprep.subr.mxu0 0.0
    %416 = vmatpush1.xpose.msra.mxu0 0.0
    %417 = vmatprep.subr.mxu0 0.0
    %418 = vmatpush1.xpose.msra.mxu0 0.0
    %419 = vmatprep.subr.mxu0 0.0
    %420 = vmatpush1.xpose.msra.mxu0 0.0
    %421 = vmatprep.subr.mxu0 0.0
    %422 = vmatpush1.xpose.msra.mxu0 0.0
    %423 = vmatprep.subr.mxu0 0.0
    %424 = vmatpush1.xpose.msra.mxu0 0.0
    %425 = vmatprep.subr.mxu0 0.0
    %426 = vmatpush1.xpose.msra.mxu0 0.0
    %427 = vmatprep.subr.mxu0 0.0
    %428 = vmatpush1.xpose.msra.mxu0 0.0
    %429 = vmatprep.subr.mxu0 0.0
    %430 = vmatpush1.xpose.msra.mxu0 0.0
    %431 = vmatprep.subr.mxu0 0.0
    %432 = vmatpush1.xpose.msra.mxu0 0.0
    %433 = vmatprep.subr.mxu0 0.0
    %434 = vmatpush1.xpose.msra.mxu0 0.0
    %435 = vmatprep.subr.mxu0 0.0
    %436 = vmatpush1.xpose.msra.mxu0 0.0
    %437 = vmatprep.subr.mxu0 0.0
    %438 = vmatpush1.xpose.msra.mxu0 0.0
    %439 = vmatprep.subr.mxu0 0.0
    %440 = vmatpush1.xpose.msra.mxu0 0.0
    %441 = vmatprep.subr.mxu0 0.0
    %442 = vmatpush1.xpose.msra.mxu0 0.0
    %443 = vmatprep.subr.mxu0 0.0
    %444 = vmatpush1.xpose.msra.mxu0 0.0
    %445 = vmatprep.subr.mxu0 0.0
    %446 = vmatpush1.xpose.msra.mxu0 0.0
    %447 = vmatprep.subr.mxu0 0.0
    %448 = vmatpush1.xpose.msra.mxu0 0.0
    %449 = vmatprep.subr.mxu0 0.0
    %450 = vmatpush1.xpose.msra.mxu0 0.0
    %451 = vmatprep.subr.mxu0 0.0
    %452 = vmatpush1.xpose.msra.mxu0 0.0
    %453 = vmatprep.subr.mxu0 0.0
    %454 = vmatpush1.xpose.msra.mxu0 0.0
    %455 = vmatprep.subr.mxu0 0.0
    %456 = vmatpush1.xpose.msra.mxu0 0.0
    %457 = vmatprep.subr.mxu0 0.0
    %458 = vmatpush1.xpose.msra.mxu0 0.0
    %459 = vmatprep.subr.mxu0 0.0
    %460 = vmatpush1.xpose.msra.mxu0 0.0
    %461 = vmatprep.subr.mxu0 0.0
    %462 = vmatpush1.xpose.msra.mxu0 0.0
    %463 = vmatprep.subr.mxu0 0.0
    %464 = vmatpush1.xpose.msra.mxu0 0.0
    %465 = vmatprep.subr.mxu0 0.0
    %466 = vmatpush1.xpose.msra.mxu0 0.0
    %467 = vmatprep.subr.mxu0 0.0
    %468 = vmatpush1.xpose.msra.mxu0 0.0
    %469 = vmatprep.mubr.f32.mxu0 0.0
    %470 = vmatmul.mubr.f32.gmra.mrb[0].mxu0 %v400
    %v471 = vpop.f32.mrb[0].mxu0
    %v472 = vadd.f32 0.0, %v471
    %v473 = vpop.f32.mrb[0].mxu0
    %474 = vdwg.mxu0
    %v475 = vmul.f32 %v396, 0.25
    %v476 = vmul.f32 %v472, 0.25
    %vm477 = vcmask 64512
    %v478 = vsel %vm477, %v475, -inf
    %479 = vmax.xlane.f32.xlu0 %v478
    %v480 = vpop.xlane.xlu0 %479
    %v481 = vsel %vm477, %v476, -inf
    %482 = vmax.xlane.f32.xlu0 %v481
    %v483 = vpop.xlane.xlu0 %482
    %v484 = vsub.f32 %v475, %v480
    %v485 = vsub.f32 %v476, %v483
    %v486 = vmul.f32 %v484, 1.442695
    %v487 = vpow.pop %v486
    %v488 = vmul.f32 %v485, 1.442695
    %v489 = vpow.pop %v488
    %v490 = vsel %vm477, %v487, 0.0
    %491 = vadd.xlane.f32.xlu0 %v490
    %v492 = vpop.xlane.xlu0 %491
    %v493 = vsel %vm477, %v489, 0.0
    %494 = vadd.xlane.f32.xlu0 %v493
    %v495 = vpop.xlane.xlu0 %494
    %v497 = vsel %vm477, %v487, 0
    %499 = vmatprep.subr.mxu0 0.0
    %500 = vmatpush1.msra.mxu0 %v314
    %501 = vmatprep.subr.mxu0 0.0
    %502 = vmatpush1.msra.mxu0 0.0
    %503 = vmatprep.subr.mxu0 0.0
    %504 = vmatpush1.msra.mxu0 0.0
    %505 = vmatprep.subr.mxu0 0.0
    %506 = vmatpush1.msra.mxu0 0.0
    %507 = vmatprep.subr.mxu0 0.0
    %508 = vmatpush1.msra.mxu0 0.0
    %509 = vmatprep.subr.mxu0 0.0
    %510 = vmatpush1.msra.mxu0 0.0
    %511 = vmatprep.subr.mxu0 0.0
    %512 = vmatpush1.msra.mxu0 0.0
    %513 = vmatprep.subr.mxu0 0.0
    %514 = vmatpush1.msra.mxu0 0.0
    %515 = vmatprep.subr.mxu0 0.0
    %516 = vmatpush1.msra.mxu0 0.0
    %517 = vmatprep.subr.mxu0 0.0
    %518 = vmatpush1.msra.mxu0 0.0
    %519 = vmatprep.subr.mxu0 0.0
    %520 = vmatpush1.msra.mxu0 0.0
    %521 = vmatprep.subr.mxu0 0.0
    %522 = vmatpush1.msra.mxu0 0.0
    %523 = vmatprep.subr.mxu0 0.0
    %524 = vmatpush1.msra.mxu0 0.0
    %525 = vmatprep.subr.mxu0 0.0
    %526 = vmatpush1.msra.mxu0 0.0
    %527 = vmatprep.subr.mxu0 0.0
    %528 = vmatpush1.msra.mxu0 0.0
    %529 = vmatprep.subr.mxu0 0.0
    %530 = vmatpush1.msra.mxu0 0.0
    %531 = vmatprep.subr.mxu0 0.0
    %532 = vmatpush1.msra.mxu0 0.0
    %533 = vmatprep.subr.mxu0 0.0
    %534 = vmatpush1.msra.mxu0 0.0
    %535 = vmatprep.subr.mxu0 0.0
    %536 = vmatpush1.msra.mxu0 0.0
    %537 = vmatprep.subr.mxu0 0.0
    %538 = vmatpush1.msra.mxu0 0.0
    %539 = vmatprep.subr.mxu0 0.0
    %540 = vmatpush1.msra.mxu0 0.0
    %541 = vmatprep.subr.mxu0 0.0
    %542 = vmatpush1.msra.mxu0 0.0
    %543 = vmatprep.subr.mxu0 0.0
    %544 = vmatpush1.msra.mxu0 0.0
    %545 = vmatprep.subr.mxu0 0.0
    %546 = vmatpush1.msra.mxu0 0.0
    %547 = vmatprep.subr.mxu0 0.0
    %548 = vmatpush1.msra.mxu0 0.0
    %549 = vmatprep.subr.mxu0 0.0
    %550 = vmatpush1.msra.mxu0 0.0
    %551 = vmatprep.subr.mxu0 0.0
    %552 = vmatpush1.msra.mxu0 0.0
    %553 = vmatprep.subr.mxu0 0.0
    %554 = vmatpush1.msra.mxu0 0.0
    %555 = vmatprep.subr.mxu0 0.0
    %556 = vmatpush1.msra.mxu0 0.0
    %557 = vmatprep.subr.mxu0 0.0
    %558 = vmatpush1.msra.mxu0 0.0
    %559 = vmatprep.subr.mxu0 0.0
    %560 = vmatpush1.msra.mxu0 0.0
    %561 = vmatprep.subr.mxu0 0.0
    %562 = vmatpush1.msra.mxu0 0.0
    %563 = vmatprep.mubr.f32.mxu0 0.0
    %564 = vmatmul.mubr.f32.gmra.mrb[0].mxu0 %v497
    %v565 = vpop.f32.mrb[0].mxu0
    %v566 = vadd.f32 0.0, %v565
    %v567 = vpop.f32.mrb[0].mxu0
    %568 = vdwg.mxu0
    %v570 = vsel %vm477, %v489, 0
    %572 = vmatprep.subr.mxu0 0.0
    %573 = vmatpush1.msra.mxu0 %v319
    %574 = vmatprep.subr.mxu0 0.0
    %575 = vmatpush1.msra.mxu0 0.0
    %576 = vmatprep.subr.mxu0 0.0
    %577 = vmatpush1.msra.mxu0 0.0
    %578 = vmatprep.subr.mxu0 0.0
    %579 = vmatpush1.msra.mxu0 0.0
    %580 = vmatprep.subr.mxu0 0.0
    %581 = vmatpush1.msra.mxu0 0.0
    %582 = vmatprep.subr.mxu0 0.0
    %583 = vmatpush1.msra.mxu0 0.0
    %584 = vmatprep.subr.mxu0 0.0
    %585 = vmatpush1.msra.mxu0 0.0
    %586 = vmatprep.subr.mxu0 0.0
    %587 = vmatpush1.msra.mxu0 0.0
    %588 = vmatprep.subr.mxu0 0.0
    %589 = vmatpush1.msra.mxu0 0.0
    %590 = vmatprep.subr.mxu0 0.0
    %591 = vmatpush1.msra.mxu0 0.0
    %592 = vmatprep.subr.mxu0 0.0
    %593 = vmatpush1.msra.mxu0 0.0
    %594 = vmatprep.subr.mxu0 0.0
    %595 = vmatpush1.msra.mxu0 0.0
    %596 = vmatprep.subr.mxu0 0.0
    %597 = vmatpush1.msra.mxu0 0.0
    %598 = vmatprep.subr.mxu0 0.0
    %599 = vmatpush1.msra.mxu0 0.0
    %600 = vmatprep.subr.mxu0 0.0
    %601 = vmatpush1.msra.mxu0 0.0
    %602 = vmatprep.subr.mxu0 0.0
    %603 = vmatpush1.msra.mxu0 0.0
    %604 = vmatprep.subr.mxu0 0.0
    %605 = vmatpush1.msra.mxu0 0.0
    %606 = vmatprep.subr.mxu0 0.0
    %607 = vmatpush1.msra.mxu0 0.0
    %608 = vmatprep.subr.mxu0 0.0
    %609 = vmatpush1.msra.mxu0 0.0
    %610 = vmatprep.subr.mxu0 0.0
    %611 = vmatpush1.msra.mxu0 0.0
    %612 = vmatprep.subr.mxu0 0.0
    %613 = vmatpush1.msra.mxu0 0.0
    %614 = vmatprep.subr.mxu0 0.0
    %615 = vmatpush1.msra.mxu0 0.0
    %616 = vmatprep.subr.mxu0 0.0
    %617 = vmatpush1.msra.mxu0 0.0
    %618 = vmatprep.subr.mxu0 0.0
    %619 = vmatpush1.msra.mxu0 0.0
    %620 = vmatprep.subr.mxu0 0.0
    %621 = vmatpush1.msra.mxu0 0.0
    %622 = vmatprep.subr.mxu0 0.0
    %623 = vmatpush1.msra.mxu0 0.0
    %624 = vmatprep.subr.mxu0 0.0
    %625 = vmatpush1.msra.mxu0 0.0
    %626 = vmatprep.subr.mxu0 0.0
    %627 = vmatpush1.msra.mxu0 0.0
    %628 = vmatprep.subr.mxu0 0.0
    %629 = vmatpush1.msra.mxu0 0.0
    %630 = vmatprep.subr.mxu0 0.0
    %631 = vmatpush1.msra.mxu0 0.0
    %632 = vmatprep.subr.mxu0 0.0
    %633 = vmatpush1.msra.mxu0 0.0
    %634 = vmatprep.subr.mxu0 0.0
    %635 = vmatpush1.msra.mxu0 0.0
    %636 = vmatprep.mubr.f32.mxu0 0.0
    %637 = vmatmul.mubr.f32.gmra.mrb[0].mxu0 %v570
    %v638 = vpop.f32.mrb[0].mxu0
    %v639 = vadd.f32 0.0, %v638
    %v640 = vpop.f32.mrb[0].mxu0
    %641 = vdwg.mxu0
    %v642 = vrcp.pop %v492
    %v643 = vrcp.pop %v495
    %v644 = vmul.f32 %v566, %v642
    %v645 = vmul.f32 %v639, %v643
    %v646 = vld [vmem:[%s9] sm:$0xff]
    %v647 = vld [vmem:[%s9 + $0x8] sm:$0xff]
    %s648 = scalar_lea.vmem %s3, 32
    %v649 = vld [vmem:[%s648] sm:$0xff]
    %v650 = vld [vmem:[%s648 + $0x8] sm:$0xff]
    %v651 = vld [vmem:[%s648 + $0x10] sm:$0xff]
    %v652 = vld [vmem:[%s648 + $0x18] sm:$0xff]
    %s653 = scalar_lea.vmem %s6, 1
    %v654 = vld [vmem:[%s653] sm:$0x1]
    %v656 = vlaneseq
    %v657 = vshrl.u32 %v656, 7
    %v658 = vsub.s32 0, %v657
    %v659 = vrot.slane %v654, %v658
    %661 = vmatprep.subr.mxu0 0.0
    %662 = vmatpush1.msra.mxu0 %v649
    %663 = vmatprep.subr.mxu0 0.0
    %664 = vmatpush1.msra.mxu0 %v650
    %665 = vmatprep.subr.mxu0 0.0
    %666 = vmatpush1.msra.mxu0 %v651
    %667 = vmatprep.subr.mxu0 0.0
    %668 = vmatpush1.msra.mxu0 %v652
    %669 = vmatprep.subr.mxu0 0.0
    %670 = vmatpush1.msra.mxu0 0.0
    %671 = vmatprep.subr.mxu0 0.0
    %672 = vmatpush1.msra.mxu0 0.0
    %673 = vmatprep.subr.mxu0 0.0
    %674 = vmatpush1.msra.mxu0 0.0
    %675 = vmatprep.subr.mxu0 0.0
    %676 = vmatpush1.msra.mxu0 0.0
    %677 = vmatprep.subr.mxu0 0.0
    %678 = vmatpush1.msra.mxu0 0.0
    %679 = vmatprep.subr.mxu0 0.0
    %680 = vmatpush1.msra.mxu0 0.0
    %681 = vmatprep.subr.mxu0 0.0
    %682 = vmatpush1.msra.mxu0 0.0
    %683 = vmatprep.subr.mxu0 0.0
    %684 = vmatpush1.msra.mxu0 0.0
    %685 = vmatprep.subr.mxu0 0.0
    %686 = vmatpush1.msra.mxu0 0.0
    %687 = vmatprep.subr.mxu0 0.0
    %688 = vmatpush1.msra.mxu0 0.0
    %689 = vmatprep.subr.mxu0 0.0
    %690 = vmatpush1.msra.mxu0 0.0
    %691 = vmatprep.subr.mxu0 0.0
    %692 = vmatpush1.msra.mxu0 0.0
    %693 = vmatprep.subr.mxu0 0.0
    %694 = vmatpush1.msra.mxu0 0.0
    %695 = vmatprep.subr.mxu0 0.0
    %696 = vmatpush1.msra.mxu0 0.0
    %697 = vmatprep.subr.mxu0 0.0
    %698 = vmatpush1.msra.mxu0 0.0
    %699 = vmatprep.subr.mxu0 0.0
    %700 = vmatpush1.msra.mxu0 0.0
    %701 = vmatprep.subr.mxu0 0.0
    %702 = vmatpush1.msra.mxu0 0.0
    %703 = vmatprep.subr.mxu0 0.0
    %704 = vmatpush1.msra.mxu0 0.0
    %705 = vmatprep.subr.mxu0 0.0
    %706 = vmatpush1.msra.mxu0 0.0
    %707 = vmatprep.subr.mxu0 0.0
    %708 = vmatpush1.msra.mxu0 0.0
    %709 = vmatprep.subr.mxu0 0.0
    %710 = vmatpush1.msra.mxu0 0.0
    %711 = vmatprep.subr.mxu0 0.0
    %712 = vmatpush1.msra.mxu0 0.0
    %713 = vmatprep.subr.mxu0 0.0
    %714 = vmatpush1.msra.mxu0 0.0
    %715 = vmatprep.subr.mxu0 0.0
    %716 = vmatpush1.msra.mxu0 0.0
    %717 = vmatprep.subr.mxu0 0.0
    %718 = vmatpush1.msra.mxu0 0.0
    %719 = vmatprep.subr.mxu0 0.0
    %720 = vmatpush1.msra.mxu0 0.0
    %721 = vmatprep.subr.mxu0 0.0
    %722 = vmatpush1.msra.mxu0 0.0
    %723 = vmatprep.subr.mxu0 0.0
    %724 = vmatpush1.msra.mxu0 0.0
    %725 = vmatprep.mubr.f32.mxu0 0.0
    %726 = vmatmul.mubr.f32.gmra.mrb[0].mxu0 %v58
    %v727 = vpop.f32.mrb[0].mxu0
    %v728 = vadd.f32 %v659, %v727
    %v729 = vpop.f32.mrb[0].mxu0
    %730 = vmatprep.mubr.f32.mxu0 0.0
    %731 = vmatmul.mubr.f32.gmra.mrb[0].mxu0 %v61
    %v732 = vpop.f32.mrb[0].mxu0
    %v733 = vadd.f32 %v659, %v732
    %v734 = vpop.f32.mrb[0].mxu0
    %735 = vdwg.mxu0
    %s736 = scalar_lea.vmem %s4, 32
    %v737 = vld [vmem:[%s736] sm:$0xff]
    %v738 = vld [vmem:[%s736 + $0x8] sm:$0xff]
    %v739 = vld [vmem:[%s736 + $0x10] sm:$0xff]
    %v740 = vld [vmem:[%s736 + $0x18] sm:$0xff]
    %s741 = scalar_lea.vmem %s7, 1
    %v742 = vld [vmem:[%s741] sm:$0x1]
    %v744 = vlaneseq
    %v745 = vshrl.u32 %v744, 7
    %v746 = vsub.s32 0, %v745
    %v747 = vrot.slane %v742, %v746
    %749 = vmatprep.subr.mxu0 0.0
    %750 = vmatpush1.msra.mxu0 %v737
    %751 = vmatprep.subr.mxu0 0.0
    %752 = vmatpush1.msra.mxu0 %v738
    %753 = vmatprep.subr.mxu0 0.0
    %754 = vmatpush1.msra.mxu0 %v739
    %755 = vmatprep.subr.mxu0 0.0
    %756 = vmatpush1.msra.mxu0 %v740
    %757 = vmatprep.subr.mxu0 0.0
    %758 = vmatpush1.msra.mxu0 0.0
    %759 = vmatprep.subr.mxu0 0.0
    %760 = vmatpush1.msra.mxu0 0.0
    %761 = vmatprep.subr.mxu0 0.0
    %762 = vmatpush1.msra.mxu0 0.0
    %763 = vmatprep.subr.mxu0 0.0
    %764 = vmatpush1.msra.mxu0 0.0
    %765 = vmatprep.subr.mxu0 0.0
    %766 = vmatpush1.msra.mxu0 0.0
    %767 = vmatprep.subr.mxu0 0.0
    %768 = vmatpush1.msra.mxu0 0.0
    %769 = vmatprep.subr.mxu0 0.0
    %770 = vmatpush1.msra.mxu0 0.0
    %771 = vmatprep.subr.mxu0 0.0
    %772 = vmatpush1.msra.mxu0 0.0
    %773 = vmatprep.subr.mxu0 0.0
    %774 = vmatpush1.msra.mxu0 0.0
    %775 = vmatprep.subr.mxu0 0.0
    %776 = vmatpush1.msra.mxu0 0.0
    %777 = vmatprep.subr.mxu0 0.0
    %778 = vmatpush1.msra.mxu0 0.0
    %779 = vmatprep.subr.mxu0 0.0
    %780 = vmatpush1.msra.mxu0 0.0
    %781 = vmatprep.subr.mxu0 0.0
    %782 = vmatpush1.msra.mxu0 0.0
    %783 = vmatprep.subr.mxu0 0.0
    %784 = vmatpush1.msra.mxu0 0.0
    %785 = vmatprep.subr.mxu0 0.0
    %786 = vmatpush1.msra.mxu0 0.0
    %787 = vmatprep.subr.mxu0 0.0
    %788 = vmatpush1.msra.mxu0 0.0
    %789 = vmatprep.subr.mxu0 0.0
    %790 = vmatpush1.msra.mxu0 0.0
    %791 = vmatprep.subr.mxu0 0.0
    %792 = vmatpush1.msra.mxu0 0.0
    %793 = vmatprep.subr.mxu0 0.0
    %794 = vmatpush1.msra.mxu0 0.0
    %795 = vmatprep.subr.mxu0 0.0
    %796 = vmatpush1.msra.mxu0 0.0
    %797 = vmatprep.subr.mxu0 0.0
    %798 = vmatpush1.msra.mxu0 0.0
    %799 = vmatprep.subr.mxu0 0.0
    %800 = vmatpush1.msra.mxu0 0.0
    %801 = vmatprep.subr.mxu0 0.0
    %802 = vmatpush1.msra.mxu0 0.0
    %803 = vmatprep.subr.mxu0 0.0
    %804 = vmatpush1.msra.mxu0 0.0
    %805 = vmatprep.subr.mxu0 0.0
    %806 = vmatpush1.msra.mxu0 0.0
    %807 = vmatprep.subr.mxu0 0.0
    %808 = vmatpush1.msra.mxu0 0.0
    %809 = vmatprep.subr.mxu0 0.0
    %810 = vmatpush1.msra.mxu0 0.0
    %811 = vmatprep.subr.mxu0 0.0
    %812 = vmatpush1.msra.mxu0 0.0
    %813 = vmatprep.mubr.f32.mxu0 0.0
    %814 = vmatmul.mubr.f32.gmra.mrb[0].mxu0 %v150
    %v815 = vpop.f32.mrb[0].mxu0
    %v816 = vadd.f32 %v747, %v815
    %v817 = vpop.f32.mrb[0].mxu0
    %818 = vmatprep.mubr.f32.mxu0 0.0
    %819 = vmatmul.mubr.f32.gmra.mrb[0].mxu0 %v153
    %v820 = vpop.f32.mrb[0].mxu0
    %v821 = vadd.f32 %v747, %v820
    %v822 = vpop.f32.mrb[0].mxu0
    %823 = vdwg.mxu0
    %s824 = scalar_lea.vmem %s5, 32
    %v825 = vld [vmem:[%s824] sm:$0xff]
    %v826 = vld [vmem:[%s824 + $0x8] sm:$0xff]
    %v827 = vld [vmem:[%s824 + $0x10] sm:$0xff]
    %v828 = vld [vmem:[%s824 + $0x18] sm:$0xff]
    %s829 = scalar_lea.vmem %s8, 1
    %v830 = vld [vmem:[%s829] sm:$0x1]
    %v832 = vlaneseq
    %v833 = vshrl.u32 %v832, 7
    %v834 = vsub.s32 0, %v833
    %v835 = vrot.slane %v830, %v834
    %837 = vmatprep.subr.mxu0 0.0
    %838 = vmatpush1.msra.mxu0 %v825
    %839 = vmatprep.subr.mxu0 0.0
    %840 = vmatpush1.msra.mxu0 %v826
    %841 = vmatprep.subr.mxu0 0.0
    %842 = vmatpush1.msra.mxu0 %v827
    %843 = vmatprep.subr.mxu0 0.0
    %844 = vmatpush1.msra.mxu0 %v828
    %845 = vmatprep.subr.mxu0 0.0
    %846 = vmatpush1.msra.mxu0 0.0
    %847 = vmatprep.subr.mxu0 0.0
    %848 = vmatpush1.msra.mxu0 0.0
    %849 = vmatprep.subr.mxu0 0.0
    %850 = vmatpush1.msra.mxu0 0.0
    %851 = vmatprep.subr.mxu0 0.0
    %852 = vmatpush1.msra.mxu0 0.0
    %853 = vmatprep.subr.mxu0 0.0
    %854 = vmatpush1.msra.mxu0 0.0
    %855 = vmatprep.subr.mxu0 0.0
    %856 = vmatpush1.msra.mxu0 0.0
    %857 = vmatprep.subr.mxu0 0.0
    %858 = vmatpush1.msra.mxu0 0.0
    %859 = vmatprep.subr.mxu0 0.0
    %860 = vmatpush1.msra.mxu0 0.0
    %861 = vmatprep.subr.mxu0 0.0
    %862 = vmatpush1.msra.mxu0 0.0
    %863 = vmatprep.subr.mxu0 0.0
    %864 = vmatpush1.msra.mxu0 0.0
    %865 = vmatprep.subr.mxu0 0.0
    %866 = vmatpush1.msra.mxu0 0.0
    %867 = vmatprep.subr.mxu0 0.0
    %868 = vmatpush1.msra.mxu0 0.0
    %869 = vmatprep.subr.mxu0 0.0
    %870 = vmatpush1.msra.mxu0 0.0
    %871 = vmatprep.subr.mxu0 0.0
    %872 = vmatpush1.msra.mxu0 0.0
    %873 = vmatprep.subr.mxu0 0.0
    %874 = vmatpush1.msra.mxu0 0.0
    %875 = vmatprep.subr.mxu0 0.0
    %876 = vmatpush1.msra.mxu0 0.0
    %877 = vmatprep.subr.mxu0 0.0
    %878 = vmatpush1.msra.mxu0 0.0
    %879 = vmatprep.subr.mxu0 0.0
    %880 = vmatpush1.msra.mxu0 0.0
    %881 = vmatprep.subr.mxu0 0.0
    %882 = vmatpush1.msra.mxu0 0.0
    %883 = vmatprep.subr.mxu0 0.0
    %884 = vmatpush1.msra.mxu0 0.0
    %885 = vmatprep.subr.mxu0 0.0
    %886 = vmatpush1.msra.mxu0 0.0
    %887 = vmatprep.subr.mxu0 0.0
    %888 = vmatpush1.msra.mxu0 0.0
    %889 = vmatprep.subr.mxu0 0.0
    %890 = vmatpush1.msra.mxu0 0.0
    %891 = vmatprep.subr.mxu0 0.0
    %892 = vmatpush1.msra.mxu0 0.0
    %893 = vmatprep.subr.mxu0 0.0
    %894 = vmatpush1.msra.mxu0 0.0
    %895 = vmatprep.subr.mxu0 0.0
    %896 = vmatpush1.msra.mxu0 0.0
    %897 = vmatprep.subr.mxu0 0.0
    %898 = vmatpush1.msra.mxu0 0.0
    %899 = vmatprep.subr.mxu0 0.0
    %900 = vmatpush1.msra.mxu0 0.0
    %901 = vmatprep.mubr.f32.mxu0 0.0
    %902 = vmatmul.mubr.f32.gmra.mrb[0].mxu0 %v242
    %v903 = vpop.f32.mrb[0].mxu0
    %v904 = vadd.f32 %v835, %v903
    %v905 = vpop.f32.mrb[0].mxu0
    %906 = vmatprep.mubr.f32.mxu0 0.0
    %907 = vmatmul.mubr.f32.gmra.mrb[0].mxu0 %v245
    %v908 = vpop.f32.mrb[0].mxu0
    %v909 = vadd.f32 %v835, %v908
    %v910 = vpop.f32.mrb[0].mxu0
    %911 = vdwg.mxu0
    %v913 = vsel %vm322, %v728, 0
    %v916 = vsel %vm322, %v816, 0
    %918 = vmatprep.subr.mxu0 0.0
    %919 = vmatpush1.xpose.msra.mxu0 %v916
    %920 = vmatprep.subr.mxu0 0.0
    %921 = vmatpush1.xpose.msra.mxu0 0.0
    %922 = vmatprep.subr.mxu0 0.0
    %923 = vmatpush1.xpose.msra.mxu0 0.0
    %924 = vmatprep.subr.mxu0 0.0
    %925 = vmatpush1.xpose.msra.mxu0 0.0
    %926 = vmatprep.subr.mxu0 0.0
    %927 = vmatpush1.xpose.msra.mxu0 0.0
    %928 = vmatprep.subr.mxu0 0.0
    %929 = vmatpush1.xpose.msra.mxu0 0.0
    %930 = vmatprep.subr.mxu0 0.0
    %931 = vmatpush1.xpose.msra.mxu0 0.0
    %932 = vmatprep.subr.mxu0 0.0
    %933 = vmatpush1.xpose.msra.mxu0 0.0
    %934 = vmatprep.subr.mxu0 0.0
    %935 = vmatpush1.xpose.msra.mxu0 0.0
    %936 = vmatprep.subr.mxu0 0.0
    %937 = vmatpush1.xpose.msra.mxu0 0.0
    %938 = vmatprep.subr.mxu0 0.0
    %939 = vmatpush1.xpose.msra.mxu0 0.0
    %940 = vmatprep.subr.mxu0 0.0
    %941 = vmatpush1.xpose.msra.mxu0 0.0
    %942 = vmatprep.subr.mxu0 0.0
    %943 = vmatpush1.xpose.msra.mxu0 0.0
    %944 = vmatprep.subr.mxu0 0.0
    %945 = vmatpush1.xpose.msra.mxu0 0.0
    %946 = vmatprep.subr.mxu0 0.0
    %947 = vmatpush1.xpose.msra.mxu0 0.0
    %948 = vmatprep.subr.mxu0 0.0
    %949 = vmatpush1.xpose.msra.mxu0 0.0
    %950 = vmatprep.subr.mxu0 0.0
    %951 = vmatpush1.xpose.msra.mxu0 0.0
    %952 = vmatprep.subr.mxu0 0.0
    %953 = vmatpush1.xpose.msra.mxu0 0.0
    %954 = vmatprep.subr.mxu0 0.0
    %955 = vmatpush1.xpose.msra.mxu0 0.0
    %956 = vmatprep.subr.mxu0 0.0
    %957 = vmatpush1.xpose.msra.mxu0 0.0
    %958 = vmatprep.subr.mxu0 0.0
    %959 = vmatpush1.xpose.msra.mxu0 0.0
    %960 = vmatprep.subr.mxu0 0.0
    %961 = vmatpush1.xpose.msra.mxu0 0.0
    %962 = vmatprep.subr.mxu0 0.0
    %963 = vmatpush1.xpose.msra.mxu0 0.0
    %964 = vmatprep.subr.mxu0 0.0
    %965 = vmatpush1.xpose.msra.mxu0 0.0
    %966 = vmatprep.subr.mxu0 0.0
    %967 = vmatpush1.xpose.msra.mxu0 0.0
    %968 = vmatprep.subr.mxu0 0.0
    %969 = vmatpush1.xpose.msra.mxu0 0.0
    %970 = vmatprep.subr.mxu0 0.0
    %971 = vmatpush1.xpose.msra.mxu0 0.0
    %972 = vmatprep.subr.mxu0 0.0
    %973 = vmatpush1.xpose.msra.mxu0 0.0
    %974 = vmatprep.subr.mxu0 0.0
    %975 = vmatpush1.xpose.msra.mxu0 0.0
    %976 = vmatprep.subr.mxu0 0.0
    %977 = vmatpush1.xpose.msra.mxu0 0.0
    %978 = vmatprep.subr.mxu0 0.0
    %979 = vmatpush1.xpose.msra.mxu0 0.0
    %980 = vmatprep.subr.mxu0 0.0
    %981 = vmatpush1.xpose.msra.mxu0 0.0
    %982 = vmatprep.mubr.f32.mxu0 0.0
    %983 = vmatmul.mubr.f32.gmra.mrb[0].mxu0 %v913
    %v984 = vpop.f32.mrb[0].mxu0
    %v985 = vadd.f32 0.0, %v984
    %v986 = vpop.f32.mrb[0].mxu0
    %987 = vdwg.mxu0
    %v989 = vsel %vm322, %v733, 0
    %v992 = vsel %vm322, %v821, 0
    %994 = vmatprep.subr.mxu0 0.0
    %995 = vmatpush1.xpose.msra.mxu0 %v992
    %996 = vmatprep.subr.mxu0 0.0
    %997 = vmatpush1.xpose.msra.mxu0 0.0
    %998 = vmatprep.subr.mxu0 0.0
    %999 = vmatpush1.xpose.msra.mxu0 0.0
    %1000 = vmatprep.subr.mxu0 0.0
    %1001 = vmatpush1.xpose.msra.mxu0 0.0
    %1002 = vmatprep.subr.mxu0 0.0
    %1003 = vmatpush1.xpose.msra.mxu0 0.0
    %1004 = vmatprep.subr.mxu0 0.0
    %1005 = vmatpush1.xpose.msra.mxu0 0.0
    %1006 = vmatprep.subr.mxu0 0.0
    %1007 = vmatpush1.xpose.msra.mxu0 0.0
    %1008 = vmatprep.subr.mxu0 0.0
    %1009 = vmatpush1.xpose.msra.mxu0 0.0
    %1010 = vmatprep.subr.mxu0 0.0
    %1011 = vmatpush1.xpose.msra.mxu0 0.0
    %1012 = vmatprep.subr.mxu0 0.0
    %1013 = vmatpush1.xpose.msra.mxu0 0.0
    %1014 = vmatprep.subr.mxu0 0.0
    %1015 = vmatpush1.xpose.msra.mxu0 0.0
    %1016 = vmatprep.subr.mxu0 0.0
    %1017 = vmatpush1.xpose.msra.mxu0 0.0
    %1018 = vmatprep.subr.mxu0 0.0
    %1019 = vmatpush1.xpose.msra.mxu0 0.0
    %1020 = vmatprep.subr.mxu0 0.0
    %1021 = vmatpush1.xpose.msra.mxu0 0.0
    %1022 = vmatprep.subr.mxu0 0.0
    %1023 = vmatpush1.xpose.msra.mxu0 0.0
    %1024 = vmatprep.subr.mxu0 0.0
    %1025 = vmatpush1.xpose.msra.mxu0 0.0
    %1026 = vmatprep.subr.mxu0 0.0
    %1027 = vmatpush1.xpose.msra.mxu0 0.0
    %1028 = vmatprep.subr.mxu0 0.0
    %1029 = vmatpush1.xpose.msra.mxu0 0.0
    %1030 = vmatprep.subr.mxu0 0.0
    %1031 = vmatpush1.xpose.msra.mxu0 0.0
    %1032 = vmatprep.subr.mxu0 0.0
    %1033 = vmatpush1.xpose.msra.mxu0 0.0
    %1034 = vmatprep.subr.mxu0 0.0
    %1035 = vmatpush1.xpose.msra.mxu0 0.0
    %1036 = vmatprep.subr.mxu0 0.0
    %1037 = vmatpush1.xpose.msra.mxu0 0.0
    %1038 = vmatprep.subr.mxu0 0.0
    %1039 = vmatpush1.xpose.msra.mxu0 0.0
    %1040 = vmatprep.subr.mxu0 0.0
    %1041 = vmatpush1.xpose.msra.mxu0 0.0
    %1042 = vmatprep.subr.mxu0 0.0
    %1043 = vmatpush1.xpose.msra.mxu0 0.0
    %1044 = vmatprep.subr.mxu0 0.0
    %1045 = vmatpush1.xpose.msra.mxu0 0.0
    %1046 = vmatprep.subr.mxu0 0.0
    %1047 = vmatpush1.xpose.msra.mxu0 0.0
    %1048 = vmatprep.subr.mxu0 0.0
    %1049 = vmatpush1.xpose.msra.mxu0 0.0
    %1050 = vmatprep.subr.mxu0 0.0
    %1051 = vmatpush1.xpose.msra.mxu0 0.0
    %1052 = vmatprep.subr.mxu0 0.0
    %1053 = vmatpush1.xpose.msra.mxu0 0.0
    %1054 = vmatprep.subr.mxu0 0.0
    %1055 = vmatpush1.xpose.msra.mxu0 0.0
    %1056 = vmatprep.subr.mxu0 0.0
    %1057 = vmatpush1.xpose.msra.mxu0 0.0
    %1058 = vmatprep.mubr.f32.mxu0 0.0
    %1059 = vmatmul.mubr.f32.gmra.mrb[0].mxu0 %v989
    %v1060 = vpop.f32.mrb[0].mxu0
    %v1061 = vadd.f32 0.0, %v1060
    %v1062 = vpop.f32.mrb[0].mxu0
    %1063 = vdwg.mxu0
    %v1064 = vmul.f32 %v985, 0.25
    %v1065 = vmul.f32 %v1061, 0.25
    %v1066 = vsel %vm477, %v1064, -inf
    %1067 = vmax.xlane.f32.xlu0 %v1066
    %v1068 = vpop.xlane.xlu0 %1067
    %v1069 = vsel %vm477, %v1065, -inf
    %1070 = vmax.xlane.f32.xlu0 %v1069
    %v1071 = vpop.xlane.xlu0 %1070
    %v1072 = vsub.f32 %v1064, %v1068
    %v1073 = vsub.f32 %v1065, %v1071
    %v1074 = vmul.f32 %v1072, 1.442695
    %v1075 = vpow.pop %v1074
    %v1076 = vmul.f32 %v1073, 1.442695
    %v1077 = vpow.pop %v1076
    %v1078 = vsel %vm477, %v1075, 0.0
    %1079 = vadd.xlane.f32.xlu0 %v1078
    %v1080 = vpop.xlane.xlu0 %1079
    %v1081 = vsel %vm477, %v1077, 0.0
    %1082 = vadd.xlane.f32.xlu0 %v1081
    %v1083 = vpop.xlane.xlu0 %1082
    %v1085 = vsel %vm477, %v1075, 0
    %1087 = vmatprep.subr.mxu0 0.0
    %1088 = vmatpush1.msra.mxu0 %v904
    %1089 = vmatprep.subr.mxu0 0.0
    %1090 = vmatpush1.msra.mxu0 0.0
    %1091 = vmatprep.subr.mxu0 0.0
    %1092 = vmatpush1.msra.mxu0 0.0
    %1093 = vmatprep.subr.mxu0 0.0
    %1094 = vmatpush1.msra.mxu0 0.0
    %1095 = vmatprep.subr.mxu0 0.0
    %1096 = vmatpush1.msra.mxu0 0.0
    %1097 = vmatprep.subr.mxu0 0.0
    %1098 = vmatpush1.msra.mxu0 0.0
    %1099 = vmatprep.subr.mxu0 0.0
    %1100 = vmatpush1.msra.mxu0 0.0
    %1101 = vmatprep.subr.mxu0 0.0
    %1102 = vmatpush1.msra.mxu0 0.0
    %1103 = vmatprep.subr.mxu0 0.0
    %1104 = vmatpush1.msra.mxu0 0.0
    %1105 = vmatprep.subr.mxu0 0.0
    %1106 = vmatpush1.msra.mxu0 0.0
    %1107 = vmatprep.subr.mxu0 0.0
    %1108 = vmatpush1.msra.mxu0 0.0
    %1109 = vmatprep.subr.mxu0 0.0
    %1110 = vmatpush1.msra.mxu0 0.0
    %1111 = vmatprep.subr.mxu0 0.0
    %1112 = vmatpush1.msra.mxu0 0.0
    %1113 = vmatprep.subr.mxu0 0.0
    %1114 = vmatpush1.msra.mxu0 0.0
    %1115 = vmatprep.subr.mxu0 0.0
    %1116 = vmatpush1.msra.mxu0 0.0
    %1117 = vmatprep.subr.mxu0 0.0
    %1118 = vmatpush1.msra.mxu0 0.0
    %1119 = vmatprep.subr.mxu0 0.0
    %1120 = vmatpush1.msra.mxu0 0.0
    %1121 = vmatprep.subr.mxu0 0.0
    %1122 = vmatpush1.msra.mxu0 0.0
    %1123 = vmatprep.subr.mxu0 0.0
    %1124 = vmatpush1.msra.mxu0 0.0
    %1125 = vmatprep.subr.mxu0 0.0
    %1126 = vmatpush1.msra.mxu0 0.0
    %1127 = vmatprep.subr.mxu0 0.0
    %1128 = vmatpush1.msra.mxu0 0.0
    %1129 = vmatprep.subr.mxu0 0.0
    %1130 = vmatpush1.msra.mxu0 0.0
    %1131 = vmatprep.subr.mxu0 0.0
    %1132 = vmatpush1.msra.mxu0 0.0
    %1133 = vmatprep.subr.mxu0 0.0
    %1134 = vmatpush1.msra.mxu0 0.0
    %1135 = vmatprep.subr.mxu0 0.0
    %1136 = vmatpush1.msra.mxu0 0.0
    %1137 = vmatprep.subr.mxu0 0.0
    %1138 = vmatpush1.msra.mxu0 0.0
    %1139 = vmatprep.subr.mxu0 0.0
    %1140 = vmatpush1.msra.mxu0 0.0
    %1141 = vmatprep.subr.mxu0 0.0
    %1142 = vmatpush1.msra.mxu0 0.0
    %1143 = vmatprep.subr.mxu0 0.0
    %1144 = vmatpush1.msra.mxu0 0.0
    %1145 = vmatprep.subr.mxu0 0.0
    %1146 = vmatpush1.msra.mxu0 0.0
    %1147 = vmatprep.subr.mxu0 0.0
    %1148 = vmatpush1.msra.mxu0 0.0
    %1149 = vmatprep.subr.mxu0 0.0
    %1150 = vmatpush1.msra.mxu0 0.0
    %1151 = vmatprep.mubr.f32.mxu0 0.0
    %1152 = vmatmul.mubr.f32.gmra.mrb[0].mxu0 %v1085
    %v1153 = vpop.f32.mrb[0].mxu0
    %v1154 = vadd.f32 0.0, %v1153
    %v1155 = vpop.f32.mrb[0].mxu0
    %1156 = vdwg.mxu0
    %v1158 = vsel %vm477, %v1077, 0
    %1160 = vmatprep.subr.mxu0 0.0
    %1161 = vmatpush1.msra.mxu0 %v909
    %1162 = vmatprep.subr.mxu0 0.0
    %1163 = vmatpush1.msra.mxu0 0.0
    %1164 = vmatprep.subr.mxu0 0.0
    %1165 = vmatpush1.msra.mxu0 0.0
    %1166 = vmatprep.subr.mxu0 0.0
    %1167 = vmatpush1.msra.mxu0 0.0
    %1168 = vmatprep.subr.mxu0 0.0
    %1169 = vmatpush1.msra.mxu0 0.0
    %1170 = vmatprep.subr.mxu0 0.0
    %1171 = vmatpush1.msra.mxu0 0.0
    %1172 = vmatprep.subr.mxu0 0.0
    %1173 = vmatpush1.msra.mxu0 0.0
    %1174 = vmatprep.subr.mxu0 0.0
    %1175 = vmatpush1.msra.mxu0 0.0
    %1176 = vmatprep.subr.mxu0 0.0
    %1177 = vmatpush1.msra.mxu0 0.0
    %1178 = vmatprep.subr.mxu0 0.0
    %1179 = vmatpush1.msra.mxu0 0.0
    %1180 = vmatprep.subr.mxu0 0.0
    %1181 = vmatpush1.msra.mxu0 0.0
    %1182 = vmatprep.subr.mxu0 0.0
    %1183 = vmatpush1.msra.mxu0 0.0
    %1184 = vmatprep.subr.mxu0 0.0
    %1185 = vmatpush1.msra.mxu0 0.0
    %1186 = vmatprep.subr.mxu0 0.0
    %1187 = vmatpush1.msra.mxu0 0.0
    %1188 = vmatprep.subr.mxu0 0.0
    %1189 = vmatpush1.msra.mxu0 0.0
    %1190 = vmatprep.subr.mxu0 0.0
    %1191 = vmatpush1.msra.mxu0 0.0
    %1192 = vmatprep.subr.mxu0 0.0
    %1193 = vmatpush1.msra.mxu0 0.0
    %1194 = vmatprep.subr.mxu0 0.0
    %1195 = vmatpush1.msra.mxu0 0.0
    %1196 = vmatprep.subr.mxu0 0.0
    %1197 = vmatpush1.msra.mxu0 0.0
    %1198 = vmatprep.subr.mxu0 0.0
    %1199 = vmatpush1.msra.mxu0 0.0
    %1200 = vmatprep.subr.mxu0 0.0
    %1201 = vmatpush1.msra.mxu0 0.0
    %1202 = vmatprep.subr.mxu0 0.0
    %1203 = vmatpush1.msra.mxu0 0.0
    %1204 = vmatprep.subr.mxu0 0.0
    %1205 = vmatpush1.msra.mxu0 0.0
    %1206 = vmatprep.subr.mxu0 0.0
    %1207 = vmatpush1.msra.mxu0 0.0
    %1208 = vmatprep.subr.mxu0 0.0
    %1209 = vmatpush1.msra.mxu0 0.0
    %1210 = vmatprep.subr.mxu0 0.0
    %1211 = vmatpush1.msra.mxu0 0.0
    %1212 = vmatprep.subr.mxu0 0.0
    %1213 = vmatpush1.msra.mxu0 0.0
    %1214 = vmatprep.subr.mxu0 0.0
    %1215 = vmatpush1.msra.mxu0 0.0
    %1216 = vmatprep.subr.mxu0 0.0
    %1217 = vmatpush1.msra.mxu0 0.0
    %1218 = vmatprep.subr.mxu0 0.0
    %1219 = vmatpush1.msra.mxu0 0.0
    %1220 = vmatprep.subr.mxu0 0.0
    %1221 = vmatpush1.msra.mxu0 0.0
    %1222 = vmatprep.subr.mxu0 0.0
    %1223 = vmatpush1.msra.mxu0 0.0
    %1224 = vmatprep.mubr.f32.mxu0 0.0
    %1225 = vmatmul.mubr.f32.gmra.mrb[0].mxu0 %v1158
    %v1226 = vpop.f32.mrb[0].mxu0
    %v1227 = vadd.f32 0.0, %v1226
    %v1228 = vpop.f32.mrb[0].mxu0
    %1229 = vdwg.mxu0
    %v1230 = vrcp.pop %v1080
    %v1231 = vrcp.pop %v1083
    %v1232 = vmul.f32 %v1154, %v1230
    %v1233 = vmul.f32 %v1227, %v1231
    %s1234 = scalar_lea.vmem %s9, 16
    %v1235 = vld [vmem:[%s1234] sm:$0xff]
    %v1236 = vld [vmem:[%s1234 + $0x8] sm:$0xff]
    %v1238 = vsel %vm322, %v1232, 0
    %v1241 = vsel %vm322, %v1233, 0
    %1243 = vmatprep.subr.mxu0 0.0
    %1244 = vmatpush1.msra.mxu0 %v1235
    %1245 = vmatprep.subr.mxu0 0.0
    %1246 = vmatpush1.msra.mxu0 %v1236
    %1247 = vmatprep.subr.mxu0 0.0
    %1248 = vmatpush1.msra.mxu0 0.0
    %1249 = vmatprep.subr.mxu0 0.0
    %1250 = vmatpush1.msra.mxu0 0.0
    %1251 = vmatprep.subr.mxu0 0.0
    %1252 = vmatpush1.msra.mxu0 0.0
    %1253 = vmatprep.subr.mxu0 0.0
    %1254 = vmatpush1.msra.mxu0 0.0
    %1255 = vmatprep.subr.mxu0 0.0
    %1256 = vmatpush1.msra.mxu0 0.0
    %1257 = vmatprep.subr.mxu0 0.0
    %1258 = vmatpush1.msra.mxu0 0.0
    %1259 = vmatprep.subr.mxu0 0.0
    %1260 = vmatpush1.msra.mxu0 0.0
    %1261 = vmatprep.subr.mxu0 0.0
    %1262 = vmatpush1.msra.mxu0 0.0
    %1263 = vmatprep.subr.mxu0 0.0
    %1264 = vmatpush1.msra.mxu0 0.0
    %1265 = vmatprep.subr.mxu0 0.0
    %1266 = vmatpush1.msra.mxu0 0.0
    %1267 = vmatprep.subr.mxu0 0.0
    %1268 = vmatpush1.msra.mxu0 0.0
    %1269 = vmatprep.subr.mxu0 0.0
    %1270 = vmatpush1.msra.mxu0 0.0
    %1271 = vmatprep.subr.mxu0 0.0
    %1272 = vmatpush1.msra.mxu0 0.0
    %1273 = vmatprep.subr.mxu0 0.0
    %1274 = vmatpush1.msra.mxu0 0.0
    %1275 = vmatprep.subr.mxu0 0.0
    %1276 = vmatpush1.msra.mxu0 0.0
    %1277 = vmatprep.subr.mxu0 0.0
    %1278 = vmatpush1.msra.mxu0 0.0
    %1279 = vmatprep.subr.mxu0 0.0
    %1280 = vmatpush1.msra.mxu0 0.0
    %1281 = vmatprep.subr.mxu0 0.0
    %1282 = vmatpush1.msra.mxu0 0.0
    %1283 = vmatprep.subr.mxu0 0.0
    %1284 = vmatpush1.msra.mxu0 0.0
    %1285 = vmatprep.subr.mxu0 0.0
    %1286 = vmatpush1.msra.mxu0 0.0
    %1287 = vmatprep.subr.mxu0 0.0
    %1288 = vmatpush1.msra.mxu0 0.0
    %1289 = vmatprep.subr.mxu0 0.0
    %1290 = vmatpush1.msra.mxu0 0.0
    %1291 = vmatprep.subr.mxu0 0.0
    %1292 = vmatpush1.msra.mxu0 0.0
    %1293 = vmatprep.subr.mxu0 0.0
    %1294 = vmatpush1.msra.mxu0 0.0
    %1295 = vmatprep.subr.mxu0 0.0
    %1296 = vmatpush1.msra.mxu0 0.0
    %1297 = vmatprep.subr.mxu0 0.0
    %1298 = vmatpush1.msra.mxu0 0.0
    %1299 = vmatprep.subr.mxu0 0.0
    %1300 = vmatpush1.msra.mxu0 0.0
    %1301 = vmatprep.subr.mxu0 0.0
    %1302 = vmatpush1.msra.mxu0 0.0
    %1303 = vmatprep.subr.mxu0 0.0
    %1304 = vmatpush1.msra.mxu0 0.0
    %1305 = vmatprep.subr.mxu0 0.0
    %1306 = vmatpush1.msra.mxu0 0.0
    %1307 = vmatprep.mubr.f32.mxu0 0.0
    %1308 = vmatmul.mubr.f32.gmra.mrb[0].mxu0 %v1238
    %v1309 = vpop.f32.mrb[0].mxu0
    %v1310 = vadd.f32 0.0, %v1309
    %v1311 = vpop.f32.mrb[0].mxu0
    %1312 = vmatprep.mubr.f32.mxu0 0.0
    %1313 = vmatmul.mubr.f32.gmra.mrb[0].mxu0 %v1241
    %v1314 = vpop.f32.mrb[0].mxu0
    %v1315 = vadd.f32 0.0, %v1314
    %v1316 = vpop.f32.mrb[0].mxu0
    %1317 = vdwg.mxu0
    %v1319 = vsel %vm322, %v644, 0
    %v1322 = vsel %vm322, %v645, 0
    %1324 = vmatprep.subr.mxu0 0.0
    %1325 = vmatpush1.msra.mxu0 %v646
    %1326 = vmatprep.subr.mxu0 0.0
    %1327 = vmatpush1.msra.mxu0 %v647
    %1328 = vmatprep.subr.mxu0 0.0
    %1329 = vmatpush1.msra.mxu0 0.0
    %1330 = vmatprep.subr.mxu0 0.0
    %1331 = vmatpush1.msra.mxu0 0.0
    %1332 = vmatprep.subr.mxu0 0.0
    %1333 = vmatpush1.msra.mxu0 0.0
    %1334 = vmatprep.subr.mxu0 0.0
    %1335 = vmatpush1.msra.mxu0 0.0
    %1336 = vmatprep.subr.mxu0 0.0
    %1337 = vmatpush1.msra.mxu0 0.0
    %1338 = vmatprep.subr.mxu0 0.0
    %1339 = vmatpush1.msra.mxu0 0.0
    %1340 = vmatprep.subr.mxu0 0.0
    %1341 = vmatpush1.msra.mxu0 0.0
    %1342 = vmatprep.subr.mxu0 0.0
    %1343 = vmatpush1.msra.mxu0 0.0
    %1344 = vmatprep.subr.mxu0 0.0
    %1345 = vmatpush1.msra.mxu0 0.0
    %1346 = vmatprep.subr.mxu0 0.0
    %1347 = vmatpush1.msra.mxu0 0.0
    %1348 = vmatprep.subr.mxu0 0.0
    %1349 = vmatpush1.msra.mxu0 0.0
    %1350 = vmatprep.subr.mxu0 0.0
    %1351 = vmatpush1.msra.mxu0 0.0
    %1352 = vmatprep.subr.mxu0 0.0
    %1353 = vmatpush1.msra.mxu0 0.0
    %1354 = vmatprep.subr.mxu0 0.0
    %1355 = vmatpush1.msra.mxu0 0.0
    %1356 = vmatprep.subr.mxu0 0.0
    %1357 = vmatpush1.msra.mxu0 0.0
    %1358 = vmatprep.subr.mxu0 0.0
    %1359 = vmatpush1.msra.mxu0 0.0
    %1360 = vmatprep.subr.mxu0 0.0
    %1361 = vmatpush1.msra.mxu0 0.0
    %1362 = vmatprep.subr.mxu0 0.0
    %1363 = vmatpush1.msra.mxu0 0.0
    %1364 = vmatprep.subr.mxu0 0.0
    %1365 = vmatpush1.msra.mxu0 0.0
    %1366 = vmatprep.subr.mxu0 0.0
    %1367 = vmatpush1.msra.mxu0 0.0
    %1368 = vmatprep.subr.mxu0 0.0
    %1369 = vmatpush1.msra.mxu0 0.0
    %1370 = vmatprep.subr.mxu0 0.0
    %1371 = vmatpush1.msra.mxu0 0.0
    %1372 = vmatprep.subr.mxu0 0.0
    %1373 = vmatpush1.msra.mxu0 0.0
    %1374 = vmatprep.subr.mxu0 0.0
    %1375 = vmatpush1.msra.mxu0 0.0
    %1376 = vmatprep.subr.mxu0 0.0
    %1377 = vmatpush1.msra.mxu0 0.0
    %1378 = vmatprep.subr.mxu0 0.0
    %1379 = vmatpush1.msra.mxu0 0.0
    %1380 = vmatprep.subr.mxu0 0.0
    %1381 = vmatpush1.msra.mxu0 0.0
    %1382 = vmatprep.subr.mxu0 0.0
    %1383 = vmatpush1.msra.mxu0 0.0
    %1384 = vmatprep.subr.mxu0 0.0
    %1385 = vmatpush1.msra.mxu0 0.0
    %1386 = vmatprep.subr.mxu0 0.0
    %1387 = vmatpush1.msra.mxu0 0.0
    %1388 = vmatprep.mubr.f32.mxu0 0.0
    %1389 = vmatmul.mubr.f32.gmra.mrb[0].mxu0 %v1319
    %v1390 = vpop.f32.mrb[0].mxu0
    %v1391 = vadd.f32 %v1310, %v1390
    %v1392 = vpop.f32.mrb[0].mxu0
    %1393 = vmatprep.mubr.f32.mxu0 0.0
    %1394 = vmatmul.mubr.f32.gmra.mrb[0].mxu0 %v1322
    %v1395 = vpop.f32.mrb[0].mxu0
    %v1396 = vadd.f32 %v1315, %v1395
    %v1397 = vpop.f32.mrb[0].mxu0
    %1398 = vdwg.mxu0
    %s1399 = scalar_lea.vmem %s3, 64
    %v1400 = vld [vmem:[%s1399] sm:$0xff]
    %v1401 = vld [vmem:[%s1399 + $0x8] sm:$0xff]
    %v1402 = vld [vmem:[%s1399 + $0x10] sm:$0xff]
    %v1403 = vld [vmem:[%s1399 + $0x18] sm:$0xff]
    %s1404 = scalar_lea.vmem %s6, 2
    %v1405 = vld [vmem:[%s1404] sm:$0x1]
    %v1407 = vlaneseq
    %v1408 = vshrl.u32 %v1407, 7
    %v1409 = vsub.s32 0, %v1408
    %v1410 = vrot.slane %v1405, %v1409
    %1412 = vmatprep.subr.mxu0 0.0
    %1413 = vmatpush1.msra.mxu0 %v1400
    %1414 = vmatprep.subr.mxu0 0.0
    %1415 = vmatpush1.msra.mxu0 %v1401
    %1416 = vmatprep.subr.mxu0 0.0
    %1417 = vmatpush1.msra.mxu0 %v1402
    %1418 = vmatprep.subr.mxu0 0.0
    %1419 = vmatpush1.msra.mxu0 %v1403
    %1420 = vmatprep.subr.mxu0 0.0
    %1421 = vmatpush1.msra.mxu0 0.0
    %1422 = vmatprep.subr.mxu0 0.0
    %1423 = vmatpush1.msra.mxu0 0.0
    %1424 = vmatprep.subr.mxu0 0.0
    %1425 = vmatpush1.msra.mxu0 0.0
    %1426 = vmatprep.subr.mxu0 0.0
    %1427 = vmatpush1.msra.mxu0 0.0
    %1428 = vmatprep.subr.mxu0 0.0
    %1429 = vmatpush1.msra.mxu0 0.0
    %1430 = vmatprep.subr.mxu0 0.0
    %1431 = vmatpush1.msra.mxu0 0.0
    %1432 = vmatprep.subr.mxu0 0.0
    %1433 = vmatpush1.msra.mxu0 0.0
    %1434 = vmatprep.subr.mxu0 0.0
    %1435 = vmatpush1.msra.mxu0 0.0
    %1436 = vmatprep.subr.mxu0 0.0
    %1437 = vmatpush1.msra.mxu0 0.0
    %1438 = vmatprep.subr.mxu0 0.0
    %1439 = vmatpush1.msra.mxu0 0.0
    %1440 = vmatprep.subr.mxu0 0.0
    %1441 = vmatpush1.msra.mxu0 0.0
    %1442 = vmatprep.subr.mxu0 0.0
    %1443 = vmatpush1.msra.mxu0 0.0
    %1444 = vmatprep.subr.mxu0 0.0
    %1445 = vmatpush1.msra.mxu0 0.0
    %1446 = vmatprep.subr.mxu0 0.0
    %1447 = vmatpush1.msra.mxu0 0.0
    %1448 = vmatprep.subr.mxu0 0.0
    %1449 = vmatpush1.msra.mxu0 0.0
    %1450 = vmatprep.subr.mxu0 0.0
    %1451 = vmatpush1.msra.mxu0 0.0
    %1452 = vmatprep.subr.mxu0 0.0
    %1453 = vmatpush1.msra.mxu0 0.0
    %1454 = vmatprep.subr.mxu0 0.0
    %1455 = vmatpush1.msra.mxu0 0.0
    %1456 = vmatprep.subr.mxu0 0.0
    %1457 = vmatpush1.msra.mxu0 0.0
    %1458 = vmatprep.subr.mxu0 0.0
    %1459 = vmatpush1.msra.mxu0 0.0
    %1460 = vmatprep.subr.mxu0 0.0
    %1461 = vmatpush1.msra.mxu0 0.0
    %1462 = vmatprep.subr.mxu0 0.0
    %1463 = vmatpush1.msra.mxu0 0.0
    %1464 = vmatprep.subr.mxu0 0.0
    %1465 = vmatpush1.msra.mxu0 0.0
    %1466 = vmatprep.subr.mxu0 0.0
    %1467 = vmatpush1.msra.mxu0 0.0
    %1468 = vmatprep.subr.mxu0 0.0
    %1469 = vmatpush1.msra.mxu0 0.0
    %1470 = vmatprep.subr.mxu0 0.0
    %1471 = vmatpush1.msra.mxu0 0.0
    %1472 = vmatprep.subr.mxu0 0.0
    %1473 = vmatpush1.msra.mxu0 0.0
    %1474 = vmatprep.subr.mxu0 0.0
    %1475 = vmatpush1.msra.mxu0 0.0
    %1476 = vmatprep.mubr.f32.mxu0 0.0
    %1477 = vmatmul.mubr.f32.gmra.mrb[0].mxu0 %v58
    %v1478 = vpop.f32.mrb[0].mxu0
    %v1479 = vadd.f32 %v1410, %v1478
    %v1480 = vpop.f32.mrb[0].mxu0
    %1481 = vmatprep.mubr.f32.mxu0 0.0
    %1482 = vmatmul.mubr.f32.gmra.mrb[0].mxu0 %v61
    %v1483 = vpop.f32.mrb[0].mxu0
    %v1484 = vadd.f32 %v1410, %v1483
    %v1485 = vpop.f32.mrb[0].mxu0
    %1486 = vdwg.mxu0
    %s1487 = scalar_lea.vmem %s4, 64
    %v1488 = vld [vmem:[%s1487] sm:$0xff]
    %v1489 = vld [vmem:[%s1487 + $0x8] sm:$0xff]
    %v1490 = vld [vmem:[%s1487 + $0x10] sm:$0xff]
    %v1491 = vld [vmem:[%s1487 + $0x18] sm:$0xff]
    %s1492 = scalar_lea.vmem %s7, 2
    %v1493 = vld [vmem:[%s1492] sm:$0x1]
    %v1495 = vlaneseq
    %v1496 = vshrl.u32 %v1495, 7
    %v1497 = vsub.s32 0, %v1496
    %v1498 = vrot.slane %v1493, %v1497
    %1500 = vmatprep.subr.mxu0 0.0
    %1501 = vmatpush1.msra.mxu0 %v1488
    %1502 = vmatprep.subr.mxu0 0.0
    %1503 = vmatpush1.msra.mxu0 %v1489
    %1504 = vmatprep.subr.mxu0 0.0
    %1505 = vmatpush1.msra.mxu0 %v1490
    %1506 = vmatprep.subr.mxu0 0.0
    %1507 = vmatpush1.msra.mxu0 %v1491
    %1508 = vmatprep.subr.mxu0 0.0
    %1509 = vmatpush1.msra.mxu0 0.0
    %1510 = vmatprep.subr.mxu0 0.0
    %1511 = vmatpush1.msra.mxu0 0.0
    %1512 = vmatprep.subr.mxu0 0.0
    %1513 = vmatpush1.msra.mxu0 0.0
    %1514 = vmatprep.subr.mxu0 0.0
    %1515 = vmatpush1.msra.mxu0 0.0
    %1516 = vmatprep.subr.mxu0 0.0
    %1517 = vmatpush1.msra.mxu0 0.0
    %1518 = vmatprep.subr.mxu0 0.0
    %1519 = vmatpush1.msra.mxu0 0.0
    %1520 = vmatprep.subr.mxu0 0.0
    %1521 = vmatpush1.msra.mxu0 0.0
    %1522 = vmatprep.subr.mxu0 0.0
    %1523 = vmatpush1.msra.mxu0 0.0
    %1524 = vmatprep.subr.mxu0 0.0
    %1525 = vmatpush1.msra.mxu0 0.0
    %1526 = vmatprep.subr.mxu0 0.0
    %1527 = vmatpush1.msra.mxu0 0.0
    %1528 = vmatprep.subr.mxu0 0.0
    %1529 = vmatpush1.msra.mxu0 0.0
    %1530 = vmatprep.subr.mxu0 0.0
    %1531 = vmatpush1.msra.mxu0 0.0
    %1532 = vmatprep.subr.mxu0 0.0
    %1533 = vmatpush1.msra.mxu0 0.0
    %1534 = vmatprep.subr.mxu0 0.0
    %1535 = vmatpush1.msra.mxu0 0.0
    %1536 = vmatprep.subr.mxu0 0.0
    %1537 = vmatpush1.msra.mxu0 0.0
    %1538 = vmatprep.subr.mxu0 0.0
    %1539 = vmatpush1.msra.mxu0 0.0
    %1540 = vmatprep.subr.mxu0 0.0
    %1541 = vmatpush1.msra.mxu0 0.0
    %1542 = vmatprep.subr.mxu0 0.0
    %1543 = vmatpush1.msra.mxu0 0.0
    %1544 = vmatprep.subr.mxu0 0.0
    %1545 = vmatpush1.msra.mxu0 0.0
    %1546 = vmatprep.subr.mxu0 0.0
    %1547 = vmatpush1.msra.mxu0 0.0
    %1548 = vmatprep.subr.mxu0 0.0
    %1549 = vmatpush1.msra.mxu0 0.0
    %1550 = vmatprep.subr.mxu0 0.0
    %1551 = vmatpush1.msra.mxu0 0.0
    %1552 = vmatprep.subr.mxu0 0.0
    %1553 = vmatpush1.msra.mxu0 0.0
    %1554 = vmatprep.subr.mxu0 0.0
    %1555 = vmatpush1.msra.mxu0 0.0
    %1556 = vmatprep.subr.mxu0 0.0
    %1557 = vmatpush1.msra.mxu0 0.0
    %1558 = vmatprep.subr.mxu0 0.0
    %1559 = vmatpush1.msra.mxu0 0.0
    %1560 = vmatprep.subr.mxu0 0.0
    %1561 = vmatpush1.msra.mxu0 0.0
    %1562 = vmatprep.subr.mxu0 0.0
    %1563 = vmatpush1.msra.mxu0 0.0
    %1564 = vmatprep.mubr.f32.mxu0 0.0
    %1565 = vmatmul.mubr.f32.gmra.mrb[0].mxu0 %v150
    %v1566 = vpop.f32.mrb[0].mxu0
    %v1567 = vadd.f32 %v1498, %v1566
    %v1568 = vpop.f32.mrb[0].mxu0
    %1569 = vmatprep.mubr.f32.mxu0 0.0
    %1570 = vmatmul.mubr.f32.gmra.mrb[0].mxu0 %v153
    %v1571 = vpop.f32.mrb[0].mxu0
    %v1572 = vadd.f32 %v1498, %v1571
    %v1573 = vpop.f32.mrb[0].mxu0
    %1574 = vdwg.mxu0
    %s1575 = scalar_lea.vmem %s5, 64
    %v1576 = vld [vmem:[%s1575] sm:$0xff]
    %v1577 = vld [vmem:[%s1575 + $0x8] sm:$0xff]
    %v1578 = vld [vmem:[%s1575 + $0x10] sm:$0xff]
    %v1579 = vld [vmem:[%s1575 + $0x18] sm:$0xff]
    %s1580 = scalar_lea.vmem %s8, 2
    %v1581 = vld [vmem:[%s1580] sm:$0x1]
    %v1583 = vlaneseq
    %v1584 = vshrl.u32 %v1583, 7
    %v1585 = vsub.s32 0, %v1584
    %v1586 = vrot.slane %v1581, %v1585
    %1588 = vmatprep.subr.mxu0 0.0
    %1589 = vmatpush1.msra.mxu0 %v1576
    %1590 = vmatprep.subr.mxu0 0.0
    %1591 = vmatpush1.msra.mxu0 %v1577
    %1592 = vmatprep.subr.mxu0 0.0
    %1593 = vmatpush1.msra.mxu0 %v1578
    %1594 = vmatprep.subr.mxu0 0.0
    %1595 = vmatpush1.msra.mxu0 %v1579
    %1596 = vmatprep.subr.mxu0 0.0
    %1597 = vmatpush1.msra.mxu0 0.0
    %1598 = vmatprep.subr.mxu0 0.0
    %1599 = vmatpush1.msra.mxu0 0.0
    %1600 = vmatprep.subr.mxu0 0.0
    %1601 = vmatpush1.msra.mxu0 0.0
    %1602 = vmatprep.subr.mxu0 0.0
    %1603 = vmatpush1.msra.mxu0 0.0
    %1604 = vmatprep.subr.mxu0 0.0
    %1605 = vmatpush1.msra.mxu0 0.0
    %1606 = vmatprep.subr.mxu0 0.0
    %1607 = vmatpush1.msra.mxu0 0.0
    %1608 = vmatprep.subr.mxu0 0.0
    %1609 = vmatpush1.msra.mxu0 0.0
    %1610 = vmatprep.subr.mxu0 0.0
    %1611 = vmatpush1.msra.mxu0 0.0
    %1612 = vmatprep.subr.mxu0 0.0
    %1613 = vmatpush1.msra.mxu0 0.0
    %1614 = vmatprep.subr.mxu0 0.0
    %1615 = vmatpush1.msra.mxu0 0.0
    %1616 = vmatprep.subr.mxu0 0.0
    %1617 = vmatpush1.msra.mxu0 0.0
    %1618 = vmatprep.subr.mxu0 0.0
    %1619 = vmatpush1.msra.mxu0 0.0
    %1620 = vmatprep.subr.mxu0 0.0
    %1621 = vmatpush1.msra.mxu0 0.0
    %1622 = vmatprep.subr.mxu0 0.0
    %1623 = vmatpush1.msra.mxu0 0.0
    %1624 = vmatprep.subr.mxu0 0.0
    %1625 = vmatpush1.msra.mxu0 0.0
    %1626 = vmatprep.subr.mxu0 0.0
    %1627 = vmatpush1.msra.mxu0 0.0
    %1628 = vmatprep.subr.mxu0 0.0
    %1629 = vmatpush1.msra.mxu0 0.0
    %1630 = vmatprep.subr.mxu0 0.0
    %1631 = vmatpush1.msra.mxu0 0.0
    %1632 = vmatprep.subr.mxu0 0.0
    %1633 = vmatpush1.msra.mxu0 0.0
    %1634 = vmatprep.subr.mxu0 0.0
    %1635 = vmatpush1.msra.mxu0 0.0
    %1636 = vmatprep.subr.mxu0 0.0
    %1637 = vmatpush1.msra.mxu0 0.0
    %1638 = vmatprep.subr.mxu0 0.0
    %1639 = vmatpush1.msra.mxu0 0.0
    %1640 = vmatprep.subr.mxu0 0.0
    %1641 = vmatpush1.msra.mxu0 0.0
    %1642 = vmatprep.subr.mxu0 0.0
    %1643 = vmatpush1.msra.mxu0 0.0
    %1644 = vmatprep.subr.mxu0 0.0
    %1645 = vmatpush1.msra.mxu0 0.0
    %1646 = vmatprep.subr.mxu0 0.0
    %1647 = vmatpush1.msra.mxu0 0.0
    %1648 = vmatprep.subr.mxu0 0.0
    %1649 = vmatpush1.msra.mxu0 0.0
    %1650 = vmatprep.subr.mxu0 0.0
    %1651 = vmatpush1.msra.mxu0 0.0
    %1652 = vmatprep.mubr.f32.mxu0 0.0
    %1653 = vmatmul.mubr.f32.gmra.mrb[0].mxu0 %v242
    %v1654 = vpop.f32.mrb[0].mxu0
    %v1655 = vadd.f32 %v1586, %v1654
    %v1656 = vpop.f32.mrb[0].mxu0
    %1657 = vmatprep.mubr.f32.mxu0 0.0
    %1658 = vmatmul.mubr.f32.gmra.mrb[0].mxu0 %v245
    %v1659 = vpop.f32.mrb[0].mxu0
    %v1660 = vadd.f32 %v1586, %v1659
    %v1661 = vpop.f32.mrb[0].mxu0
    %1662 = vdwg.mxu0
    %v1664 = vsel %vm322, %v1479, 0
    %v1667 = vsel %vm322, %v1567, 0
    %1669 = vmatprep.subr.mxu0 0.0
    %1670 = vmatpush1.xpose.msra.mxu0 %v1667
    %1671 = vmatprep.subr.mxu0 0.0
    %1672 = vmatpush1.xpose.msra.mxu0 0.0
    %1673 = vmatprep.subr.mxu0 0.0
    %1674 = vmatpush1.xpose.msra.mxu0 0.0
    %1675 = vmatprep.subr.mxu0 0.0
    %1676 = vmatpush1.xpose.msra.mxu0 0.0
    %1677 = vmatprep.subr.mxu0 0.0
    %1678 = vmatpush1.xpose.msra.mxu0 0.0
    %1679 = vmatprep.subr.mxu0 0.0
    %1680 = vmatpush1.xpose.msra.mxu0 0.0
    %1681 = vmatprep.subr.mxu0 0.0
    %1682 = vmatpush1.xpose.msra.mxu0 0.0
    %1683 = vmatprep.subr.mxu0 0.0
    %1684 = vmatpush1.xpose.msra.mxu0 0.0
    %1685 = vmatprep.subr.mxu0 0.0
    %1686 = vmatpush1.xpose.msra.mxu0 0.0
    %1687 = vmatprep.subr.mxu0 0.0
    %1688 = vmatpush1.xpose.msra.mxu0 0.0
    %1689 = vmatprep.subr.mxu0 0.0
    %1690 = vmatpush1.xpose.msra.mxu0 0.0
    %1691 = vmatprep.subr.mxu0 0.0
    %1692 = vmatpush1.xpose.msra.mxu0 0.0
    %1693 = vmatprep.subr.mxu0 0.0
    %1694 = vmatpush1.xpose.msra.mxu0 0.0
    %1695 = vmatprep.subr.mxu0 0.0
    %1696 = vmatpush1.xpose.msra.mxu0 0.0
    %1697 = vmatprep.subr.mxu0 0.0
    %1698 = vmatpush1.xpose.msra.mxu0 0.0
    %1699 = vmatprep.subr.mxu0 0.0
    %1700 = vmatpush1.xpose.msra.mxu0 0.0
    %1701 = vmatprep.subr.mxu0 0.0
    %1702 = vmatpush1.xpose.msra.mxu0 0.0
    %1703 = vmatprep.subr.mxu0 0.0
    %1704 = vmatpush1.xpose.msra.mxu0 0.0
    %1705 = vmatprep.subr.mxu0 0.0
    %1706 = vmatpush1.xpose.msra.mxu0 0.0
    %1707 = vmatprep.subr.mxu0 0.0
    %1708 = vmatpush1.xpose.msra.mxu0 0.0
    %1709 = vmatprep.subr.mxu0 0.0
    %1710 = vmatpush1.xpose.msra.mxu0 0.0
    %1711 = vmatprep.subr.mxu0 0.0
    %1712 = vmatpush1.xpose.msra.mxu0 0.0
    %1713 = vmatprep.subr.mxu0 0.0
    %1714 = vmatpush1.xpose.msra.mxu0 0.0
    %1715 = vmatprep.subr.mxu0 0.0
    %1716 = vmatpush1.xpose.msra.mxu0 0.0
    %1717 = vmatprep.subr.mxu0 0.0
    %1718 = vmatpush1.xpose.msra.mxu0 0.0
    %1719 = vmatprep.subr.mxu0 0.0
    %1720 = vmatpush1.xpose.msra.mxu0 0.0
    %1721 = vmatprep.subr.mxu0 0.0
    %1722 = vmatpush1.xpose.msra.mxu0 0.0
    %1723 = vmatprep.subr.mxu0 0.0
    %1724 = vmatpush1.xpose.msra.mxu0 0.0
    %1725 = vmatprep.subr.mxu0 0.0
    %1726 = vmatpush1.xpose.msra.mxu0 0.0
    %1727 = vmatprep.subr.mxu0 0.0
    %1728 = vmatpush1.xpose.msra.mxu0 0.0
    %1729 = vmatprep.subr.mxu0 0.0
    %1730 = vmatpush1.xpose.msra.mxu0 0.0
    %1731 = vmatprep.subr.mxu0 0.0
    %1732 = vmatpush1.xpose.msra.mxu0 0.0
    %1733 = vmatprep.mubr.f32.mxu0 0.0
    %1734 = vmatmul.mubr.f32.gmra.mrb[0].mxu0 %v1664
    %v1735 = vpop.f32.mrb[0].mxu0
    %v1736 = vadd.f32 0.0, %v1735
    %v1737 = vpop.f32.mrb[0].mxu0
    %1738 = vdwg.mxu0
    %v1740 = vsel %vm322, %v1484, 0
    %v1743 = vsel %vm322, %v1572, 0
    %1745 = vmatprep.subr.mxu0 0.0
    %1746 = vmatpush1.xpose.msra.mxu0 %v1743
    %1747 = vmatprep.subr.mxu0 0.0
    %1748 = vmatpush1.xpose.msra.mxu0 0.0
    %1749 = vmatprep.subr.mxu0 0.0
    %1750 = vmatpush1.xpose.msra.mxu0 0.0
    %1751 = vmatprep.subr.mxu0 0.0
    %1752 = vmatpush1.xpose.msra.mxu0 0.0
    %1753 = vmatprep.subr.mxu0 0.0
    %1754 = vmatpush1.xpose.msra.mxu0 0.0
    %1755 = vmatprep.subr.mxu0 0.0
    %1756 = vmatpush1.xpose.msra.mxu0 0.0
    %1757 = vmatprep.subr.mxu0 0.0
    %1758 = vmatpush1.xpose.msra.mxu0 0.0
    %1759 = vmatprep.subr.mxu0 0.0
    %1760 = vmatpush1.xpose.msra.mxu0 0.0
    %1761 = vmatprep.subr.mxu0 0.0
    %1762 = vmatpush1.xpose.msra.mxu0 0.0
    %1763 = vmatprep.subr.mxu0 0.0
    %1764 = vmatpush1.xpose.msra.mxu0 0.0
    %1765 = vmatprep.subr.mxu0 0.0
    %1766 = vmatpush1.xpose.msra.mxu0 0.0
    %1767 = vmatprep.subr.mxu0 0.0
    %1768 = vmatpush1.xpose.msra.mxu0 0.0
    %1769 = vmatprep.subr.mxu0 0.0
    %1770 = vmatpush1.xpose.msra.mxu0 0.0
    %1771 = vmatprep.subr.mxu0 0.0
    %1772 = vmatpush1.xpose.msra.mxu0 0.0
    %1773 = vmatprep.subr.mxu0 0.0
    %1774 = vmatpush1.xpose.msra.mxu0 0.0
    %1775 = vmatprep.subr.mxu0 0.0
    %1776 = vmatpush1.xpose.msra.mxu0 0.0
    %1777 = vmatprep.subr.mxu0 0.0
    %1778 = vmatpush1.xpose.msra.mxu0 0.0
    %1779 = vmatprep.subr.mxu0 0.0
    %1780 = vmatpush1.xpose.msra.mxu0 0.0
    %1781 = vmatprep.subr.mxu0 0.0
    %1782 = vmatpush1.xpose.msra.mxu0 0.0
    %1783 = vmatprep.subr.mxu0 0.0
    %1784 = vmatpush1.xpose.msra.mxu0 0.0
    %1785 = vmatprep.subr.mxu0 0.0
    %1786 = vmatpush1.xpose.msra.mxu0 0.0
    %1787 = vmatprep.subr.mxu0 0.0
    %1788 = vmatpush1.xpose.msra.mxu0 0.0
    %1789 = vmatprep.subr.mxu0 0.0
    %1790 = vmatpush1.xpose.msra.mxu0 0.0
    %1791 = vmatprep.subr.mxu0 0.0
    %1792 = vmatpush1.xpose.msra.mxu0 0.0
    %1793 = vmatprep.subr.mxu0 0.0
    %1794 = vmatpush1.xpose.msra.mxu0 0.0
    %1795 = vmatprep.subr.mxu0 0.0
    %1796 = vmatpush1.xpose.msra.mxu0 0.0
    %1797 = vmatprep.subr.mxu0 0.0
    %1798 = vmatpush1.xpose.msra.mxu0 0.0
    %1799 = vmatprep.subr.mxu0 0.0
    %1800 = vmatpush1.xpose.msra.mxu0 0.0
    %1801 = vmatprep.subr.mxu0 0.0
    %1802 = vmatpush1.xpose.msra.mxu0 0.0
    %1803 = vmatprep.subr.mxu0 0.0
    %1804 = vmatpush1.xpose.msra.mxu0 0.0
    %1805 = vmatprep.subr.mxu0 0.0
    %1806 = vmatpush1.xpose.msra.mxu0 0.0
    %1807 = vmatprep.subr.mxu0 0.0
    %1808 = vmatpush1.xpose.msra.mxu0 0.0
    %1809 = vmatprep.mubr.f32.mxu0 0.0
    %1810 = vmatmul.mubr.f32.gmra.mrb[0].mxu0 %v1740
    %v1811 = vpop.f32.mrb[0].mxu0
    %v1812 = vadd.f32 0.0, %v1811
    %v1813 = vpop.f32.mrb[0].mxu0
    %1814 = vdwg.mxu0
    %v1815 = vmul.f32 %v1736, 0.25
    %v1816 = vmul.f32 %v1812, 0.25
    %v1817 = vsel %vm477, %v1815, -inf
    %1818 = vmax.xlane.f32.xlu0 %v1817
    %v1819 = vpop.xlane.xlu0 %1818
    %v1820 = vsel %vm477, %v1816, -inf
    %1821 = vmax.xlane.f32.xlu0 %v1820
    %v1822 = vpop.xlane.xlu0 %1821
    %v1823 = vsub.f32 %v1815, %v1819
    %v1824 = vsub.f32 %v1816, %v1822
    %v1825 = vmul.f32 %v1823, 1.442695
    %v1826 = vpow.pop %v1825
    %v1827 = vmul.f32 %v1824, 1.442695
    %v1828 = vpow.pop %v1827
    %v1829 = vsel %vm477, %v1826, 0.0
    %1830 = vadd.xlane.f32.xlu0 %v1829
    %v1831 = vpop.xlane.xlu0 %1830
    %v1832 = vsel %vm477, %v1828, 0.0
    %1833 = vadd.xlane.f32.xlu0 %v1832
    %v1834 = vpop.xlane.xlu0 %1833
    %v1836 = vsel %vm477, %v1826, 0
    %1838 = vmatprep.subr.mxu0 0.0
    %1839 = vmatpush1.msra.mxu0 %v1655
    %1840 = vmatprep.subr.mxu0 0.0
    %1841 = vmatpush1.msra.mxu0 0.0
    %1842 = vmatprep.subr.mxu0 0.0
    %1843 = vmatpush1.msra.mxu0 0.0
    %1844 = vmatprep.subr.mxu0 0.0
    %1845 = vmatpush1.msra.mxu0 0.0
    %1846 = vmatprep.subr.mxu0 0.0
    %1847 = vmatpush1.msra.mxu0 0.0
    %1848 = vmatprep.subr.mxu0 0.0
    %1849 = vmatpush1.msra.mxu0 0.0
    %1850 = vmatprep.subr.mxu0 0.0
    %1851 = vmatpush1.msra.mxu0 0.0
    %1852 = vmatprep.subr.mxu0 0.0
    %1853 = vmatpush1.msra.mxu0 0.0
    %1854 = vmatprep.subr.mxu0 0.0
    %1855 = vmatpush1.msra.mxu0 0.0
    %1856 = vmatprep.subr.mxu0 0.0
    %1857 = vmatpush1.msra.mxu0 0.0
    %1858 = vmatprep.subr.mxu0 0.0
    %1859 = vmatpush1.msra.mxu0 0.0
    %1860 = vmatprep.subr.mxu0 0.0
    %1861 = vmatpush1.msra.mxu0 0.0
    %1862 = vmatprep.subr.mxu0 0.0
    %1863 = vmatpush1.msra.mxu0 0.0
    %1864 = vmatprep.subr.mxu0 0.0
    %1865 = vmatpush1.msra.mxu0 0.0
    %1866 = vmatprep.subr.mxu0 0.0
    %1867 = vmatpush1.msra.mxu0 0.0
    %1868 = vmatprep.subr.mxu0 0.0
    %1869 = vmatpush1.msra.mxu0 0.0
    %1870 = vmatprep.subr.mxu0 0.0
    %1871 = vmatpush1.msra.mxu0 0.0
    %1872 = vmatprep.subr.mxu0 0.0
    %1873 = vmatpush1.msra.mxu0 0.0
    %1874 = vmatprep.subr.mxu0 0.0
    %1875 = vmatpush1.msra.mxu0 0.0
    %1876 = vmatprep.subr.mxu0 0.0
    %1877 = vmatpush1.msra.mxu0 0.0
    %1878 = vmatprep.subr.mxu0 0.0
    %1879 = vmatpush1.msra.mxu0 0.0
    %1880 = vmatprep.subr.mxu0 0.0
    %1881 = vmatpush1.msra.mxu0 0.0
    %1882 = vmatprep.subr.mxu0 0.0
    %1883 = vmatpush1.msra.mxu0 0.0
    %1884 = vmatprep.subr.mxu0 0.0
    %1885 = vmatpush1.msra.mxu0 0.0
    %1886 = vmatprep.subr.mxu0 0.0
    %1887 = vmatpush1.msra.mxu0 0.0
    %1888 = vmatprep.subr.mxu0 0.0
    %1889 = vmatpush1.msra.mxu0 0.0
    %1890 = vmatprep.subr.mxu0 0.0
    %1891 = vmatpush1.msra.mxu0 0.0
    %1892 = vmatprep.subr.mxu0 0.0
    %1893 = vmatpush1.msra.mxu0 0.0
    %1894 = vmatprep.subr.mxu0 0.0
    %1895 = vmatpush1.msra.mxu0 0.0
    %1896 = vmatprep.subr.mxu0 0.0
    %1897 = vmatpush1.msra.mxu0 0.0
    %1898 = vmatprep.subr.mxu0 0.0
    %1899 = vmatpush1.msra.mxu0 0.0
    %1900 = vmatprep.subr.mxu0 0.0
    %1901 = vmatpush1.msra.mxu0 0.0
    %1902 = vmatprep.mubr.f32.mxu0 0.0
    %1903 = vmatmul.mubr.f32.gmra.mrb[0].mxu0 %v1836
    %v1904 = vpop.f32.mrb[0].mxu0
    %v1905 = vadd.f32 0.0, %v1904
    %v1906 = vpop.f32.mrb[0].mxu0
    %1907 = vdwg.mxu0
    %v1909 = vsel %vm477, %v1828, 0
    %1911 = vmatprep.subr.mxu0 0.0
    %1912 = vmatpush1.msra.mxu0 %v1660
    %1913 = vmatprep.subr.mxu0 0.0
    %1914 = vmatpush1.msra.mxu0 0.0
    %1915 = vmatprep.subr.mxu0 0.0
    %1916 = vmatpush1.msra.mxu0 0.0
    %1917 = vmatprep.subr.mxu0 0.0
    %1918 = vmatpush1.msra.mxu0 0.0
    %1919 = vmatprep.subr.mxu0 0.0
    %1920 = vmatpush1.msra.mxu0 0.0
    %1921 = vmatprep.subr.mxu0 0.0
    %1922 = vmatpush1.msra.mxu0 0.0
    %1923 = vmatprep.subr.mxu0 0.0
    %1924 = vmatpush1.msra.mxu0 0.0
    %1925 = vmatprep.subr.mxu0 0.0
    %1926 = vmatpush1.msra.mxu0 0.0
    %1927 = vmatprep.subr.mxu0 0.0
    %1928 = vmatpush1.msra.mxu0 0.0
    %1929 = vmatprep.subr.mxu0 0.0
    %1930 = vmatpush1.msra.mxu0 0.0
    %1931 = vmatprep.subr.mxu0 0.0
    %1932 = vmatpush1.msra.mxu0 0.0
    %1933 = vmatprep.subr.mxu0 0.0
    %1934 = vmatpush1.msra.mxu0 0.0
    %1935 = vmatprep.subr.mxu0 0.0
    %1936 = vmatpush1.msra.mxu0 0.0
    %1937 = vmatprep.subr.mxu0 0.0
    %1938 = vmatpush1.msra.mxu0 0.0
    %1939 = vmatprep.subr.mxu0 0.0
    %1940 = vmatpush1.msra.mxu0 0.0
    %1941 = vmatprep.subr.mxu0 0.0
    %1942 = vmatpush1.msra.mxu0 0.0
    %1943 = vmatprep.subr.mxu0 0.0
    %1944 = vmatpush1.msra.mxu0 0.0
    %1945 = vmatprep.subr.mxu0 0.0
    %1946 = vmatpush1.msra.mxu0 0.0
    %1947 = vmatprep.subr.mxu0 0.0
    %1948 = vmatpush1.msra.mxu0 0.0
    %1949 = vmatprep.subr.mxu0 0.0
    %1950 = vmatpush1.msra.mxu0 0.0
    %1951 = vmatprep.subr.mxu0 0.0
    %1952 = vmatpush1.msra.mxu0 0.0
    %1953 = vmatprep.subr.mxu0 0.0
    %1954 = vmatpush1.msra.mxu0 0.0
    %1955 = vmatprep.subr.mxu0 0.0
    %1956 = vmatpush1.msra.mxu0 0.0
    %1957 = vmatprep.subr.mxu0 0.0
    %1958 = vmatpush1.msra.mxu0 0.0
    %1959 = vmatprep.subr.mxu0 0.0
    %1960 = vmatpush1.msra.mxu0 0.0
    %1961 = vmatprep.subr.mxu0 0.0
    %1962 = vmatpush1.msra.mxu0 0.0
    %1963 = vmatprep.subr.mxu0 0.0
    %1964 = vmatpush1.msra.mxu0 0.0
    %1965 = vmatprep.subr.mxu0 0.0
    %1966 = vmatpush1.msra.mxu0 0.0
    %1967 = vmatprep.subr.mxu0 0.0
    %1968 = vmatpush1.msra.mxu0 0.0
    %1969 = vmatprep.subr.mxu0 0.0
    %1970 = vmatpush1.msra.mxu0 0.0
    %1971 = vmatprep.subr.mxu0 0.0
    %1972 = vmatpush1.msra.mxu0 0.0
    %1973 = vmatprep.subr.mxu0 0.0
    %1974 = vmatpush1.msra.mxu0 0.0
    %1975 = vmatprep.mubr.f32.mxu0 0.0
    %1976 = vmatmul.mubr.f32.gmra.mrb[0].mxu0 %v1909
    %v1977 = vpop.f32.mrb[0].mxu0
    %v1978 = vadd.f32 0.0, %v1977
    %v1979 = vpop.f32.mrb[0].mxu0
    %1980 = vdwg.mxu0
    %v1981 = vrcp.pop %v1831
    %v1982 = vrcp.pop %v1834
    %v1983 = vmul.f32 %v1905, %v1981
    %v1984 = vmul.f32 %v1978, %v1982
    %s1985 = scalar_lea.vmem %s9, 32
    %v1986 = vld [vmem:[%s1985] sm:$0xff]
    %v1987 = vld [vmem:[%s1985 + $0x8] sm:$0xff]
    %v1989 = vsel %vm322, %v1983, 0
    %v1992 = vsel %vm322, %v1984, 0
    %1994 = vmatprep.subr.mxu0 0.0
    %1995 = vmatpush1.msra.mxu0 %v1986
    %1996 = vmatprep.subr.mxu0 0.0
    %1997 = vmatpush1.msra.mxu0 %v1987
    %1998 = vmatprep.subr.mxu0 0.0
    %1999 = vmatpush1.msra.mxu0 0.0
    %2000 = vmatprep.subr.mxu0 0.0
    %2001 = vmatpush1.msra.mxu0 0.0
    %2002 = vmatprep.subr.mxu0 0.0
    %2003 = vmatpush1.msra.mxu0 0.0
    %2004 = vmatprep.subr.mxu0 0.0
    %2005 = vmatpush1.msra.mxu0 0.0
    %2006 = vmatprep.subr.mxu0 0.0
    %2007 = vmatpush1.msra.mxu0 0.0
    %2008 = vmatprep.subr.mxu0 0.0
    %2009 = vmatpush1.msra.mxu0 0.0
    %2010 = vmatprep.subr.mxu0 0.0
    %2011 = vmatpush1.msra.mxu0 0.0
    %2012 = vmatprep.subr.mxu0 0.0
    %2013 = vmatpush1.msra.mxu0 0.0
    %2014 = vmatprep.subr.mxu0 0.0
    %2015 = vmatpush1.msra.mxu0 0.0
    %2016 = vmatprep.subr.mxu0 0.0
    %2017 = vmatpush1.msra.mxu0 0.0
    %2018 = vmatprep.subr.mxu0 0.0
    %2019 = vmatpush1.msra.mxu0 0.0
    %2020 = vmatprep.subr.mxu0 0.0
    %2021 = vmatpush1.msra.mxu0 0.0
    %2022 = vmatprep.subr.mxu0 0.0
    %2023 = vmatpush1.msra.mxu0 0.0
    %2024 = vmatprep.subr.mxu0 0.0
    %2025 = vmatpush1.msra.mxu0 0.0
    %2026 = vmatprep.subr.mxu0 0.0
    %2027 = vmatpush1.msra.mxu0 0.0
    %2028 = vmatprep.subr.mxu0 0.0
    %2029 = vmatpush1.msra.mxu0 0.0
    %2030 = vmatprep.subr.mxu0 0.0
    %2031 = vmatpush1.msra.mxu0 0.0
    %2032 = vmatprep.subr.mxu0 0.0
    %2033 = vmatpush1.msra.mxu0 0.0
    %2034 = vmatprep.subr.mxu0 0.0
    %2035 = vmatpush1.msra.mxu0 0.0
    %2036 = vmatprep.subr.mxu0 0.0
    %2037 = vmatpush1.msra.mxu0 0.0
    %2038 = vmatprep.subr.mxu0 0.0
    %2039 = vmatpush1.msra.mxu0 0.0
    %2040 = vmatprep.subr.mxu0 0.0
    %2041 = vmatpush1.msra.mxu0 0.0
    %2042 = vmatprep.subr.mxu0 0.0
    %2043 = vmatpush1.msra.mxu0 0.0
    %2044 = vmatprep.subr.mxu0 0.0
    %2045 = vmatpush1.msra.mxu0 0.0
    %2046 = vmatprep.subr.mxu0 0.0
    %2047 = vmatpush1.msra.mxu0 0.0
    %2048 = vmatprep.subr.mxu0 0.0
    %2049 = vmatpush1.msra.mxu0 0.0
    %2050 = vmatprep.subr.mxu0 0.0
    %2051 = vmatpush1.msra.mxu0 0.0
    %2052 = vmatprep.subr.mxu0 0.0
    %2053 = vmatpush1.msra.mxu0 0.0
    %2054 = vmatprep.subr.mxu0 0.0
    %2055 = vmatpush1.msra.mxu0 0.0
    %2056 = vmatprep.subr.mxu0 0.0
    %2057 = vmatpush1.msra.mxu0 0.0
    %2058 = vmatprep.mubr.f32.mxu0 0.0
    %2059 = vmatmul.mubr.f32.gmra.mrb[0].mxu0 %v1989
    %v2060 = vpop.f32.mrb[0].mxu0
    %v2061 = vadd.f32 0.0, %v2060
    %v2062 = vpop.f32.mrb[0].mxu0
    %2063 = vmatprep.mubr.f32.mxu0 0.0
    %2064 = vmatmul.mubr.f32.gmra.mrb[0].mxu0 %v1992
    %v2065 = vpop.f32.mrb[0].mxu0
    %v2066 = vadd.f32 0.0, %v2065
    %v2067 = vpop.f32.mrb[0].mxu0
    %2068 = vdwg.mxu0
    %v2069 = vadd.f32 %v1391, %v2061
    %v2070 = vadd.f32 %v1396, %v2066
    %s2071 = scalar_lea.vmem %s3, 96
    %v2072 = vld [vmem:[%s2071] sm:$0xff]
    %v2073 = vld [vmem:[%s2071 + $0x8] sm:$0xff]
    %v2074 = vld [vmem:[%s2071 + $0x10] sm:$0xff]
    %v2075 = vld [vmem:[%s2071 + $0x18] sm:$0xff]
    %s2076 = scalar_lea.vmem %s6, 3
    %v2077 = vld [vmem:[%s2076] sm:$0x1]
    %v2079 = vlaneseq
    %v2080 = vshrl.u32 %v2079, 7
    %v2081 = vsub.s32 0, %v2080
    %v2082 = vrot.slane %v2077, %v2081
    %2084 = vmatprep.subr.mxu0 0.0
    %2085 = vmatpush1.msra.mxu0 %v2072
    %2086 = vmatprep.subr.mxu0 0.0
    %2087 = vmatpush1.msra.mxu0 %v2073
    %2088 = vmatprep.subr.mxu0 0.0
    %2089 = vmatpush1.msra.mxu0 %v2074
    %2090 = vmatprep.subr.mxu0 0.0
    %2091 = vmatpush1.msra.mxu0 %v2075
    %2092 = vmatprep.subr.mxu0 0.0
    %2093 = vmatpush1.msra.mxu0 0.0
    %2094 = vmatprep.subr.mxu0 0.0
    %2095 = vmatpush1.msra.mxu0 0.0
    %2096 = vmatprep.subr.mxu0 0.0
    %2097 = vmatpush1.msra.mxu0 0.0
    %2098 = vmatprep.subr.mxu0 0.0
    %2099 = vmatpush1.msra.mxu0 0.0
    %2100 = vmatprep.subr.mxu0 0.0
    %2101 = vmatpush1.msra.mxu0 0.0
    %2102 = vmatprep.subr.mxu0 0.0
    %2103 = vmatpush1.msra.mxu0 0.0
    %2104 = vmatprep.subr.mxu0 0.0
    %2105 = vmatpush1.msra.mxu0 0.0
    %2106 = vmatprep.subr.mxu0 0.0
    %2107 = vmatpush1.msra.mxu0 0.0
    %2108 = vmatprep.subr.mxu0 0.0
    %2109 = vmatpush1.msra.mxu0 0.0
    %2110 = vmatprep.subr.mxu0 0.0
    %2111 = vmatpush1.msra.mxu0 0.0
    %2112 = vmatprep.subr.mxu0 0.0
    %2113 = vmatpush1.msra.mxu0 0.0
    %2114 = vmatprep.subr.mxu0 0.0
    %2115 = vmatpush1.msra.mxu0 0.0
    %2116 = vmatprep.subr.mxu0 0.0
    %2117 = vmatpush1.msra.mxu0 0.0
    %2118 = vmatprep.subr.mxu0 0.0
    %2119 = vmatpush1.msra.mxu0 0.0
    %2120 = vmatprep.subr.mxu0 0.0
    %2121 = vmatpush1.msra.mxu0 0.0
    %2122 = vmatprep.subr.mxu0 0.0
    %2123 = vmatpush1.msra.mxu0 0.0
    %2124 = vmatprep.subr.mxu0 0.0
    %2125 = vmatpush1.msra.mxu0 0.0
    %2126 = vmatprep.subr.mxu0 0.0
    %2127 = vmatpush1.msra.mxu0 0.0
    %2128 = vmatprep.subr.mxu0 0.0
    %2129 = vmatpush1.msra.mxu0 0.0
    %2130 = vmatprep.subr.mxu0 0.0
    %2131 = vmatpush1.msra.mxu0 0.0
    %2132 = vmatprep.subr.mxu0 0.0
    %2133 = vmatpush1.msra.mxu0 0.0
    %2134 = vmatprep.subr.mxu0 0.0
    %2135 = vmatpush1.msra.mxu0 0.0
    %2136 = vmatprep.subr.mxu0 0.0
    %2137 = vmatpush1.msra.mxu0 0.0
    %2138 = vmatprep.subr.mxu0 0.0
    %2139 = vmatpush1.msra.mxu0 0.0
    %2140 = vmatprep.subr.mxu0 0.0
    %2141 = vmatpush1.msra.mxu0 0.0
    %2142 = vmatprep.subr.mxu0 0.0
    %2143 = vmatpush1.msra.mxu0 0.0
    %2144 = vmatprep.subr.mxu0 0.0
    %2145 = vmatpush1.msra.mxu0 0.0
    %2146 = vmatprep.subr.mxu0 0.0
    %2147 = vmatpush1.msra.mxu0 0.0
    %2148 = vmatprep.mubr.f32.mxu0 0.0
    %2149 = vmatmul.mubr.f32.gmra.mrb[0].mxu0 %v58
    %v2150 = vpop.f32.mrb[0].mxu0
    %v2151 = vadd.f32 %v2082, %v2150
    %v2152 = vpop.f32.mrb[0].mxu0
    %2153 = vmatprep.mubr.f32.mxu0 0.0
    %2154 = vmatmul.mubr.f32.gmra.mrb[0].mxu0 %v61
    %v2155 = vpop.f32.mrb[0].mxu0
    %v2156 = vadd.f32 %v2082, %v2155
    %v2157 = vpop.f32.mrb[0].mxu0
    %2158 = vdwg.mxu0
    %s2159 = scalar_lea.vmem %s4, 96
    %v2160 = vld [vmem:[%s2159] sm:$0xff]
    %v2161 = vld [vmem:[%s2159 + $0x8] sm:$0xff]
    %v2162 = vld [vmem:[%s2159 + $0x10] sm:$0xff]
    %v2163 = vld [vmem:[%s2159 + $0x18] sm:$0xff]
    %s2164 = scalar_lea.vmem %s7, 3
    %v2165 = vld [vmem:[%s2164] sm:$0x1]
    %v2167 = vlaneseq
    %v2168 = vshrl.u32 %v2167, 7
    %v2169 = vsub.s32 0, %v2168
    %v2170 = vrot.slane %v2165, %v2169
    %2172 = vmatprep.subr.mxu0 0.0
    %2173 = vmatpush1.msra.mxu0 %v2160
    %2174 = vmatprep.subr.mxu0 0.0
    %2175 = vmatpush1.msra.mxu0 %v2161
    %2176 = vmatprep.subr.mxu0 0.0
    %2177 = vmatpush1.msra.mxu0 %v2162
    %2178 = vmatprep.subr.mxu0 0.0
    %2179 = vmatpush1.msra.mxu0 %v2163
    %2180 = vmatprep.subr.mxu0 0.0
    %2181 = vmatpush1.msra.mxu0 0.0
    %2182 = vmatprep.subr.mxu0 0.0
    %2183 = vmatpush1.msra.mxu0 0.0
    %2184 = vmatprep.subr.mxu0 0.0
    %2185 = vmatpush1.msra.mxu0 0.0
    %2186 = vmatprep.subr.mxu0 0.0
    %2187 = vmatpush1.msra.mxu0 0.0
    %2188 = vmatprep.subr.mxu0 0.0
    %2189 = vmatpush1.msra.mxu0 0.0
    %2190 = vmatprep.subr.mxu0 0.0
    %2191 = vmatpush1.msra.mxu0 0.0
    %2192 = vmatprep.subr.mxu0 0.0
    %2193 = vmatpush1.msra.mxu0 0.0
    %2194 = vmatprep.subr.mxu0 0.0
    %2195 = vmatpush1.msra.mxu0 0.0
    %2196 = vmatprep.subr.mxu0 0.0
    %2197 = vmatpush1.msra.mxu0 0.0
    %2198 = vmatprep.subr.mxu0 0.0
    %2199 = vmatpush1.msra.mxu0 0.0
    %2200 = vmatprep.subr.mxu0 0.0
    %2201 = vmatpush1.msra.mxu0 0.0
    %2202 = vmatprep.subr.mxu0 0.0
    %2203 = vmatpush1.msra.mxu0 0.0
    %2204 = vmatprep.subr.mxu0 0.0
    %2205 = vmatpush1.msra.mxu0 0.0
    %2206 = vmatprep.subr.mxu0 0.0
    %2207 = vmatpush1.msra.mxu0 0.0
    %2208 = vmatprep.subr.mxu0 0.0
    %2209 = vmatpush1.msra.mxu0 0.0
    %2210 = vmatprep.subr.mxu0 0.0
    %2211 = vmatpush1.msra.mxu0 0.0
    %2212 = vmatprep.subr.mxu0 0.0
    %2213 = vmatpush1.msra.mxu0 0.0
    %2214 = vmatprep.subr.mxu0 0.0
    %2215 = vmatpush1.msra.mxu0 0.0
    %2216 = vmatprep.subr.mxu0 0.0
    %2217 = vmatpush1.msra.mxu0 0.0
    %2218 = vmatprep.subr.mxu0 0.0
    %2219 = vmatpush1.msra.mxu0 0.0
    %2220 = vmatprep.subr.mxu0 0.0
    %2221 = vmatpush1.msra.mxu0 0.0
    %2222 = vmatprep.subr.mxu0 0.0
    %2223 = vmatpush1.msra.mxu0 0.0
    %2224 = vmatprep.subr.mxu0 0.0
    %2225 = vmatpush1.msra.mxu0 0.0
    %2226 = vmatprep.subr.mxu0 0.0
    %2227 = vmatpush1.msra.mxu0 0.0
    %2228 = vmatprep.subr.mxu0 0.0
    %2229 = vmatpush1.msra.mxu0 0.0
    %2230 = vmatprep.subr.mxu0 0.0
    %2231 = vmatpush1.msra.mxu0 0.0
    %2232 = vmatprep.subr.mxu0 0.0
    %2233 = vmatpush1.msra.mxu0 0.0
    %2234 = vmatprep.subr.mxu0 0.0
    %2235 = vmatpush1.msra.mxu0 0.0
    %2236 = vmatprep.mubr.f32.mxu0 0.0
    %2237 = vmatmul.mubr.f32.gmra.mrb[0].mxu0 %v150
    %v2238 = vpop.f32.mrb[0].mxu0
    %v2239 = vadd.f32 %v2170, %v2238
    %v2240 = vpop.f32.mrb[0].mxu0
    %2241 = vmatprep.mubr.f32.mxu0 0.0
    %2242 = vmatmul.mubr.f32.gmra.mrb[0].mxu0 %v153
    %v2243 = vpop.f32.mrb[0].mxu0
    %v2244 = vadd.f32 %v2170, %v2243
    %v2245 = vpop.f32.mrb[0].mxu0
    %2246 = vdwg.mxu0
    %s2247 = scalar_lea.vmem %s5, 96
    %v2248 = vld [vmem:[%s2247] sm:$0xff]
    %v2249 = vld [vmem:[%s2247 + $0x8] sm:$0xff]
    %v2250 = vld [vmem:[%s2247 + $0x10] sm:$0xff]
    %v2251 = vld [vmem:[%s2247 + $0x18] sm:$0xff]
    %s2252 = scalar_lea.vmem %s8, 3
    %v2253 = vld [vmem:[%s2252] sm:$0x1]
    %v2255 = vlaneseq
    %v2256 = vshrl.u32 %v2255, 7
    %v2257 = vsub.s32 0, %v2256
    %v2258 = vrot.slane %v2253, %v2257
    %2260 = vmatprep.subr.mxu0 0.0
    %2261 = vmatpush1.msra.mxu0 %v2248
    %2262 = vmatprep.subr.mxu0 0.0
    %2263 = vmatpush1.msra.mxu0 %v2249
    %2264 = vmatprep.subr.mxu0 0.0
    %2265 = vmatpush1.msra.mxu0 %v2250
    %2266 = vmatprep.subr.mxu0 0.0
    %2267 = vmatpush1.msra.mxu0 %v2251
    %2268 = vmatprep.subr.mxu0 0.0
    %2269 = vmatpush1.msra.mxu0 0.0
    %2270 = vmatprep.subr.mxu0 0.0
    %2271 = vmatpush1.msra.mxu0 0.0
    %2272 = vmatprep.subr.mxu0 0.0
    %2273 = vmatpush1.msra.mxu0 0.0
    %2274 = vmatprep.subr.mxu0 0.0
    %2275 = vmatpush1.msra.mxu0 0.0
    %2276 = vmatprep.subr.mxu0 0.0
    %2277 = vmatpush1.msra.mxu0 0.0
    %2278 = vmatprep.subr.mxu0 0.0
    %2279 = vmatpush1.msra.mxu0 0.0
    %2280 = vmatprep.subr.mxu0 0.0
    %2281 = vmatpush1.msra.mxu0 0.0
    %2282 = vmatprep.subr.mxu0 0.0
    %2283 = vmatpush1.msra.mxu0 0.0
    %2284 = vmatprep.subr.mxu0 0.0
    %2285 = vmatpush1.msra.mxu0 0.0
    %2286 = vmatprep.subr.mxu0 0.0
    %2287 = vmatpush1.msra.mxu0 0.0
    %2288 = vmatprep.subr.mxu0 0.0
    %2289 = vmatpush1.msra.mxu0 0.0
    %2290 = vmatprep.subr.mxu0 0.0
    %2291 = vmatpush1.msra.mxu0 0.0
    %2292 = vmatprep.subr.mxu0 0.0
    %2293 = vmatpush1.msra.mxu0 0.0
    %2294 = vmatprep.subr.mxu0 0.0
    %2295 = vmatpush1.msra.mxu0 0.0
    %2296 = vmatprep.subr.mxu0 0.0
    %2297 = vmatpush1.msra.mxu0 0.0
    %2298 = vmatprep.subr.mxu0 0.0
    %2299 = vmatpush1.msra.mxu0 0.0
    %2300 = vmatprep.subr.mxu0 0.0
    %2301 = vmatpush1.msra.mxu0 0.0
    %2302 = vmatprep.subr.mxu0 0.0
    %2303 = vmatpush1.msra.mxu0 0.0
    %2304 = vmatprep.subr.mxu0 0.0
    %2305 = vmatpush1.msra.mxu0 0.0
    %2306 = vmatprep.subr.mxu0 0.0
    %2307 = vmatpush1.msra.mxu0 0.0
    %2308 = vmatprep.subr.mxu0 0.0
    %2309 = vmatpush1.msra.mxu0 0.0
    %2310 = vmatprep.subr.mxu0 0.0
    %2311 = vmatpush1.msra.mxu0 0.0
    %2312 = vmatprep.subr.mxu0 0.0
    %2313 = vmatpush1.msra.mxu0 0.0
    %2314 = vmatprep.subr.mxu0 0.0
    %2315 = vmatpush1.msra.mxu0 0.0
    %2316 = vmatprep.subr.mxu0 0.0
    %2317 = vmatpush1.msra.mxu0 0.0
    %2318 = vmatprep.subr.mxu0 0.0
    %2319 = vmatpush1.msra.mxu0 0.0
    %2320 = vmatprep.subr.mxu0 0.0
    %2321 = vmatpush1.msra.mxu0 0.0
    %2322 = vmatprep.subr.mxu0 0.0
    %2323 = vmatpush1.msra.mxu0 0.0
    %2324 = vmatprep.mubr.f32.mxu0 0.0
    %2325 = vmatmul.mubr.f32.gmra.mrb[0].mxu0 %v242
    %v2326 = vpop.f32.mrb[0].mxu0
    %v2327 = vadd.f32 %v2258, %v2326
    %v2328 = vpop.f32.mrb[0].mxu0
    %2329 = vmatprep.mubr.f32.mxu0 0.0
    %2330 = vmatmul.mubr.f32.gmra.mrb[0].mxu0 %v245
    %v2331 = vpop.f32.mrb[0].mxu0
    %v2332 = vadd.f32 %v2258, %v2331
    %v2333 = vpop.f32.mrb[0].mxu0
    %2334 = vdwg.mxu0
    %v2336 = vsel %vm322, %v2151, 0
    %v2339 = vsel %vm322, %v2239, 0
    %2341 = vmatprep.subr.mxu0 0.0
    %2342 = vmatpush1.xpose.msra.mxu0 %v2339
    %2343 = vmatprep.subr.mxu0 0.0
    %2344 = vmatpush1.xpose.msra.mxu0 0.0
    %2345 = vmatprep.subr.mxu0 0.0
    %2346 = vmatpush1.xpose.msra.mxu0 0.0
    %2347 = vmatprep.subr.mxu0 0.0
    %2348 = vmatpush1.xpose.msra.mxu0 0.0
    %2349 = vmatprep.subr.mxu0 0.0
    %2350 = vmatpush1.xpose.msra.mxu0 0.0
    %2351 = vmatprep.subr.mxu0 0.0
    %2352 = vmatpush1.xpose.msra.mxu0 0.0
    %2353 = vmatprep.subr.mxu0 0.0
    %2354 = vmatpush1.xpose.msra.mxu0 0.0
    %2355 = vmatprep.subr.mxu0 0.0
    %2356 = vmatpush1.xpose.msra.mxu0 0.0
    %2357 = vmatprep.subr.mxu0 0.0
    %2358 = vmatpush1.xpose.msra.mxu0 0.0
    %2359 = vmatprep.subr.mxu0 0.0
    %2360 = vmatpush1.xpose.msra.mxu0 0.0
    %2361 = vmatprep.subr.mxu0 0.0
    %2362 = vmatpush1.xpose.msra.mxu0 0.0
    %2363 = vmatprep.subr.mxu0 0.0
    %2364 = vmatpush1.xpose.msra.mxu0 0.0
    %2365 = vmatprep.subr.mxu0 0.0
    %2366 = vmatpush1.xpose.msra.mxu0 0.0
    %2367 = vmatprep.subr.mxu0 0.0
    %2368 = vmatpush1.xpose.msra.mxu0 0.0
    %2369 = vmatprep.subr.mxu0 0.0
    %2370 = vmatpush1.xpose.msra.mxu0 0.0
    %2371 = vmatprep.subr.mxu0 0.0
    %2372 = vmatpush1.xpose.msra.mxu0 0.0
    %2373 = vmatprep.subr.mxu0 0.0
    %2374 = vmatpush1.xpose.msra.mxu0 0.0
    %2375 = vmatprep.subr.mxu0 0.0
    %2376 = vmatpush1.xpose.msra.mxu0 0.0
    %2377 = vmatprep.subr.mxu0 0.0
    %2378 = vmatpush1.xpose.msra.mxu0 0.0
    %2379 = vmatprep.subr.mxu0 0.0
    %2380 = vmatpush1.xpose.msra.mxu0 0.0
    %2381 = vmatprep.subr.mxu0 0.0
    %2382 = vmatpush1.xpose.msra.mxu0 0.0
    %2383 = vmatprep.subr.mxu0 0.0
    %2384 = vmatpush1.xpose.msra.mxu0 0.0
    %2385 = vmatprep.subr.mxu0 0.0
    %2386 = vmatpush1.xpose.msra.mxu0 0.0
    %2387 = vmatprep.subr.mxu0 0.0
    %2388 = vmatpush1.xpose.msra.mxu0 0.0
    %2389 = vmatprep.subr.mxu0 0.0
    %2390 = vmatpush1.xpose.msra.mxu0 0.0
    %2391 = vmatprep.subr.mxu0 0.0
    %2392 = vmatpush1.xpose.msra.mxu0 0.0
    %2393 = vmatprep.subr.mxu0 0.0
    %2394 = vmatpush1.xpose.msra.mxu0 0.0
    %2395 = vmatprep.subr.mxu0 0.0
    %2396 = vmatpush1.xpose.msra.mxu0 0.0
    %2397 = vmatprep.subr.mxu0 0.0
    %2398 = vmatpush1.xpose.msra.mxu0 0.0
    %2399 = vmatprep.subr.mxu0 0.0
    %2400 = vmatpush1.xpose.msra.mxu0 0.0
    %2401 = vmatprep.subr.mxu0 0.0
    %2402 = vmatpush1.xpose.msra.mxu0 0.0
    %2403 = vmatprep.subr.mxu0 0.0
    %2404 = vmatpush1.xpose.msra.mxu0 0.0
    %2405 = vmatprep.mubr.f32.mxu0 0.0
    %2406 = vmatmul.mubr.f32.gmra.mrb[0].mxu0 %v2336
    %v2407 = vpop.f32.mrb[0].mxu0
    %v2408 = vadd.f32 0.0, %v2407
    %v2409 = vpop.f32.mrb[0].mxu0
    %2410 = vdwg.mxu0
    %v2412 = vsel %vm322, %v2156, 0
    %v2415 = vsel %vm322, %v2244, 0
    %2417 = vmatprep.subr.mxu0 0.0
    %2418 = vmatpush1.xpose.msra.mxu0 %v2415
    %2419 = vmatprep.subr.mxu0 0.0
    %2420 = vmatpush1.xpose.msra.mxu0 0.0
    %2421 = vmatprep.subr.mxu0 0.0
    %2422 = vmatpush1.xpose.msra.mxu0 0.0
    %2423 = vmatprep.subr.mxu0 0.0
    %2424 = vmatpush1.xpose.msra.mxu0 0.0
    %2425 = vmatprep.subr.mxu0 0.0
    %2426 = vmatpush1.xpose.msra.mxu0 0.0
    %2427 = vmatprep.subr.mxu0 0.0
    %2428 = vmatpush1.xpose.msra.mxu0 0.0
    %2429 = vmatprep.subr.mxu0 0.0
    %2430 = vmatpush1.xpose.msra.mxu0 0.0
    %2431 = vmatprep.subr.mxu0 0.0
    %2432 = vmatpush1.xpose.msra.mxu0 0.0
    %2433 = vmatprep.subr.mxu0 0.0
    %2434 = vmatpush1.xpose.msra.mxu0 0.0
    %2435 = vmatprep.subr.mxu0 0.0
    %2436 = vmatpush1.xpose.msra.mxu0 0.0
    %2437 = vmatprep.subr.mxu0 0.0
    %2438 = vmatpush1.xpose.msra.mxu0 0.0
    %2439 = vmatprep.subr.mxu0 0.0
    %2440 = vmatpush1.xpose.msra.mxu0 0.0
    %2441 = vmatprep.subr.mxu0 0.0
    %2442 = vmatpush1.xpose.msra.mxu0 0.0
    %2443 = vmatprep.subr.mxu0 0.0
    %2444 = vmatpush1.xpose.msra.mxu0 0.0
    %2445 = vmatprep.subr.mxu0 0.0
    %2446 = vmatpush1.xpose.msra.mxu0 0.0
    %2447 = vmatprep.subr.mxu0 0.0
    %2448 = vmatpush1.xpose.msra.mxu0 0.0
    %2449 = vmatprep.subr.mxu0 0.0
    %2450 = vmatpush1.xpose.msra.mxu0 0.0
    %2451 = vmatprep.subr.mxu0 0.0
    %2452 = vmatpush1.xpose.msra.mxu0 0.0
    %2453 = vmatprep.subr.mxu0 0.0
    %2454 = vmatpush1.xpose.msra.mxu0 0.0
    %2455 = vmatprep.subr.mxu0 0.0
    %2456 = vmatpush1.xpose.msra.mxu0 0.0
    %2457 = vmatprep.subr.mxu0 0.0
    %2458 = vmatpush1.xpose.msra.mxu0 0.0
    %2459 = vmatprep.subr.mxu0 0.0
    %2460 = vmatpush1.xpose.msra.mxu0 0.0
    %2461 = vmatprep.subr.mxu0 0.0
    %2462 = vmatpush1.xpose.msra.mxu0 0.0
    %2463 = vmatprep.subr.mxu0 0.0
    %2464 = vmatpush1.xpose.msra.mxu0 0.0
    %2465 = vmatprep.subr.mxu0 0.0
    %2466 = vmatpush1.xpose.msra.mxu0 0.0
    %2467 = vmatprep.subr.mxu0 0.0
    %2468 = vmatpush1.xpose.msra.mxu0 0.0
    %2469 = vmatprep.subr.mxu0 0.0
    %2470 = vmatpush1.xpose.msra.mxu0 0.0
    %2471 = vmatprep.subr.mxu0 0.0
    %2472 = vmatpush1.xpose.msra.mxu0 0.0
    %2473 = vmatprep.subr.mxu0 0.0
    %2474 = vmatpush1.xpose.msra.mxu0 0.0
    %2475 = vmatprep.subr.mxu0 0.0
    %2476 = vmatpush1.xpose.msra.mxu0 0.0
    %2477 = vmatprep.subr.mxu0 0.0
    %2478 = vmatpush1.xpose.msra.mxu0 0.0
    %2479 = vmatprep.subr.mxu0 0.0
    %2480 = vmatpush1.xpose.msra.mxu0 0.0
    %2481 = vmatprep.mubr.f32.mxu0 0.0
    %2482 = vmatmul.mubr.f32.gmra.mrb[0].mxu0 %v2412
    %v2483 = vpop.f32.mrb[0].mxu0
    %v2484 = vadd.f32 0.0, %v2483
    %v2485 = vpop.f32.mrb[0].mxu0
    %2486 = vdwg.mxu0
    %v2487 = vmul.f32 %v2408, 0.25
    %v2488 = vmul.f32 %v2484, 0.25
    %v2489 = vsel %vm477, %v2487, -inf
    %2490 = vmax.xlane.f32.xlu0 %v2489
    %v2491 = vpop.xlane.xlu0 %2490
    %v2492 = vsel %vm477, %v2488, -inf
    %2493 = vmax.xlane.f32.xlu0 %v2492
    %v2494 = vpop.xlane.xlu0 %2493
    %v2495 = vsub.f32 %v2487, %v2491
    %v2496 = vsub.f32 %v2488, %v2494
    %v2497 = vmul.f32 %v2495, 1.442695
    %v2498 = vpow.pop %v2497
    %v2499 = vmul.f32 %v2496, 1.442695
    %v2500 = vpow.pop %v2499
    %v2501 = vsel %vm477, %v2498, 0.0
    %2502 = vadd.xlane.f32.xlu0 %v2501
    %v2503 = vpop.xlane.xlu0 %2502
    %v2504 = vsel %vm477, %v2500, 0.0
    %2505 = vadd.xlane.f32.xlu0 %v2504
    %v2506 = vpop.xlane.xlu0 %2505
    %v2508 = vsel %vm477, %v2498, 0
    %2510 = vmatprep.subr.mxu0 0.0
    %2511 = vmatpush1.msra.mxu0 %v2327
    %2512 = vmatprep.subr.mxu0 0.0
    %2513 = vmatpush1.msra.mxu0 0.0
    %2514 = vmatprep.subr.mxu0 0.0
    %2515 = vmatpush1.msra.mxu0 0.0
    %2516 = vmatprep.subr.mxu0 0.0
    %2517 = vmatpush1.msra.mxu0 0.0
    %2518 = vmatprep.subr.mxu0 0.0
    %2519 = vmatpush1.msra.mxu0 0.0
    %2520 = vmatprep.subr.mxu0 0.0
    %2521 = vmatpush1.msra.mxu0 0.0
    %2522 = vmatprep.subr.mxu0 0.0
    %2523 = vmatpush1.msra.mxu0 0.0
    %2524 = vmatprep.subr.mxu0 0.0
    %2525 = vmatpush1.msra.mxu0 0.0
    %2526 = vmatprep.subr.mxu0 0.0
    %2527 = vmatpush1.msra.mxu0 0.0
    %2528 = vmatprep.subr.mxu0 0.0
    %2529 = vmatpush1.msra.mxu0 0.0
    %2530 = vmatprep.subr.mxu0 0.0
    %2531 = vmatpush1.msra.mxu0 0.0
    %2532 = vmatprep.subr.mxu0 0.0
    %2533 = vmatpush1.msra.mxu0 0.0
    %2534 = vmatprep.subr.mxu0 0.0
    %2535 = vmatpush1.msra.mxu0 0.0
    %2536 = vmatprep.subr.mxu0 0.0
    %2537 = vmatpush1.msra.mxu0 0.0
    %2538 = vmatprep.subr.mxu0 0.0
    %2539 = vmatpush1.msra.mxu0 0.0
    %2540 = vmatprep.subr.mxu0 0.0
    %2541 = vmatpush1.msra.mxu0 0.0
    %2542 = vmatprep.subr.mxu0 0.0
    %2543 = vmatpush1.msra.mxu0 0.0
    %2544 = vmatprep.subr.mxu0 0.0
    %2545 = vmatpush1.msra.mxu0 0.0
    %2546 = vmatprep.subr.mxu0 0.0
    %2547 = vmatpush1.msra.mxu0 0.0
    %2548 = vmatprep.subr.mxu0 0.0
    %2549 = vmatpush1.msra.mxu0 0.0
    %2550 = vmatprep.subr.mxu0 0.0
    %2551 = vmatpush1.msra.mxu0 0.0
    %2552 = vmatprep.subr.mxu0 0.0
    %2553 = vmatpush1.msra.mxu0 0.0
    %2554 = vmatprep.subr.mxu0 0.0
    %2555 = vmatpush1.msra.mxu0 0.0
    %2556 = vmatprep.subr.mxu0 0.0
    %2557 = vmatpush1.msra.mxu0 0.0
    %2558 = vmatprep.subr.mxu0 0.0
    %2559 = vmatpush1.msra.mxu0 0.0
    %2560 = vmatprep.subr.mxu0 0.0
    %2561 = vmatpush1.msra.mxu0 0.0
    %2562 = vmatprep.subr.mxu0 0.0
    %2563 = vmatpush1.msra.mxu0 0.0
    %2564 = vmatprep.subr.mxu0 0.0
    %2565 = vmatpush1.msra.mxu0 0.0
    %2566 = vmatprep.subr.mxu0 0.0
    %2567 = vmatpush1.msra.mxu0 0.0
    %2568 = vmatprep.subr.mxu0 0.0
    %2569 = vmatpush1.msra.mxu0 0.0
    %2570 = vmatprep.subr.mxu0 0.0
    %2571 = vmatpush1.msra.mxu0 0.0
    %2572 = vmatprep.subr.mxu0 0.0
    %2573 = vmatpush1.msra.mxu0 0.0
    %2574 = vmatprep.mubr.f32.mxu0 0.0
    %2575 = vmatmul.mubr.f32.gmra.mrb[0].mxu0 %v2508
    %v2576 = vpop.f32.mrb[0].mxu0
    %v2577 = vadd.f32 0.0, %v2576
    %v2578 = vpop.f32.mrb[0].mxu0
    %2579 = vdwg.mxu0
    %v2581 = vsel %vm477, %v2500, 0
    %2583 = vmatprep.subr.mxu0 0.0
    %2584 = vmatpush1.msra.mxu0 %v2332
    %2585 = vmatprep.subr.mxu0 0.0
    %2586 = vmatpush1.msra.mxu0 0.0
    %2587 = vmatprep.subr.mxu0 0.0
    %2588 = vmatpush1.msra.mxu0 0.0
    %2589 = vmatprep.subr.mxu0 0.0
    %2590 = vmatpush1.msra.mxu0 0.0
    %2591 = vmatprep.subr.mxu0 0.0
    %2592 = vmatpush1.msra.mxu0 0.0
    %2593 = vmatprep.subr.mxu0 0.0
    %2594 = vmatpush1.msra.mxu0 0.0
    %2595 = vmatprep.subr.mxu0 0.0
    %2596 = vmatpush1.msra.mxu0 0.0
    %2597 = vmatprep.subr.mxu0 0.0
    %2598 = vmatpush1.msra.mxu0 0.0
    %2599 = vmatprep.subr.mxu0 0.0
    %2600 = vmatpush1.msra.mxu0 0.0
    %2601 = vmatprep.subr.mxu0 0.0
    %2602 = vmatpush1.msra.mxu0 0.0
    %2603 = vmatprep.subr.mxu0 0.0
    %2604 = vmatpush1.msra.mxu0 0.0
    %2605 = vmatprep.subr.mxu0 0.0
    %2606 = vmatpush1.msra.mxu0 0.0
    %2607 = vmatprep.subr.mxu0 0.0
    %2608 = vmatpush1.msra.mxu0 0.0
    %2609 = vmatprep.subr.mxu0 0.0
    %2610 = vmatpush1.msra.mxu0 0.0
    %2611 = vmatprep.subr.mxu0 0.0
    %2612 = vmatpush1.msra.mxu0 0.0
    %2613 = vmatprep.subr.mxu0 0.0
    %2614 = vmatpush1.msra.mxu0 0.0
    %2615 = vmatprep.subr.mxu0 0.0
    %2616 = vmatpush1.msra.mxu0 0.0
    %2617 = vmatprep.subr.mxu0 0.0
    %2618 = vmatpush1.msra.mxu0 0.0
    %2619 = vmatprep.subr.mxu0 0.0
    %2620 = vmatpush1.msra.mxu0 0.0
    %2621 = vmatprep.subr.mxu0 0.0
    %2622 = vmatpush1.msra.mxu0 0.0
    %2623 = vmatprep.subr.mxu0 0.0
    %2624 = vmatpush1.msra.mxu0 0.0
    %2625 = vmatprep.subr.mxu0 0.0
    %2626 = vmatpush1.msra.mxu0 0.0
    %2627 = vmatprep.subr.mxu0 0.0
    %2628 = vmatpush1.msra.mxu0 0.0
    %2629 = vmatprep.subr.mxu0 0.0
    %2630 = vmatpush1.msra.mxu0 0.0
    %2631 = vmatprep.subr.mxu0 0.0
    %2632 = vmatpush1.msra.mxu0 0.0
    %2633 = vmatprep.subr.mxu0 0.0
    %2634 = vmatpush1.msra.mxu0 0.0
    %2635 = vmatprep.subr.mxu0 0.0
    %2636 = vmatpush1.msra.mxu0 0.0
    %2637 = vmatprep.subr.mxu0 0.0
    %2638 = vmatpush1.msra.mxu0 0.0
    %2639 = vmatprep.subr.mxu0 0.0
    %2640 = vmatpush1.msra.mxu0 0.0
    %2641 = vmatprep.subr.mxu0 0.0
    %2642 = vmatpush1.msra.mxu0 0.0
    %2643 = vmatprep.subr.mxu0 0.0
    %2644 = vmatpush1.msra.mxu0 0.0
    %2645 = vmatprep.subr.mxu0 0.0
    %2646 = vmatpush1.msra.mxu0 0.0
    %2647 = vmatprep.mubr.f32.mxu0 0.0
    %2648 = vmatmul.mubr.f32.gmra.mrb[0].mxu0 %v2581
    %v2649 = vpop.f32.mrb[0].mxu0
    %v2650 = vadd.f32 0.0, %v2649
    %v2651 = vpop.f32.mrb[0].mxu0
    %2652 = vdwg.mxu0
    %v2653 = vrcp.pop %v2503
    %v2654 = vrcp.pop %v2506
    %v2655 = vmul.f32 %v2577, %v2653
    %v2656 = vmul.f32 %v2650, %v2654
    %s2657 = scalar_lea.vmem %s9, 48
    %v2658 = vld [vmem:[%s2657] sm:$0xff]
    %v2659 = vld [vmem:[%s2657 + $0x8] sm:$0xff]
    %v2661 = vsel %vm322, %v2655, 0
    %v2664 = vsel %vm322, %v2656, 0
    %2666 = vmatprep.subr.mxu0 0.0
    %2667 = vmatpush1.msra.mxu0 %v2658
    %2668 = vmatprep.subr.mxu0 0.0
    %2669 = vmatpush1.msra.mxu0 %v2659
    %2670 = vmatprep.subr.mxu0 0.0
    %2671 = vmatpush1.msra.mxu0 0.0
    %2672 = vmatprep.subr.mxu0 0.0
    %2673 = vmatpush1.msra.mxu0 0.0
    %2674 = vmatprep.subr.mxu0 0.0
    %2675 = vmatpush1.msra.mxu0 0.0
    %2676 = vmatprep.subr.mxu0 0.0
    %2677 = vmatpush1.msra.mxu0 0.0
    %2678 = vmatprep.subr.mxu0 0.0
    %2679 = vmatpush1.msra.mxu0 0.0
    %2680 = vmatprep.subr.mxu0 0.0
    %2681 = vmatpush1.msra.mxu0 0.0
    %2682 = vmatprep.subr.mxu0 0.0
    %2683 = vmatpush1.msra.mxu0 0.0
    %2684 = vmatprep.subr.mxu0 0.0
    %2685 = vmatpush1.msra.mxu0 0.0
    %2686 = vmatprep.subr.mxu0 0.0
    %2687 = vmatpush1.msra.mxu0 0.0
    %2688 = vmatprep.subr.mxu0 0.0
    %2689 = vmatpush1.msra.mxu0 0.0
    %2690 = vmatprep.subr.mxu0 0.0
    %2691 = vmatpush1.msra.mxu0 0.0
    %2692 = vmatprep.subr.mxu0 0.0
    %2693 = vmatpush1.msra.mxu0 0.0
    %2694 = vmatprep.subr.mxu0 0.0
    %2695 = vmatpush1.msra.mxu0 0.0
    %2696 = vmatprep.subr.mxu0 0.0
    %2697 = vmatpush1.msra.mxu0 0.0
    %2698 = vmatprep.subr.mxu0 0.0
    %2699 = vmatpush1.msra.mxu0 0.0
    %2700 = vmatprep.subr.mxu0 0.0
    %2701 = vmatpush1.msra.mxu0 0.0
    %2702 = vmatprep.subr.mxu0 0.0
    %2703 = vmatpush1.msra.mxu0 0.0
    %2704 = vmatprep.subr.mxu0 0.0
    %2705 = vmatpush1.msra.mxu0 0.0
    %2706 = vmatprep.subr.mxu0 0.0
    %2707 = vmatpush1.msra.mxu0 0.0
    %2708 = vmatprep.subr.mxu0 0.0
    %2709 = vmatpush1.msra.mxu0 0.0
    %2710 = vmatprep.subr.mxu0 0.0
    %2711 = vmatpush1.msra.mxu0 0.0
    %2712 = vmatprep.subr.mxu0 0.0
    %2713 = vmatpush1.msra.mxu0 0.0
    %2714 = vmatprep.subr.mxu0 0.0
    %2715 = vmatpush1.msra.mxu0 0.0
    %2716 = vmatprep.subr.mxu0 0.0
    %2717 = vmatpush1.msra.mxu0 0.0
    %2718 = vmatprep.subr.mxu0 0.0
    %2719 = vmatpush1.msra.mxu0 0.0
    %2720 = vmatprep.subr.mxu0 0.0
    %2721 = vmatpush1.msra.mxu0 0.0
    %2722 = vmatprep.subr.mxu0 0.0
    %2723 = vmatpush1.msra.mxu0 0.0
    %2724 = vmatprep.subr.mxu0 0.0
    %2725 = vmatpush1.msra.mxu0 0.0
    %2726 = vmatprep.subr.mxu0 0.0
    %2727 = vmatpush1.msra.mxu0 0.0
    %2728 = vmatprep.subr.mxu0 0.0
    %2729 = vmatpush1.msra.mxu0 0.0
    %2730 = vmatprep.mubr.f32.mxu0 0.0
    %2731 = vmatmul.mubr.f32.gmra.mrb[0].mxu0 %v2661
    %v2732 = vpop.f32.mrb[0].mxu0
    %v2733 = vadd.f32 0.0, %v2732
    %v2734 = vpop.f32.mrb[0].mxu0
    %2735 = vmatprep.mubr.f32.mxu0 0.0
    %2736 = vmatmul.mubr.f32.gmra.mrb[0].mxu0 %v2664
    %v2737 = vpop.f32.mrb[0].mxu0
    %v2738 = vadd.f32 0.0, %v2737
    %v2739 = vpop.f32.mrb[0].mxu0
    %2740 = vdwg.mxu0
    %v2741 = vadd.f32 %v2069, %v2733
    %v2742 = vadd.f32 %v2070, %v2738
    %v2743 = vld [vmem:[%s10] sm:$0x1]
    %v2745 = vlaneseq
    %v2746 = vshrl.u32 %v2745, 7
    %v2747 = vsub.s32 0, %v2746
    %v2748 = vrot.slane %v2743, %v2747
    %v2750 = vadd.f32 %v2741, %v2748
    %v2751 = vadd.f32 %v2742, %v2748
    %2752 = vst.msk [vmem:[#allocation2] sm:$0xff] %vm56, %v2750
    %2753 = vst.msk [vmem:[#allocation2 + $0x8] sm:$0xff] %vm56, %v2751
    // Predicated region
    $region46: #{tpu_custom_call.1} parent=1 // pred_check
      _
    $region47: #{tpu_custom_call.1} parent=1 // pred_check_branch
      %2755 = sbr.rel (0) target = $region49
    $region48: #{tpu_custom_call.1} parent=1 // pred_region
      %s2757 = ssub.s32 256, 256
      %2758 = vsyncadd [#allocation3], %s2757
      %s2759 = sshll.u32 [#allocation2], 4
      %s2760 = int_to_ptr.vmem [resolvable:$true] %s2759
      %2765 = dma.vmem_to_hbm [thread:$0]  %s2760, 256, %s11, [#allocation3], 128, 128, 8
    $region49: #{tpu_custom_call.1} parent=1 // pred_fallthru
      _
    // Predicated region
    $region50: #{tpu_custom_call.1} parent=1 // pred_check
      _
    $region51: #{tpu_custom_call.1} parent=1 // pred_check_branch
      %2767 = sbr.rel (0) target = $region53
    $region52: #{tpu_custom_call.1} parent=1 // pred_region
      %2768 = dma.done [#allocation3], 256
    $region53: #{tpu_custom_call.1} parent=1 // pred_fallthru
      _
    %2769 = vsyncpa [#allocation3], 1

</llo_original>
